<compile_context>
chip_gen: v6e
topology: v6e:2x2x1
jax: 0.10.0
libtpu: 0.0.40
codegen_flags: <defaults>
</compile_context>

<pallas_src>
import functools

import jax
import jax.numpy as jnp
from jax.experimental import pallas as pl
from jax.experimental.pallas import tpu as pltpu


# ----------------------------------------------------------------------------
# Fused kernel: stem conv + BasicBlock (2 convs + residual) + global avg pool
# ----------------------------------------------------------------------------
def _net_fused_kernel(x_ref, ws_ref, bs_ref, mask_ref, pool_ref, out_ref,
                      s_ref, *, wp, align, l, cp, c, inv_hw):
    """Whole `Net` forward for a tile of B images (one grid step).

    Layout: feature maps are channel-major (C, lanes); each image's padded
    (H+2)x(W+2) grid is flattened row-major into a SLOT-lane segment (MP
    interior + halo), B segments sit side by side starting at lane `align`,
    so every 3x3 conv tap is a statically lane-shifted slice of one slab.

    x_ref    : (CP, BUF)          bf16  B haloed/flattened input images
    ws_ref   : (3, 9, C, CIN_MAX) bf16  folded conv weights, per layer/tap
    bs_ref   : (3, C, 1)          f32   folded BN biases
    mask_ref : (1, L)             f32   1.0 on real (interior) pixels
    pool_ref : (L, B)             bf16  mask-folded per-image pooling matrix
    out_ref  : (C, B)             f32   pooled features (batch on lanes)
    s_ref    : (C, BUF)           bf16  scratch feature map (reused twice)
    """
    buf = s_ref.shape[1]

    # Lanes outside [align, align+l) are never written by the masked stores
    # below; zero them every step (a couple of tiny (C, <=256) stores) so
    # border-ring taps always read finite zeros.  Done unconditionally, not
    # under program_id==0, so it stays correct when the "parallel" grid axis
    # is sharded across TensorCores (each core has its own scratch).
    s_ref[:, 0:align] = jnp.zeros((c, align), dtype=s_ref.dtype)
    s_ref[:, align + l:buf] = jnp.zeros((c, buf - align - l),
                                        dtype=s_ref.dtype)

    mask = mask_ref[...]                                       # (1, L) f32

    def conv3x3(src, layer, cin):
        # src: (cin, BUF) bf16 zero-haloed slab.  9 accumulating MXU matmuls
        # on lane-shifted slices -- no (9*Cin, L) concat / sublane relayout.
        acc = None
        for t in range(9):
            dh, dw = divmod(t, 3)
            start = align + (dh - 1) * wp + (dw - 1)           # static shift
            patch = src[0:cin, start:start + l]                # (cin, L) bf16
            w_t = ws_ref[layer, t][:, 0:cin]                   # (C, cin) bf16
            d = jnp.dot(w_t, patch, preferred_element_type=jnp.float32)
            acc = d if acc is None else acc + d
        return acc + bs_ref[layer]                             # (C, L) f32

    # ---- stem: conv3x3 + folded BN + ReLU (masked -> halo/border lanes 0) --
    h = jnp.maximum(conv3x3(x_ref[...], 0, cp), 0.0) * mask    # (C, L) f32
    s_ref[:, align:align + l] = h.astype(s_ref.dtype)

    # ---- BasicBlock conv1 + BN + ReLU (scratch reused in place) ------------
    y = jnp.maximum(conv3x3(s_ref[...], 1, c), 0.0) * mask
    s_ref[:, align:align + l] = y.astype(s_ref.dtype)

    # ---- BasicBlock conv2 + BN + residual(h) + ReLU -------------------------
    z = jnp.maximum(conv3x3(s_ref[...], 2, c) + h, 0.0)        # (C, L) f32

    # ---- AdaptiveAvgPool2d(1): masked per-image sum on the idle MXU --------
    # pool[i*SLOT + p, i] = 1 on interior grid positions, 0 elsewhere.
    gap = jnp.dot(z.astype(pool_ref.dtype), pool_ref[...],
                  preferred_element_type=jnp.float32)          # (C, B) f32
    out_ref[...] = gap * inv_hw


# ----------------------------------------------------------------------------
# Wrapper: layout plumbing (fold BN, stack constants, pad/flatten/batch)
# ----------------------------------------------------------------------------
def _fold_weight(w_hwio, scale, cin_max):
    """(3,3,Cin,Cout) HWIO conv weight + folded-BN scale
    -> (9, Cout, cin_max) bf16 (taps on the leading axis, Cin zero-padded)."""
    kh, kw, cin, cout = w_hwio.shape
    w = w_hwio * scale[None, None, None, :]
    w = jnp.transpose(w, (0, 1, 3, 2)).reshape(kh * kw, cout, cin)
    w = jnp.pad(w, ((0, 0), (0, 0), (0, cin_max - cin)))
    return w.astype(jnp.bfloat16)


def net_forward(params, x_nchw):
    N, cin, H, W = x_nchw.shape
    C = params["stem_w"].shape[-1]
    CP = ((cin + 7) // 8) * 8               # pad Cin up to the sublane count
    CIN_MAX = max(CP, C)
    HP, WP = H + 2, W + 2
    MP = HP * WP                            # padded-flattened spatial size
    SLOT = MP + WP + 1                      # per-image footprint (MP + halo)
    ALIGN = ((WP + 1 + 127) // 128) * 128   # zeroed left halo, lane aligned

    # Images per grid step: large B amortizes per-step overhead, but keep the
    # grid at >= 2 "parallel" steps so both v7x TensorCores get work.
    B = int(min(64, max(1, (N + 1) // 2)))
    G = (N + B - 1) // B
    NPAD = G * B
    L = B * SLOT                            # lane extent of the conv domain
    BUF = ((ALIGN + L + WP + 1 + 127) // 128) * 128

    # Input: NCHW -> channel-major; per image: spatial zero pad, flatten,
    # append per-image halo; then B images concatenated on the lane axis.
    xp = jnp.pad(x_nchw.astype(jnp.float32),
                 ((0, NPAD - N), (0, CP - cin), (1, 1), (1, 1)))
    xp = xp.reshape(NPAD, CP, MP)
    xp = jnp.pad(xp, ((0, 0), (0, 0), (0, SLOT - MP)))        # (NPAD, CP, SLOT)
    xp = xp.reshape(G, B, CP, SLOT).transpose(0, 2, 1, 3).reshape(G, CP, L)
    xb = jnp.pad(xp, ((0, 0), (0, 0), (ALIGN, BUF - ALIGN - L))
                 ).astype(jnp.bfloat16)                        # (G, CP, BUF)

    # Coalesced constants: stacked folded weights/biases, interior mask, and
    # the mask-folded per-image average-pool matrix (scale applied in f32).
    ws = jnp.stack([_fold_weight(params["stem_w"], params["stem_s"], CIN_MAX),
                    _fold_weight(params["b1c1_w"], params["b1c1_s"], CIN_MAX),
                    _fold_weight(params["b1c2_w"], params["b1c2_s"], CIN_MAX)])
    bs = jnp.stack([params["stem_b"], params["b1c1_b"], params["b1c2_b"]]
                   ).reshape(3, C, 1).astype(jnp.float32)

    pos = jnp.arange(SLOT)
    ii, jj = pos // WP, pos % WP
    mask_slot = ((pos < MP) & (ii >= 1) & (ii <= H) & (jj >= 1) & (jj <= W)
                 ).astype(jnp.float32)                         # (SLOT,)
    mask = jnp.tile(mask_slot, B).reshape(1, L)
    pool = (jnp.eye(B, dtype=jnp.float32)[:, None, :] *
            mask_slot[None, :, None]).reshape(L, B).astype(jnp.bfloat16)

    kernel = functools.partial(_net_fused_kernel, wp=WP, align=ALIGN, l=L,
                               cp=CP, c=C, inv_hw=1.0 / float(H * W))

    out = pl.pallas_call(
        kernel,
        out_shape=jax.ShapeDtypeStruct((G, C, B), jnp.float32),
        grid_spec=pltpu.PrefetchScalarGridSpec(
            num_scalar_prefetch=0,
            grid=(G,),
            in_specs=[
                pl.BlockSpec((None, CP, BUF), lambda g: (g, 0, 0)),      # x
                pl.BlockSpec((3, 9, C, CIN_MAX), lambda g: (0, 0, 0, 0)),  # ws
                pl.BlockSpec((3, C, 1), lambda g: (0, 0, 0)),            # bs
                pl.BlockSpec((1, L), lambda g: (0, 0)),                  # mask
                pl.BlockSpec((L, B), lambda g: (0, 0)),                  # pool
            ],
            out_specs=pl.BlockSpec((None, C, B), lambda g: (g, 0, 0)),
            scratch_shapes=[pltpu.VMEM((C, BUF), jnp.bfloat16)],
        ),
        compiler_params=pltpu.CompilerParams(
            dimension_semantics=("parallel",)),
    )(xb, ws, bs, mask, pool)

    # (G, C, B) -> (N, C): the batch was on the lane axis inside the kernel.
    return jnp.transpose(out, (0, 2, 1)).reshape(G * B, C)[:N]


# ----------------------------------------------------------------------------
# Synthetic backbone params + pure-JAX reference (for correctness check)
# ----------------------------------------------------------------------------
def init_params(key, cin=3, c=8):
    ks = jax.random.split(key, 6)

    def conv_w(k, ci, co):
        return 0.1 * jax.random.normal(k, (3, 3, ci, co), jnp.float32)

    def bn(k, co):  # folded eval-mode BN -> per-channel scale/bias
        k1, k2 = jax.random.split(k)
        scale = 1.0 + 0.05 * jax.random.normal(k1, (co,), jnp.float32)
        bias = 0.05 * jax.random.normal(k2, (co,), jnp.float32)
        return scale, bias

    p = {}
    p["stem_w"] = conv_w(ks[0], cin, c)
    p["stem_s"], p["stem_b"] = bn(ks[1], c)
    p["b1c1_w"] = conv_w(ks[2], c, c)
    p["b1c1_s"], p["b1c1_b"] = bn(ks[3], c)
    p["b1c2_w"] = conv_w(ks[4], c, c)
    p["b1c2_s"], p["b1c2_b"] = bn(ks[5], c)
    return p


def net_reference(params, x_nchw):
    x = jnp.transpose(x_nchw, (0, 2, 3, 1)).astype(jnp.float32)   # NHWC

    def conv_bn(x, w, s, b, res=None):
        y = jax.lax.conv_general_dilated(
            x, w, window_strides=(1, 1), padding="SAME",
            dimension_numbers=("NHWC", "HWIO", "NHWC"))
        y = y * s + b
        if res is not None:
            y = y + res
        return jnp.maximum(y, 0.0)

    h = conv_bn(x, params["stem_w"], params["stem_s"], params["stem_b"])
    y = conv_bn(h, params["b1c1_w"], params["b1c1_s"], params["b1c1_b"])
    z = conv_bn(y, params["b1c2_w"], params["b1c2_s"], params["b1c2_b"], res=h)
    return jnp.mean(z, axis=(1, 2))                               # (N, C)


if __name__ == "__main__":
    key = jax.random.PRNGKey(0)
    k_param, k_x = jax.random.split(key)

    params = init_params(k_param, cin=3, c=8)
    x = jax.random.normal(k_x, (2, 3, 16, 16), jnp.float32)   # NCHW input

    fwd = jax.jit(net_forward)
    out = jax.block_until_ready(fwd(params, x))

    ref = net_reference(params, x)
    assert out.shape == (2, 8), out.shape
    assert out.dtype == jnp.float32
    assert bool(jnp.all(jnp.isfinite(out)))
    assert bool(jnp.allclose(out, ref, atol=5e-2, rtol=5e-2)), (out, ref)
    print("KERNEL_OK")
</pallas_src>

<mosaic_0001>
module attributes {stable_mosaic.version = 11 : i64} {
  func.func @_net_fused_kernel(%arg0: i32, %arg1: memref<1x8x512xbf16, #tpu.memory_space<vmem>>, %arg2: memref<3x9x8x8xbf16, #tpu.memory_space<vmem>>, %arg3: memref<3x8x1xf32, #tpu.memory_space<vmem>>, %arg4: memref<1x343xf32, #tpu.memory_space<vmem>>, %arg5: memref<343x1xbf16, #tpu.memory_space<vmem>>, %arg6: memref<1x8x1xf32, #tpu.memory_space<vmem>>, %arg7: memref<8x512xbf16, #tpu.memory_space<vmem>>) attributes {dimension_semantics = [#tpu.dimension_semantics<parallel>], iteration_bounds = array<i64: 2>, scalar_prefetch = 0 : i64, scratch_operands = 1 : i64, tpu.core_type = #tpu.core_type<tc>, window_params = [{transform_indices = @transform_0, window_bounds = array<i64: 1, 8, 512>}, {pipeline_mode = #tpu.pipeline_mode<synchronous>, transform_indices = @transform_1, window_bounds = array<i64: 3, 9, 8, 8>}, {pipeline_mode = #tpu.pipeline_mode<synchronous>, transform_indices = @transform_2, window_bounds = array<i64: 3, 8, 1>}, {pipeline_mode = #tpu.pipeline_mode<synchronous>, transform_indices = @transform_3, window_bounds = array<i64: 1, 343>}, {pipeline_mode = #tpu.pipeline_mode<synchronous>, transform_indices = @transform_4, window_bounds = array<i64: 343, 1>}, {transform_indices = @transform_5, window_bounds = array<i64: 1, 8, 1>}]} {
    %cst = arith.constant 0.000000e+00 : bf16
    %0 = vector.broadcast %cst : bf16 to vector<8x128xbf16>
    %c0 = arith.constant 0 : index
    %c0_0 = arith.constant 0 : index
    %1 = vector.load %arg7[%c0, %c0_0] : memref<8x512xbf16, #tpu.memory_space<vmem>>, vector<8x128xbf16>
    tpu.vector_store %arg7[%c0, %c0_0], %0 {strides = array<i32>} : memref<8x512xbf16, #tpu.memory_space<vmem>>, vector<8x128xbf16>,
    %cst_1 = arith.constant 0.000000e+00 : bf16
    %2 = vector.broadcast %cst_1 : bf16 to vector<8x41xbf16>
    %c0_2 = arith.constant 0 : index
    %c471 = arith.constant 471 : index
    %3 = vector.load %arg7[%c0_2, %c471] : memref<8x512xbf16, #tpu.memory_space<vmem>>, vector<8x41xbf16>
    tpu.vector_store %arg7[%c0_2, %c471], %2 {strides = array<i32>} : memref<8x512xbf16, #tpu.memory_space<vmem>>, vector<8x41xbf16>,
    %c0_3 = arith.constant 0 : index
    %c0_4 = arith.constant 0 : index
    %4 = vector.load %arg4[%c0_3, %c0_4] : memref<1x343xf32, #tpu.memory_space<vmem>>, vector<1x343xf32>
    %c0_5 = arith.constant 0 : index
    %c0_6 = arith.constant 0 : index
    %c0_7 = arith.constant 0 : index
    %5 = vector.load %arg1[%c0_5, %c0_6, %c0_7] : memref<1x8x512xbf16, #tpu.memory_space<vmem>>, vector<1x8x512xbf16>
    %6 = vector.shape_cast %5 : vector<1x8x512xbf16> to vector<8x512xbf16>
    %7 = vector.extract_strided_slice %6 {offsets = [0, 109], sizes = [8, 343], strides = [1, 1]} : vector<8x512xbf16> to vector<8x343xbf16>
    %c0_8 = arith.constant 0 : index
    %c0_9 = arith.constant 0 : index
    %c0_10 = arith.constant 0 : index
    %c0_11 = arith.constant 0 : index
    %8 = vector.load %arg2[%c0_8, %c0_9, %c0_10, %c0_11] : memref<3x9x8x8xbf16, #tpu.memory_space<vmem>>, vector<1x1x8x8xbf16>
    %9 = vector.shape_cast %8 : vector<1x1x8x8xbf16> to vector<8x8xbf16>
    %cst_12 = arith.constant dense<0.000000e+00> : vector<8x343xf32>
    %10 = tpu.matmul %9, %7, %cst_12 {dimension_numbers = #tpu.dot_dimension_numbers<[1], [0], [0], [1], [0, 0, 1, 1], [], []>} : vector<8x8xbf16>, vector<8x343xbf16>, vector<8x343xf32> -> vector<8x343xf32>
    %11 = vector.extract_strided_slice %6 {offsets = [0, 110], sizes = [8, 343], strides = [1, 1]} : vector<8x512xbf16> to vector<8x343xbf16>
    %c0_13 = arith.constant 0 : index
    %c1 = arith.constant 1 : index
    %c0_14 = arith.constant 0 : index
    %c0_15 = arith.constant 0 : index
    %12 = vector.load %arg2[%c0_13, %c1, %c0_14, %c0_15] : memref<3x9x8x8xbf16, #tpu.memory_space<vmem>>, vector<1x1x8x8xbf16>
    %13 = vector.shape_cast %12 : vector<1x1x8x8xbf16> to vector<8x8xbf16>
    %cst_16 = arith.constant dense<0.000000e+00> : vector<8x343xf32>
    %14 = tpu.matmul %13, %11, %cst_16 {dimension_numbers = #tpu.dot_dimension_numbers<[1], [0], [0], [1], [0, 0, 1, 1], [], []>} : vector<8x8xbf16>, vector<8x343xbf16>, vector<8x343xf32> -> vector<8x343xf32>
    %15 = arith.addf %10, %14 : vector<8x343xf32>
    %16 = vector.extract_strided_slice %6 {offsets = [0, 111], sizes = [8, 343], strides = [1, 1]} : vector<8x512xbf16> to vector<8x343xbf16>
    %c0_17 = arith.constant 0 : index
    %c2 = arith.constant 2 : index
    %c0_18 = arith.constant 0 : index
    %c0_19 = arith.constant 0 : index
    %17 = vector.load %arg2[%c0_17, %c2, %c0_18, %c0_19] : memref<3x9x8x8xbf16, #tpu.memory_space<vmem>>, vector<1x1x8x8xbf16>
    %18 = vector.shape_cast %17 : vector<1x1x8x8xbf16> to vector<8x8xbf16>
    %cst_20 = arith.constant dense<0.000000e+00> : vector<8x343xf32>
    %19 = tpu.matmul %18, %16, %cst_20 {dimension_numbers = #tpu.dot_dimension_numbers<[1], [0], [0], [1], [0, 0, 1, 1], [], []>} : vector<8x8xbf16>, vector<8x343xbf16>, vector<8x343xf32> -> vector<8x343xf32>
    %20 = arith.addf %15, %19 : vector<8x343xf32>
    %21 = vector.extract_strided_slice %6 {offsets = [0, 127], sizes = [8, 343], strides = [1, 1]} : vector<8x512xbf16> to vector<8x343xbf16>
    %c0_21 = arith.constant 0 : index
    %c3 = arith.constant 3 : index
    %c0_22 = arith.constant 0 : index
    %c0_23 = arith.constant 0 : index
    %22 = vector.load %arg2[%c0_21, %c3, %c0_22, %c0_23] : memref<3x9x8x8xbf16, #tpu.memory_space<vmem>>, vector<1x1x8x8xbf16>
    %23 = vector.shape_cast %22 : vector<1x1x8x8xbf16> to vector<8x8xbf16>
    %cst_24 = arith.constant dense<0.000000e+00> : vector<8x343xf32>
    %24 = tpu.matmul %23, %21, %cst_24 {dimension_numbers = #tpu.dot_dimension_numbers<[1], [0], [0], [1], [0, 0, 1, 1], [], []>} : vector<8x8xbf16>, vector<8x343xbf16>, vector<8x343xf32> -> vector<8x343xf32>
    %25 = arith.addf %20, %24 : vector<8x343xf32>
    %26 = vector.extract_strided_slice %6 {offsets = [0, 128], sizes = [8, 343], strides = [1, 1]} : vector<8x512xbf16> to vector<8x343xbf16>
    %c0_25 = arith.constant 0 : index
    %c4 = arith.constant 4 : index
    %c0_26 = arith.constant 0 : index
    %c0_27 = arith.constant 0 : index
    %27 = vector.load %arg2[%c0_25, %c4, %c0_26, %c0_27] : memref<3x9x8x8xbf16, #tpu.memory_space<vmem>>, vector<1x1x8x8xbf16>
    %28 = vector.shape_cast %27 : vector<1x1x8x8xbf16> to vector<8x8xbf16>
    %cst_28 = arith.constant dense<0.000000e+00> : vector<8x343xf32>
    %29 = tpu.matmul %28, %26, %cst_28 {dimension_numbers = #tpu.dot_dimension_numbers<[1], [0], [0], [1], [0, 0, 1, 1], [], []>} : vector<8x8xbf16>, vector<8x343xbf16>, vector<8x343xf32> -> vector<8x343xf32>
    %30 = arith.addf %25, %29 : vector<8x343xf32>
    %31 = vector.extract_strided_slice %6 {offsets = [0, 129], sizes = [8, 343], strides = [1, 1]} : vector<8x512xbf16> to vector<8x343xbf16>
    %c0_29 = arith.constant 0 : index
    %c5 = arith.constant 5 : index
    %c0_30 = arith.constant 0 : index
    %c0_31 = arith.constant 0 : index
    %32 = vector.load %arg2[%c0_29, %c5, %c0_30, %c0_31] : memref<3x9x8x8xbf16, #tpu.memory_space<vmem>>, vector<1x1x8x8xbf16>
    %33 = vector.shape_cast %32 : vector<1x1x8x8xbf16> to vector<8x8xbf16>
    %cst_32 = arith.constant dense<0.000000e+00> : vector<8x343xf32>
    %34 = tpu.matmul %33, %31, %cst_32 {dimension_numbers = #tpu.dot_dimension_numbers<[1], [0], [0], [1], [0, 0, 1, 1], [], []>} : vector<8x8xbf16>, vector<8x343xbf16>, vector<8x343xf32> -> vector<8x343xf32>
    %35 = arith.addf %30, %34 : vector<8x343xf32>
    %36 = vector.extract_strided_slice %6 {offsets = [0, 145], sizes = [8, 343], strides = [1, 1]} : vector<8x512xbf16> to vector<8x343xbf16>
    %c0_33 = arith.constant 0 : index
    %c6 = arith.constant 6 : index
    %c0_34 = arith.constant 0 : index
    %c0_35 = arith.constant 0 : index
    %37 = vector.load %arg2[%c0_33, %c6, %c0_34, %c0_35] : memref<3x9x8x8xbf16, #tpu.memory_space<vmem>>, vector<1x1x8x8xbf16>
    %38 = vector.shape_cast %37 : vector<1x1x8x8xbf16> to vector<8x8xbf16>
    %cst_36 = arith.constant dense<0.000000e+00> : vector<8x343xf32>
    %39 = tpu.matmul %38, %36, %cst_36 {dimension_numbers = #tpu.dot_dimension_numbers<[1], [0], [0], [1], [0, 0, 1, 1], [], []>} : vector<8x8xbf16>, vector<8x343xbf16>, vector<8x343xf32> -> vector<8x343xf32>
    %40 = arith.addf %35, %39 : vector<8x343xf32>
    %41 = vector.extract_strided_slice %6 {offsets = [0, 146], sizes = [8, 343], strides = [1, 1]} : vector<8x512xbf16> to vector<8x343xbf16>
    %c0_37 = arith.constant 0 : index
    %c7 = arith.constant 7 : index
    %c0_38 = arith.constant 0 : index
    %c0_39 = arith.constant 0 : index
    %42 = vector.load %arg2[%c0_37, %c7, %c0_38, %c0_39] : memref<3x9x8x8xbf16, #tpu.memory_space<vmem>>, vector<1x1x8x8xbf16>
    %43 = vector.shape_cast %42 : vector<1x1x8x8xbf16> to vector<8x8xbf16>
    %cst_40 = arith.constant dense<0.000000e+00> : vector<8x343xf32>
    %44 = tpu.matmul %43, %41, %cst_40 {dimension_numbers = #tpu.dot_dimension_numbers<[1], [0], [0], [1], [0, 0, 1, 1], [], []>} : vector<8x8xbf16>, vector<8x343xbf16>, vector<8x343xf32> -> vector<8x343xf32>
    %45 = arith.addf %40, %44 : vector<8x343xf32>
    %46 = vector.extract_strided_slice %6 {offsets = [0, 147], sizes = [8, 343], strides = [1, 1]} : vector<8x512xbf16> to vector<8x343xbf16>
    %c0_41 = arith.constant 0 : index
    %c8 = arith.constant 8 : index
    %c0_42 = arith.constant 0 : index
    %c0_43 = arith.constant 0 : index
    %47 = vector.load %arg2[%c0_41, %c8, %c0_42, %c0_43] : memref<3x9x8x8xbf16, #tpu.memory_space<vmem>>, vector<1x1x8x8xbf16>
    %48 = vector.shape_cast %47 : vector<1x1x8x8xbf16> to vector<8x8xbf16>
    %cst_44 = arith.constant dense<0.000000e+00> : vector<8x343xf32>
    %49 = tpu.matmul %48, %46, %cst_44 {dimension_numbers = #tpu.dot_dimension_numbers<[1], [0], [0], [1], [0, 0, 1, 1], [], []>} : vector<8x8xbf16>, vector<8x343xbf16>, vector<8x343xf32> -> vector<8x343xf32>
    %50 = arith.addf %45, %49 : vector<8x343xf32>
    %c0_45 = arith.constant 0 : index
    %c0_46 = arith.constant 0 : index
    %c0_47 = arith.constant 0 : index
    %51 = vector.load %arg3[%c0_45, %c0_46, %c0_47] : memref<3x8x1xf32, #tpu.memory_space<vmem>>, vector<1x8x1xf32>
    %52 = vector.shape_cast %51 : vector<1x8x1xf32> to vector<8x1xf32>
    %53 = vector.broadcast %52 : vector<8x1xf32> to vector<8x343xf32>
    %54 = arith.addf %50, %53 : vector<8x343xf32>
    %cst_48 = arith.constant 0.000000e+00 : f32
    %55 = vector.broadcast %cst_48 : f32 to vector<8x343xf32>
    %56 = arith.maximumf %54, %55 : vector<8x343xf32>
    %57 = vector.broadcast %4 : vector<1x343xf32> to vector<8x343xf32>
    %58 = arith.mulf %56, %57 : vector<8x343xf32>
    %59 = arith.truncf %58 : vector<8x343xf32> to vector<8x343xbf16>
    %c0_49 = arith.constant 0 : index
    %c128 = arith.constant 128 : index
    %60 = vector.load %arg7[%c0_49, %c128] : memref<8x512xbf16, #tpu.memory_space<vmem>>, vector<8x343xbf16>
    tpu.vector_store %arg7[%c0_49, %c128], %59 {strides = array<i32>} : memref<8x512xbf16, #tpu.memory_space<vmem>>, vector<8x343xbf16>,
    %c0_50 = arith.constant 0 : index
    %c0_51 = arith.constant 0 : index
    %61 = vector.load %arg7[%c0_50, %c0_51] : memref<8x512xbf16, #tpu.memory_space<vmem>>, vector<8x512xbf16>
    %62 = vector.extract_strided_slice %61 {offsets = [0, 109], sizes = [8, 343], strides = [1, 1]} : vector<8x512xbf16> to vector<8x343xbf16>
    %c1_52 = arith.constant 1 : index
    %c0_53 = arith.constant 0 : index
    %c0_54 = arith.constant 0 : index
    %c0_55 = arith.constant 0 : index
    %63 = vector.load %arg2[%c1_52, %c0_53, %c0_54, %c0_55] : memref<3x9x8x8xbf16, #tpu.memory_space<vmem>>, vector<1x1x8x8xbf16>
    %64 = vector.shape_cast %63 : vector<1x1x8x8xbf16> to vector<8x8xbf16>
    %cst_56 = arith.constant dense<0.000000e+00> : vector<8x343xf32>
    %65 = tpu.matmul %64, %62, %cst_56 {dimension_numbers = #tpu.dot_dimension_numbers<[1], [0], [0], [1], [0, 0, 1, 1], [], []>} : vector<8x8xbf16>, vector<8x343xbf16>, vector<8x343xf32> -> vector<8x343xf32>
    %66 = vector.extract_strided_slice %61 {offsets = [0, 110], sizes = [8, 343], strides = [1, 1]} : vector<8x512xbf16> to vector<8x343xbf16>
    %c1_57 = arith.constant 1 : index
    %c1_58 = arith.constant 1 : index
    %c0_59 = arith.constant 0 : index
    %c0_60 = arith.constant 0 : index
    %67 = vector.load %arg2[%c1_57, %c1_58, %c0_59, %c0_60] : memref<3x9x8x8xbf16, #tpu.memory_space<vmem>>, vector<1x1x8x8xbf16>
    %68 = vector.shape_cast %67 : vector<1x1x8x8xbf16> to vector<8x8xbf16>
    %cst_61 = arith.constant dense<0.000000e+00> : vector<8x343xf32>
    %69 = tpu.matmul %68, %66, %cst_61 {dimension_numbers = #tpu.dot_dimension_numbers<[1], [0], [0], [1], [0, 0, 1, 1], [], []>} : vector<8x8xbf16>, vector<8x343xbf16>, vector<8x343xf32> -> vector<8x343xf32>
    %70 = arith.addf %65, %69 : vector<8x343xf32>
    %71 = vector.extract_strided_slice %61 {offsets = [0, 111], sizes = [8, 343], strides = [1, 1]} : vector<8x512xbf16> to vector<8x343xbf16>
    %c1_62 = arith.constant 1 : index
    %c2_63 = arith.constant 2 : index
    %c0_64 = arith.constant 0 : index
    %c0_65 = arith.constant 0 : index
    %72 = vector.load %arg2[%c1_62, %c2_63, %c0_64, %c0_65] : memref<3x9x8x8xbf16, #tpu.memory_space<vmem>>, vector<1x1x8x8xbf16>
    %73 = vector.shape_cast %72 : vector<1x1x8x8xbf16> to vector<8x8xbf16>
    %cst_66 = arith.constant dense<0.000000e+00> : vector<8x343xf32>
    %74 = tpu.matmul %73, %71, %cst_66 {dimension_numbers = #tpu.dot_dimension_numbers<[1], [0], [0], [1], [0, 0, 1, 1], [], []>} : vector<8x8xbf16>, vector<8x343xbf16>, vector<8x343xf32> -> vector<8x343xf32>
    %75 = arith.addf %70, %74 : vector<8x343xf32>
    %76 = vector.extract_strided_slice %61 {offsets = [0, 127], sizes = [8, 343], strides = [1, 1]} : vector<8x512xbf16> to vector<8x343xbf16>
    %c1_67 = arith.constant 1 : index
    %c3_68 = arith.constant 3 : index
    %c0_69 = arith.constant 0 : index
    %c0_70 = arith.constant 0 : index
    %77 = vector.load %arg2[%c1_67, %c3_68, %c0_69, %c0_70] : memref<3x9x8x8xbf16, #tpu.memory_space<vmem>>, vector<1x1x8x8xbf16>
    %78 = vector.shape_cast %77 : vector<1x1x8x8xbf16> to vector<8x8xbf16>
    %cst_71 = arith.constant dense<0.000000e+00> : vector<8x343xf32>
    %79 = tpu.matmul %78, %76, %cst_71 {dimension_numbers = #tpu.dot_dimension_numbers<[1], [0], [0], [1], [0, 0, 1, 1], [], []>} : vector<8x8xbf16>, vector<8x343xbf16>, vector<8x343xf32> -> vector<8x343xf32>
    %80 = arith.addf %75, %79 : vector<8x343xf32>
    %81 = vector.extract_strided_slice %61 {offsets = [0, 128], sizes = [8, 343], strides = [1, 1]} : vector<8x512xbf16> to vector<8x343xbf16>
    %c1_72 = arith.constant 1 : index
    %c4_73 = arith.constant 4 : index
    %c0_74 = arith.constant 0 : index
    %c0_75 = arith.constant 0 : index
    %82 = vector.load %arg2[%c1_72, %c4_73, %c0_74, %c0_75] : memref<3x9x8x8xbf16, #tpu.memory_space<vmem>>, vector<1x1x8x8xbf16>
    %83 = vector.shape_cast %82 : vector<1x1x8x8xbf16> to vector<8x8xbf16>
    %cst_76 = arith.constant dense<0.000000e+00> : vector<8x343xf32>
    %84 = tpu.matmul %83, %81, %cst_76 {dimension_numbers = #tpu.dot_dimension_numbers<[1], [0], [0], [1], [0, 0, 1, 1], [], []>} : vector<8x8xbf16>, vector<8x343xbf16>, vector<8x343xf32> -> vector<8x343xf32>
    %85 = arith.addf %80, %84 : vector<8x343xf32>
    %86 = vector.extract_strided_slice %61 {offsets = [0, 129], sizes = [8, 343], strides = [1, 1]} : vector<8x512xbf16> to vector<8x343xbf16>
    %c1_77 = arith.constant 1 : index
    %c5_78 = arith.constant 5 : index
    %c0_79 = arith.constant 0 : index
    %c0_80 = arith.constant 0 : index
    %87 = vector.load %arg2[%c1_77, %c5_78, %c0_79, %c0_80] : memref<3x9x8x8xbf16, #tpu.memory_space<vmem>>, vector<1x1x8x8xbf16>
    %88 = vector.shape_cast %87 : vector<1x1x8x8xbf16> to vector<8x8xbf16>
    %cst_81 = arith.constant dense<0.000000e+00> : vector<8x343xf32>
    %89 = tpu.matmul %88, %86, %cst_81 {dimension_numbers = #tpu.dot_dimension_numbers<[1], [0], [0], [1], [0, 0, 1, 1], [], []>} : vector<8x8xbf16>, vector<8x343xbf16>, vector<8x343xf32> -> vector<8x343xf32>
    %90 = arith.addf %85, %89 : vector<8x343xf32>
    %91 = vector.extract_strided_slice %61 {offsets = [0, 145], sizes = [8, 343], strides = [1, 1]} : vector<8x512xbf16> to vector<8x343xbf16>
    %c1_82 = arith.constant 1 : index
    %c6_83 = arith.constant 6 : index
    %c0_84 = arith.constant 0 : index
    %c0_85 = arith.constant 0 : index
    %92 = vector.load %arg2[%c1_82, %c6_83, %c0_84, %c0_85] : memref<3x9x8x8xbf16, #tpu.memory_space<vmem>>, vector<1x1x8x8xbf16>
    %93 = vector.shape_cast %92 : vector<1x1x8x8xbf16> to vector<8x8xbf16>
    %cst_86 = arith.constant dense<0.000000e+00> : vector<8x343xf32>
    %94 = tpu.matmul %93, %91, %cst_86 {dimension_numbers = #tpu.dot_dimension_numbers<[1], [0], [0], [1], [0, 0, 1, 1], [], []>} : vector<8x8xbf16>, vector<8x343xbf16>, vector<8x343xf32> -> vector<8x343xf32>
    %95 = arith.addf %90, %94 : vector<8x343xf32>
    %96 = vector.extract_strided_slice %61 {offsets = [0, 146], sizes = [8, 343], strides = [1, 1]} : vector<8x512xbf16> to vector<8x343xbf16>
    %c1_87 = arith.constant 1 : index
    %c7_88 = arith.constant 7 : index
    %c0_89 = arith.constant 0 : index
    %c0_90 = arith.constant 0 : index
    %97 = vector.load %arg2[%c1_87, %c7_88, %c0_89, %c0_90] : memref<3x9x8x8xbf16, #tpu.memory_space<vmem>>, vector<1x1x8x8xbf16>
    %98 = vector.shape_cast %97 : vector<1x1x8x8xbf16> to vector<8x8xbf16>
    %cst_91 = arith.constant dense<0.000000e+00> : vector<8x343xf32>
    %99 = tpu.matmul %98, %96, %cst_91 {dimension_numbers = #tpu.dot_dimension_numbers<[1], [0], [0], [1], [0, 0, 1, 1], [], []>} : vector<8x8xbf16>, vector<8x343xbf16>, vector<8x343xf32> -> vector<8x343xf32>
    %100 = arith.addf %95, %99 : vector<8x343xf32>
    %101 = vector.extract_strided_slice %61 {offsets = [0, 147], sizes = [8, 343], strides = [1, 1]} : vector<8x512xbf16> to vector<8x343xbf16>
    %c1_92 = arith.constant 1 : index
    %c8_93 = arith.constant 8 : index
    %c0_94 = arith.constant 0 : index
    %c0_95 = arith.constant 0 : index
    %102 = vector.load %arg2[%c1_92, %c8_93, %c0_94, %c0_95] : memref<3x9x8x8xbf16, #tpu.memory_space<vmem>>, vector<1x1x8x8xbf16>
    %103 = vector.shape_cast %102 : vector<1x1x8x8xbf16> to vector<8x8xbf16>
    %cst_96 = arith.constant dense<0.000000e+00> : vector<8x343xf32>
    %104 = tpu.matmul %103, %101, %cst_96 {dimension_numbers = #tpu.dot_dimension_numbers<[1], [0], [0], [1], [0, 0, 1, 1], [], []>} : vector<8x8xbf16>, vector<8x343xbf16>, vector<8x343xf32> -> vector<8x343xf32>
    %105 = arith.addf %100, %104 : vector<8x343xf32>
    %c1_97 = arith.constant 1 : index
    %c0_98 = arith.constant 0 : index
    %c0_99 = arith.constant 0 : index
    %106 = vector.load %arg3[%c1_97, %c0_98, %c0_99] : memref<3x8x1xf32, #tpu.memory_space<vmem>>, vector<1x8x1xf32>
    %107 = vector.shape_cast %106 : vector<1x8x1xf32> to vector<8x1xf32>
    %108 = vector.broadcast %107 : vector<8x1xf32> to vector<8x343xf32>
    %109 = arith.addf %105, %108 : vector<8x343xf32>
    %cst_100 = arith.constant 0.000000e+00 : f32
    %110 = vector.broadcast %cst_100 : f32 to vector<8x343xf32>
    %111 = arith.maximumf %109, %110 : vector<8x343xf32>
    %112 = vector.broadcast %4 : vector<1x343xf32> to vector<8x343xf32>
    %113 = arith.mulf %111, %112 : vector<8x343xf32>
    %114 = arith.truncf %113 : vector<8x343xf32> to vector<8x343xbf16>
    %c0_101 = arith.constant 0 : index
    %c128_102 = arith.constant 128 : index
    %115 = vector.load %arg7[%c0_101, %c128_102] : memref<8x512xbf16, #tpu.memory_space<vmem>>, vector<8x343xbf16>
    tpu.vector_store %arg7[%c0_101, %c128_102], %114 {strides = array<i32>} : memref<8x512xbf16, #tpu.memory_space<vmem>>, vector<8x343xbf16>,
    %c0_103 = arith.constant 0 : index
    %c0_104 = arith.constant 0 : index
    %116 = vector.load %arg7[%c0_103, %c0_104] : memref<8x512xbf16, #tpu.memory_space<vmem>>, vector<8x512xbf16>
    %117 = vector.extract_strided_slice %116 {offsets = [0, 109], sizes = [8, 343], strides = [1, 1]} : vector<8x512xbf16> to vector<8x343xbf16>
    %c2_105 = arith.constant 2 : index
    %c0_106 = arith.constant 0 : index
    %c0_107 = arith.constant 0 : index
    %c0_108 = arith.constant 0 : index
    %118 = vector.load %arg2[%c2_105, %c0_106, %c0_107, %c0_108] : memref<3x9x8x8xbf16, #tpu.memory_space<vmem>>, vector<1x1x8x8xbf16>
    %119 = vector.shape_cast %118 : vector<1x1x8x8xbf16> to vector<8x8xbf16>
    %cst_109 = arith.constant dense<0.000000e+00> : vector<8x343xf32>
    %120 = tpu.matmul %119, %117, %cst_109 {dimension_numbers = #tpu.dot_dimension_numbers<[1], [0], [0], [1], [0, 0, 1, 1], [], []>} : vector<8x8xbf16>, vector<8x343xbf16>, vector<8x343xf32> -> vector<8x343xf32>
    %121 = vector.extract_strided_slice %116 {offsets = [0, 110], sizes = [8, 343], strides = [1, 1]} : vector<8x512xbf16> to vector<8x343xbf16>
    %c2_110 = arith.constant 2 : index
    %c1_111 = arith.constant 1 : index
    %c0_112 = arith.constant 0 : index
    %c0_113 = arith.constant 0 : index
    %122 = vector.load %arg2[%c2_110, %c1_111, %c0_112, %c0_113] : memref<3x9x8x8xbf16, #tpu.memory_space<vmem>>, vector<1x1x8x8xbf16>
    %123 = vector.shape_cast %122 : vector<1x1x8x8xbf16> to vector<8x8xbf16>
    %cst_114 = arith.constant dense<0.000000e+00> : vector<8x343xf32>
    %124 = tpu.matmul %123, %121, %cst_114 {dimension_numbers = #tpu.dot_dimension_numbers<[1], [0], [0], [1], [0, 0, 1, 1], [], []>} : vector<8x8xbf16>, vector<8x343xbf16>, vector<8x343xf32> -> vector<8x343xf32>
    %125 = arith.addf %120, %124 : vector<8x343xf32>
    %126 = vector.extract_strided_slice %116 {offsets = [0, 111], sizes = [8, 343], strides = [1, 1]} : vector<8x512xbf16> to vector<8x343xbf16>
    %c2_115 = arith.constant 2 : index
    %c2_116 = arith.constant 2 : index
    %c0_117 = arith.constant 0 : index
    %c0_118 = arith.constant 0 : index
    %127 = vector.load %arg2[%c2_115, %c2_116, %c0_117, %c0_118] : memref<3x9x8x8xbf16, #tpu.memory_space<vmem>>, vector<1x1x8x8xbf16>
    %128 = vector.shape_cast %127 : vector<1x1x8x8xbf16> to vector<8x8xbf16>
    %cst_119 = arith.constant dense<0.000000e+00> : vector<8x343xf32>
    %129 = tpu.matmul %128, %126, %cst_119 {dimension_numbers = #tpu.dot_dimension_numbers<[1], [0], [0], [1], [0, 0, 1, 1], [], []>} : vector<8x8xbf16>, vector<8x343xbf16>, vector<8x343xf32> -> vector<8x343xf32>
    %130 = arith.addf %125, %129 : vector<8x343xf32>
    %131 = vector.extract_strided_slice %116 {offsets = [0, 127], sizes = [8, 343], strides = [1, 1]} : vector<8x512xbf16> to vector<8x343xbf16>
    %c2_120 = arith.constant 2 : index
    %c3_121 = arith.constant 3 : index
    %c0_122 = arith.constant 0 : index
    %c0_123 = arith.constant 0 : index
    %132 = vector.load %arg2[%c2_120, %c3_121, %c0_122, %c0_123] : memref<3x9x8x8xbf16, #tpu.memory_space<vmem>>, vector<1x1x8x8xbf16>
    %133 = vector.shape_cast %132 : vector<1x1x8x8xbf16> to vector<8x8xbf16>
    %cst_124 = arith.constant dense<0.000000e+00> : vector<8x343xf32>
    %134 = tpu.matmul %133, %131, %cst_124 {dimension_numbers = #tpu.dot_dimension_numbers<[1], [0], [0], [1], [0, 0, 1, 1], [], []>} : vector<8x8xbf16>, vector<8x343xbf16>, vector<8x343xf32> -> vector<8x343xf32>
    %135 = arith.addf %130, %134 : vector<8x343xf32>
    %136 = vector.extract_strided_slice %116 {offsets = [0, 128], sizes = [8, 343], strides = [1, 1]} : vector<8x512xbf16> to vector<8x343xbf16>
    %c2_125 = arith.constant 2 : index
    %c4_126 = arith.constant 4 : index
    %c0_127 = arith.constant 0 : index
    %c0_128 = arith.constant 0 : index
    %137 = vector.load %arg2[%c2_125, %c4_126, %c0_127, %c0_128] : memref<3x9x8x8xbf16, #tpu.memory_space<vmem>>, vector<1x1x8x8xbf16>
    %138 = vector.shape_cast %137 : vector<1x1x8x8xbf16> to vector<8x8xbf16>
    %cst_129 = arith.constant dense<0.000000e+00> : vector<8x343xf32>
    %139 = tpu.matmul %138, %136, %cst_129 {dimension_numbers = #tpu.dot_dimension_numbers<[1], [0], [0], [1], [0, 0, 1, 1], [], []>} : vector<8x8xbf16>, vector<8x343xbf16>, vector<8x343xf32> -> vector<8x343xf32>
    %140 = arith.addf %135, %139 : vector<8x343xf32>
    %141 = vector.extract_strided_slice %116 {offsets = [0, 129], sizes = [8, 343], strides = [1, 1]} : vector<8x512xbf16> to vector<8x343xbf16>
    %c2_130 = arith.constant 2 : index
    %c5_131 = arith.constant 5 : index
    %c0_132 = arith.constant 0 : index
    %c0_133 = arith.constant 0 : index
    %142 = vector.load %arg2[%c2_130, %c5_131, %c0_132, %c0_133] : memref<3x9x8x8xbf16, #tpu.memory_space<vmem>>, vector<1x1x8x8xbf16>
    %143 = vector.shape_cast %142 : vector<1x1x8x8xbf16> to vector<8x8xbf16>
    %cst_134 = arith.constant dense<0.000000e+00> : vector<8x343xf32>
    %144 = tpu.matmul %143, %141, %cst_134 {dimension_numbers = #tpu.dot_dimension_numbers<[1], [0], [0], [1], [0, 0, 1, 1], [], []>} : vector<8x8xbf16>, vector<8x343xbf16>, vector<8x343xf32> -> vector<8x343xf32>
    %145 = arith.addf %140, %144 : vector<8x343xf32>
    %146 = vector.extract_strided_slice %116 {offsets = [0, 145], sizes = [8, 343], strides = [1, 1]} : vector<8x512xbf16> to vector<8x343xbf16>
    %c2_135 = arith.constant 2 : index
    %c6_136 = arith.constant 6 : index
    %c0_137 = arith.constant 0 : index
    %c0_138 = arith.constant 0 : index
    %147 = vector.load %arg2[%c2_135, %c6_136, %c0_137, %c0_138] : memref<3x9x8x8xbf16, #tpu.memory_space<vmem>>, vector<1x1x8x8xbf16>
    %148 = vector.shape_cast %147 : vector<1x1x8x8xbf16> to vector<8x8xbf16>
    %cst_139 = arith.constant dense<0.000000e+00> : vector<8x343xf32>
    %149 = tpu.matmul %148, %146, %cst_139 {dimension_numbers = #tpu.dot_dimension_numbers<[1], [0], [0], [1], [0, 0, 1, 1], [], []>} : vector<8x8xbf16>, vector<8x343xbf16>, vector<8x343xf32> -> vector<8x343xf32>
    %150 = arith.addf %145, %149 : vector<8x343xf32>
    %151 = vector.extract_strided_slice %116 {offsets = [0, 146], sizes = [8, 343], strides = [1, 1]} : vector<8x512xbf16> to vector<8x343xbf16>
    %c2_140 = arith.constant 2 : index
    %c7_141 = arith.constant 7 : index
    %c0_142 = arith.constant 0 : index
    %c0_143 = arith.constant 0 : index
    %152 = vector.load %arg2[%c2_140, %c7_141, %c0_142, %c0_143] : memref<3x9x8x8xbf16, #tpu.memory_space<vmem>>, vector<1x1x8x8xbf16>
    %153 = vector.shape_cast %152 : vector<1x1x8x8xbf16> to vector<8x8xbf16>
    %cst_144 = arith.constant dense<0.000000e+00> : vector<8x343xf32>
    %154 = tpu.matmul %153, %151, %cst_144 {dimension_numbers = #tpu.dot_dimension_numbers<[1], [0], [0], [1], [0, 0, 1, 1], [], []>} : vector<8x8xbf16>, vector<8x343xbf16>, vector<8x343xf32> -> vector<8x343xf32>
    %155 = arith.addf %150, %154 : vector<8x343xf32>
    %156 = vector.extract_strided_slice %116 {offsets = [0, 147], sizes = [8, 343], strides = [1, 1]} : vector<8x512xbf16> to vector<8x343xbf16>
    %c2_145 = arith.constant 2 : index
    %c8_146 = arith.constant 8 : index
    %c0_147 = arith.constant 0 : index
    %c0_148 = arith.constant 0 : index
    %157 = vector.load %arg2[%c2_145, %c8_146, %c0_147, %c0_148] : memref<3x9x8x8xbf16, #tpu.memory_space<vmem>>, vector<1x1x8x8xbf16>
    %158 = vector.shape_cast %157 : vector<1x1x8x8xbf16> to vector<8x8xbf16>
    %cst_149 = arith.constant dense<0.000000e+00> : vector<8x343xf32>
    %159 = tpu.matmul %158, %156, %cst_149 {dimension_numbers = #tpu.dot_dimension_numbers<[1], [0], [0], [1], [0, 0, 1, 1], [], []>} : vector<8x8xbf16>, vector<8x343xbf16>, vector<8x343xf32> -> vector<8x343xf32>
    %160 = arith.addf %155, %159 : vector<8x343xf32>
    %c2_150 = arith.constant 2 : index
    %c0_151 = arith.constant 0 : index
    %c0_152 = arith.constant 0 : index
    %161 = vector.load %arg3[%c2_150, %c0_151, %c0_152] : memref<3x8x1xf32, #tpu.memory_space<vmem>>, vector<1x8x1xf32>
    %162 = vector.shape_cast %161 : vector<1x8x1xf32> to vector<8x1xf32>
    %163 = vector.broadcast %162 : vector<8x1xf32> to vector<8x343xf32>
    %164 = arith.addf %160, %163 : vector<8x343xf32>
    %165 = arith.addf %164, %58 : vector<8x343xf32>
    %cst_153 = arith.constant 0.000000e+00 : f32
    %166 = vector.broadcast %cst_153 : f32 to vector<8x343xf32>
    %167 = arith.maximumf %165, %166 : vector<8x343xf32>
    %168 = arith.truncf %167 : vector<8x343xf32> to vector<8x343xbf16>
    %c0_154 = arith.constant 0 : index
    %c0_155 = arith.constant 0 : index
    %169 = vector.load %arg5[%c0_154, %c0_155] : memref<343x1xbf16, #tpu.memory_space<vmem>>, vector<343x1xbf16>
    %cst_156 = arith.constant dense<0.000000e+00> : vector<8x1xf32>
    %170 = tpu.matmul %168, %169, %cst_156 {dimension_numbers = #tpu.dot_dimension_numbers<[1], [0], [0], [1], [0, 0, 1, 1], [], []>} : vector<8x343xbf16>, vector<343x1xbf16>, vector<8x1xf32> -> vector<8x1xf32>
    %cst_157 = arith.constant 3.906250e-03 : f32
    %171 = vector.broadcast %cst_157 : f32 to vector<8x1xf32>
    %172 = arith.mulf %170, %171 : vector<8x1xf32>
    %c0_158 = arith.constant 0 : index
    %c0_159 = arith.constant 0 : index
    %c0_160 = arith.constant 0 : index
    %173 = vector.load %arg6[%c0_158, %c0_159, %c0_160] : memref<1x8x1xf32, #tpu.memory_space<vmem>>, vector<1x8x1xf32>
    %174 = vector.shape_cast %173 : vector<1x8x1xf32> to vector<8x1xf32>
    %175 = vector.shape_cast %172 : vector<8x1xf32> to vector<1x8x1xf32>
    tpu.vector_store %arg6[%c0_158, %c0_159, %c0_160], %175 {strides = array<i32>} : memref<1x8x1xf32, #tpu.memory_space<vmem>>, vector<1x8x1xf32>,
    return
  }
  func.func @transform_0(%arg0: i32) -> (i32, i32, i32) {
    %c0_i32 = arith.constant 0 : i32
    %c0_i32_0 = arith.constant 0 : i32
    %c0_i32_1 = arith.constant 0 : i32
    return %arg0, %c0_i32, %c0_i32_0 : i32, i32, i32
  }
  func.func @transform_1(%arg0: i32) -> (i32, i32, i32, i32) {
    %c0_i32 = arith.constant 0 : i32
    %c0_i32_0 = arith.constant 0 : i32
    %c0_i32_1 = arith.constant 0 : i32
    %c0_i32_2 = arith.constant 0 : i32
    %c0_i32_3 = arith.constant 0 : i32
    return %c0_i32, %c0_i32_0, %c0_i32_1, %c0_i32_2 : i32, i32, i32, i32
  }
  func.func @transform_2(%arg0: i32) -> (i32, i32, i32) {
    %c0_i32 = arith.constant 0 : i32
    %c0_i32_0 = arith.constant 0 : i32
    %c0_i32_1 = arith.constant 0 : i32
    %c0_i32_2 = arith.constant 0 : i32
    return %c0_i32, %c0_i32_0, %c0_i32_1 : i32, i32, i32
  }
  func.func @transform_3(%arg0: i32) -> (i32, i32) {
    %c0_i32 = arith.constant 0 : i32
    %c0_i32_0 = arith.constant 0 : i32
    %c0_i32_1 = arith.constant 0 : i32
    return %c0_i32, %c0_i32_0 : i32, i32
  }
  func.func @transform_4(%arg0: i32) -> (i32, i32) {
    %c0_i32 = arith.constant 0 : i32
    %c0_i32_0 = arith.constant 0 : i32
    %c0_i32_1 = arith.constant 0 : i32
    return %c0_i32, %c0_i32_0 : i32, i32
  }
  func.func @transform_5(%arg0: i32) -> (i32, i32, i32) {
    %c0_i32 = arith.constant 0 : i32
    %c0_i32_0 = arith.constant 0 : i32
    %c0_i32_1 = arith.constant 0 : i32
    return %arg0, %c0_i32, %c0_i32_0 : i32, i32, i32
  }
}

</mosaic_0001>

<llo_original>
// kernel: net_forward.1
$region0: #{net_forward.1}
  #allocation0 [shape = 'u32[]', space=smem, size = 0x4, offset = 0x4, fixed_abs, tag = 'smem constant byte address 0x4 - core index']
  #allocation1 [shape = 'u32[144,128]{1,0:T(1,128)}', space=vmem, size = 0x12000, scoped, tag = 'internal scratch']
  #allocation2 [shape = 'bf16[8,512]{1,0:T(8,128)(2,1)}', space=vmem, size = 0x2000, scoped, tag = 'scratch operand']
  %s0 = inlined_call_operand.vmem [shape: bf16[2,8,512], index: 0, kind: input, shape index: {}]
  %s1 = inlined_call_operand.vmem [shape: bf16[3,9,8,8], index: 1, kind: input, shape index: {}]
  %s2 = inlined_call_operand.vmem [shape: f32[3,8,1], index: 2, kind: input, shape index: {}]
  %s3 = inlined_call_operand.vmem [shape: f32[1,343], index: 3, kind: input, shape index: {}]
  %s4 = inlined_call_operand.vmem [shape: bf16[343,1], index: 4, kind: input, shape index: {}]
  %s5 = inlined_call_operand.vmem [shape: f32[2,8,1], index: 5, kind: output, shape index: {}]
  %s6 = sld [smem:[#allocation0]]
  $region53: #{net_forward.1} parent=0
    _
  %s8 = ssub.s32 1, %s6
  %s9 = scalar_select 0, %s8, %s6
  loop: start=0, step=1, limit=4
  $region2: #{net_forward.1} parent=0 // loop_pre_header
    _
  $region3: #{net_forward.1} parent=0 // loop_header
    %s11 = sphi 0, %s15
    %p12 = scmp.ge.s32.totalorder %s11, 4
    %s21 = sphi 0, %s23
    %s24 = sphi 0, %s21
    %s25 = sphi 0, %s24
    %s41 = sphi 0, %s25
    %s45 = sphi 0, %s45
    %s47 = sphi 0, %s45
    %s48 = sphi 0, %s47
    %s62 = sphi 0, %s48
    %s66 = sphi 0, %s66
    %s68 = sphi 0, %s66
    %s69 = sphi 0, %s68
    %s83 = sphi 0, %s69
    %s87 = sphi 0, %s87
    %s89 = sphi 0, %s87
    %s90 = sphi 0, %s89
    %s104 = sphi 0, %s90
    %s108 = sphi 0, %s108
    %s110 = sphi 0, %s108
    %s111 = sphi 0, %s110
    %s125 = sphi 0, %s111
    %s131 = sphi 0, %s133
    %s134 = sphi 0, %s131
    %s135 = sphi 0, %s134
    %s151 = sphi 0, %s135
  $region4: #{net_forward.1} parent=0 // loop_header_branch
    %14 = sbr.rel (%p12) target = $region8
  $region5: #{net_forward.1} parent=0 // loop_body
    %s16 = ssub.s32 %s11, 1
    %s17 = ssub.s32 %s11, 2
    %s18 = sadd.s32 %s11, 1
    %s19 = ssub.s32 %s11, %s18
    %p20 = scmp.eq.s32.totalorder %s19, 0
    %s22 = sadd.s32 %s21, 1
    %s23 = scalar_select %p20, %s21, %s22
    %p26 = pneg %p20
    %p27 = scmp.eq.s32.totalorder %s11, 1
    %p28 = por %p26, %p27
    %p29 = scmp.ne.s32.totalorder %s21, %s24
    %p30 = scmp.eq.s32.totalorder %s11, 0
    %p31 = por %p29, %p30
    %p32 = scmp.ne.s32.totalorder %s21, %s24
    %p33 = scmp.eq.s32.totalorder %s16, 1
    %p34 = por %p32, %p33
    %p35 = scmp.ne.s32.totalorder %s24, %s25
    %p36 = scmp.eq.s32.totalorder %s16, 0
    %p37 = por %p35, %p36
    %p38 = scmp.ne.s32.totalorder %s24, %s25
    %p39 = scmp.eq.s32.totalorder %s17, 1
    %p40 = por %p38, %p39
    %p42 = scmp.ne.s32.totalorder %s25, %s41
    %p43 = scmp.eq.s32.totalorder %s17, 0
    %p44 = por %p42, %p43
    %s46 = sadd.s32 %s45, 1
    %p49 = scmp.eq.s32.totalorder %s11, 1
    %p50 = scmp.ne.s32.totalorder %s45, %s47
    %p51 = scmp.eq.s32.totalorder %s11, 0
    %p52 = por %p50, %p51
    %p53 = scmp.ne.s32.totalorder %s45, %s47
    %p54 = scmp.eq.s32.totalorder %s16, 1
    %p55 = por %p53, %p54
    %p56 = scmp.ne.s32.totalorder %s47, %s48
    %p57 = scmp.eq.s32.totalorder %s16, 0
    %p58 = por %p56, %p57
    %p59 = scmp.ne.s32.totalorder %s47, %s48
    %p60 = scmp.eq.s32.totalorder %s17, 1
    %p61 = por %p59, %p60
    %p63 = scmp.ne.s32.totalorder %s48, %s62
    %p64 = scmp.eq.s32.totalorder %s17, 0
    %p65 = por %p63, %p64
    %s67 = sadd.s32 %s66, 1
    %p70 = scmp.eq.s32.totalorder %s11, 1
    %p71 = scmp.ne.s32.totalorder %s66, %s68
    %p72 = scmp.eq.s32.totalorder %s11, 0
    %p73 = por %p71, %p72
    %p74 = scmp.ne.s32.totalorder %s66, %s68
    %p75 = scmp.eq.s32.totalorder %s16, 1
    %p76 = por %p74, %p75
    %p77 = scmp.ne.s32.totalorder %s68, %s69
    %p78 = scmp.eq.s32.totalorder %s16, 0
    %p79 = por %p77, %p78
    %p80 = scmp.ne.s32.totalorder %s68, %s69
    %p81 = scmp.eq.s32.totalorder %s17, 1
    %p82 = por %p80, %p81
    %p84 = scmp.ne.s32.totalorder %s69, %s83
    %p85 = scmp.eq.s32.totalorder %s17, 0
    %p86 = por %p84, %p85
    %s88 = sadd.s32 %s87, 1
    %p91 = scmp.eq.s32.totalorder %s11, 1
    %p92 = scmp.ne.s32.totalorder %s87, %s89
    %p93 = scmp.eq.s32.totalorder %s11, 0
    %p94 = por %p92, %p93
    %p95 = scmp.ne.s32.totalorder %s87, %s89
    %p96 = scmp.eq.s32.totalorder %s16, 1
    %p97 = por %p95, %p96
    %p98 = scmp.ne.s32.totalorder %s89, %s90
    %p99 = scmp.eq.s32.totalorder %s16, 0
    %p100 = por %p98, %p99
    %p101 = scmp.ne.s32.totalorder %s89, %s90
    %p102 = scmp.eq.s32.totalorder %s17, 1
    %p103 = por %p101, %p102
    %p105 = scmp.ne.s32.totalorder %s90, %s104
    %p106 = scmp.eq.s32.totalorder %s17, 0
    %p107 = por %p105, %p106
    %s109 = sadd.s32 %s108, 1
    %p112 = scmp.eq.s32.totalorder %s11, 1
    %p113 = scmp.ne.s32.totalorder %s108, %s110
    %p114 = scmp.eq.s32.totalorder %s11, 0
    %p115 = por %p113, %p114
    %p116 = scmp.ne.s32.totalorder %s108, %s110
    %p117 = scmp.eq.s32.totalorder %s16, 1
    %p118 = por %p116, %p117
    %p119 = scmp.ne.s32.totalorder %s110, %s111
    %p120 = scmp.eq.s32.totalorder %s16, 0
    %p121 = por %p119, %p120
    %p122 = scmp.ne.s32.totalorder %s110, %s111
    %p123 = scmp.eq.s32.totalorder %s17, 1
    %p124 = por %p122, %p123
    %p126 = scmp.ne.s32.totalorder %s111, %s125
    %p127 = scmp.eq.s32.totalorder %s17, 0
    %p128 = por %p126, %p127
    %s129 = ssub.s32 %s11, %s18
    %p130 = scmp.eq.s32.totalorder %s129, 0
    %s132 = sadd.s32 %s131, 1
    %s133 = scalar_select %p130, %s131, %s132
    %p136 = pneg %p130
    %p137 = scmp.eq.s32.totalorder %s11, 1
    %p138 = por %p136, %p137
    %p139 = scmp.ne.s32.totalorder %s131, %s134
    %p140 = scmp.eq.s32.totalorder %s11, 0
    %p141 = por %p139, %p140
    %p142 = scmp.ne.s32.totalorder %s131, %s134
    %p143 = scmp.eq.s32.totalorder %s16, 1
    %p144 = por %p142, %p143
    %p145 = scmp.ne.s32.totalorder %s134, %s135
    %p146 = scmp.eq.s32.totalorder %s16, 0
    %p147 = por %p145, %p146
    %p148 = scmp.ne.s32.totalorder %s134, %s135
    %p149 = scmp.eq.s32.totalorder %s17, 1
    %p150 = por %p148, %p149
    %p152 = scmp.ne.s32.totalorder %s135, %s151
    %p153 = scmp.eq.s32.totalorder %s17, 0
    %p154 = por %p152, %p153
    %p155 = scmp.le.s32.totalorder 1, %s11
    %p156 = scmp.lt.s32.totalorder %s11, 3
    %p157 = pnand %p155, %p156
    %p158 = pneg %p157
    // Predicated region
    $region9: #{net_forward.1} parent=5 // pred_check
      _
    $region10: #{net_forward.1} parent=5 // pred_check_branch
      %160 = sbr.rel (%p157) target = $region12
    $region11: #{net_forward.1} parent=5 // pred_region
      %s161 = ssub.s32 %s11, 1
      // Predicated region
      $region13: #{net_forward.1} parent=11 // pred_check
        %p162 = pneg %p58
      $region14: #{net_forward.1} parent=11 // pred_check_branch
        %164 = sbr.rel (%p162) target = $region16
      $region15: #{net_forward.1} parent=11 // pred_region
        _
      $region16: #{net_forward.1} parent=11 // pred_fallthru
        _
      // Predicated region
      $region17: #{net_forward.1} parent=11 // pred_check
        %p165 = pneg %p79
      $region18: #{net_forward.1} parent=11 // pred_check_branch
        %167 = sbr.rel (%p165) target = $region20
      $region19: #{net_forward.1} parent=11 // pred_region
        _
      $region20: #{net_forward.1} parent=11 // pred_fallthru
        _
      // Predicated region
      $region21: #{net_forward.1} parent=11 // pred_check
        %p168 = pneg %p100
      $region22: #{net_forward.1} parent=11 // pred_check_branch
        %170 = sbr.rel (%p168) target = $region24
      $region23: #{net_forward.1} parent=11 // pred_region
        _
      $region24: #{net_forward.1} parent=11 // pred_fallthru
        _
      // Predicated region
      $region25: #{net_forward.1} parent=11 // pred_check
        %p171 = pneg %p121
      $region26: #{net_forward.1} parent=11 // pred_check_branch
        %173 = sbr.rel (%p171) target = $region28
      $region27: #{net_forward.1} parent=11 // pred_region
        _
      $region28: #{net_forward.1} parent=11 // pred_fallthru
        _
    $region12: #{net_forward.1} parent=5 // pred_fallthru
      _
    %p174 = scmp.lt.s32.totalorder %s11, 2
    // Predicated region
    $region29: #{net_forward.1} parent=5 // pred_check
      %p175 = pneg %p174
    $region30: #{net_forward.1} parent=5 // pred_check_branch
      %177 = sbr.rel (%p175) target = $region32
    $region31: #{net_forward.1} parent=5 // pred_region
      // Predicated region
      $region33: #{net_forward.1} parent=31 // pred_check
        %p178 = pneg %p31
      $region34: #{net_forward.1} parent=31 // pred_check_branch
        %180 = sbr.rel (%p178) target = $region36
      $region35: #{net_forward.1} parent=31 // pred_region
        %p181 = scmp.lt.s32.totalorder %s11, 1
        %s182 = scalar_select %p181, %s11, 1
        %s183 = smul.addr %s182, 4
        %s184 = smul.addr %s183, 4
        %s185 = scalar_lea.vmem %s0, %s184
      $region36: #{net_forward.1} parent=31 // pred_fallthru
        _
    $region32: #{net_forward.1} parent=5 // pred_fallthru
      _
    %p186 = scmp.le.s32.totalorder 1, %s11
    %p187 = scmp.lt.s32.totalorder %s11, 3
    %p188 = pnand %p186, %p187
    %p189 = pneg %p188
    // Predicated region
    $region37: #{net_forward.1} parent=5 // pred_check
      _
    $region38: #{net_forward.1} parent=5 // pred_check_branch
      %191 = sbr.rel (%p188) target = $region40
    $region39: #{net_forward.1} parent=5 // pred_region
      %s192 = ssub.s32 %s11, 1
      %p193 = scmp.lt.s32.totalorder %s16, 1
      %s194 = scalar_select %p193, %s16, 1
      %s195 = smul.addr %s194, 4
      %s196 = smul.addr %s195, 4
      %s197 = scalar_lea.vmem %s0, %s196
      %p198 = pneg %p37
      %p199 = pneg %p34
      %p200 = pneg %p58
      %p201 = pneg %p55
      %p202 = pneg %p79
      %p203 = pneg %p76
      %p204 = pneg %p100
      %p205 = pneg %p97
      %p206 = pneg %p121
      %p207 = pneg %p118
      %p208 = pneg %p147
      %p209 = pneg %p144
      %p210 = scmp.lt.s32.totalorder %s16, 1
      %s211 = scalar_select %p210, %s16, 1
      %s212 = smul.addr %s211, 8
      %s213 = scalar_lea.vmem %s5, %s212
      %p214 = scmp.lt.s32.totalorder %s16, 1
      %s215 = scalar_select %p214, %s16, 1
      %s216 = smul.addr %s215, 4
      %s217 = smul.addr %s216, 4
      %s218 = scalar_lea.vmem %s0, %s217
      %p219 = scmp.lt.s32.totalorder %s16, 1
      %s220 = scalar_select %p219, %s16, 1
      %s221 = smul.addr %s220, 8
      %s222 = scalar_lea.vmem %s5, %s221
      %224 = vst [vmem:[#allocation2] sm:$0xf] 0
      %vm225 = vcmask 1044152
      %226 = vst.msk [vmem:[#allocation2 + $0xc] sm:$0xf] %vm225, 0
      %v227 = vld [vmem:[%s3] sm:$0x7]
      %v228 = vld [vmem:[%s218] sm:$0xff]
      %v229 = vld [vmem:[%s218 + $0x8] sm:$0xff]
      %v230 = vld [vmem:[%s1] sm:$0xf]
      %s231 = scalar_lea.vmem %s1, 4
      %v232 = vld [vmem:[%s231] sm:$0xf]
      %v235 = vunpack.c.l.b16 %v228
      %v236 = vunpack.c.h.b16 %v228
      %v237 = vunpack.c.l.b16 %v229
      %v238 = vunpack.c.h.b16 %v229
      %v239 = vpack.c.b16 %v235, %v235
      %v240 = vpack.c.b16 %v236, %v236
      %v241 = vpack.c.b16 %v237, %v237
      %v242 = vpack.c.b16 %v238, %v238
      %243 = vrot.lane.b32.xlu0 %v239, 18
      %v244 = vpop.permute.xlu0 %243
      %245 = vrot.lane.b32.xlu0 %v240, 18
      %v246 = vpop.permute.xlu0 %245
      %247 = vrot.lane.b32.xlu0 %v241, 18
      %v248 = vpop.permute.xlu0 %247
      %249 = vrot.lane.b32.xlu0 %v242, 18
      %v250 = vpop.permute.xlu0 %249
      %vm251 = vcmask 146432
      %v252 = vsel %vm251, %v244, %v246
      %v253 = vsel %vm251, %v246, %v248
      %v254 = vsel %vm251, %v248, %v250
      %vm255 = vcmask 64512
      %v257 = vsel %vm255, %v232, 0
      %vm259 = vcmask 1043456
      %v261 = vsel %vm259, %v252, 0
      %v264 = vsel %vm259, %v253, 0
      %v267 = vsel %vm259, %v254, 0
      %269 = vmatprep.subr.bf16.mxu0 0
      %270 = vmatpush1.bf16.msra.mxu0 0
      %271 = vmatprep.subr.bf16.mxu0 0
      %272 = vmatpush1.bf16.msra.mxu0 0
      %273 = vmatprep.subr.bf16.mxu0 0
      %274 = vmatpush1.bf16.msra.mxu0 0
      %275 = vmatprep.subr.bf16.mxu0 0
      %276 = vmatpush1.bf16.msra.mxu0 0
      %277 = vmatprep.subr.bf16.mxu0 0
      %278 = vmatpush1.bf16.msra.mxu0 0
      %279 = vmatprep.subr.bf16.mxu0 0
      %280 = vmatpush1.bf16.msra.mxu0 0
      %281 = vmatprep.subr.bf16.mxu0 0
      %282 = vmatpush1.bf16.msra.mxu0 0
      %283 = vmatprep.subr.bf16.mxu0 %v264
      %284 = vmatpush1.bf16.msra.mxu0 %v261
      %285 = vmatprep.subr.bf16.mxu0 0
      %286 = vmatpush2.bf16.msra.mxu0 0
      %287 = vmatprep.subr.bf16.mxu0 0
      %288 = vmatpush2.bf16.msra.mxu0 0
      %289 = vmatprep.subr.bf16.mxu0 0
      %290 = vmatpush2.bf16.msra.mxu0 0
      %291 = vmatprep.subr.bf16.mxu0 0
      %292 = vmatpush2.bf16.msra.mxu0 0
      %293 = vmatprep.subr.bf16.mxu0 0
      %294 = vmatpush2.bf16.msra.mxu0 0
      %295 = vmatprep.subr.bf16.mxu0 0
      %296 = vmatpush2.bf16.msra.mxu0 0
      %297 = vmatprep.subr.bf16.mxu0 0
      %298 = vmatpush2.bf16.msra.mxu0 0
      %299 = vmatprep.subr.bf16.mxu0 0
      %300 = vmatpush2.bf16.msra.mxu0 0
      %301 = vmatprep.mubr.bf16.mxu0 0
      %302 = vmatmul.mubr.bf16.gmra.mxu0 %v257
      %v303 = vpop.f32.mrf.mxu0
      %v304 = vadd.f32 0.0, %v303
      %v305 = vpop.f32.mrf.mxu0
      %v306 = vadd.f32 0.0, %v305
      %v307 = vpop.f32.mrf.mxu0
      %v308 = vpop.f32.mrf.mxu0
      %309 = vdwg.mxu0
      %310 = vmatprep.subr.bf16.mxu0 0
      %311 = vmatpush1.bf16.msra.mxu0 0
      %312 = vmatprep.subr.bf16.mxu0 0
      %313 = vmatpush1.bf16.msra.mxu0 0
      %314 = vmatprep.subr.bf16.mxu0 0
      %315 = vmatpush1.bf16.msra.mxu0 0
      %316 = vmatprep.subr.bf16.mxu0 0
      %317 = vmatpush1.bf16.msra.mxu0 0
      %318 = vmatprep.subr.bf16.mxu0 0
      %319 = vmatpush1.bf16.msra.mxu0 0
      %320 = vmatprep.subr.bf16.mxu0 0
      %321 = vmatpush1.bf16.msra.mxu0 0
      %322 = vmatprep.subr.bf16.mxu0 0
      %323 = vmatpush1.bf16.msra.mxu0 0
      %324 = vmatprep.subr.bf16.mxu0 0
      %325 = vmatpush1.bf16.msra.mxu0 %v267
      %326 = vmatprep.subr.bf16.mxu0 0
      %327 = vmatpush2.bf16.msra.mxu0 0
      %328 = vmatprep.subr.bf16.mxu0 0
      %329 = vmatpush2.bf16.msra.mxu0 0
      %330 = vmatprep.subr.bf16.mxu0 0
      %331 = vmatpush2.bf16.msra.mxu0 0
      %332 = vmatprep.subr.bf16.mxu0 0
      %333 = vmatpush2.bf16.msra.mxu0 0
      %334 = vmatprep.subr.bf16.mxu0 0
      %335 = vmatpush2.bf16.msra.mxu0 0
      %336 = vmatprep.subr.bf16.mxu0 0
      %337 = vmatpush2.bf16.msra.mxu0 0
      %338 = vmatprep.subr.bf16.mxu0 0
      %339 = vmatpush2.bf16.msra.mxu0 0
      %340 = vmatprep.subr.bf16.mxu0 0
      %341 = vmatpush2.bf16.msra.mxu0 0
      %342 = vmatprep.mubr.bf16.mxu0 0
      %343 = vmatmul.mubr.bf16.gmra.mxu0 %v257
      %v344 = vpop.f32.mrf.mxu0
      %v345 = vadd.f32 0.0, %v344
      %v346 = vpop.f32.mrf.mxu0
      %v347 = vpop.f32.mrf.mxu0
      %v348 = vpop.f32.mrf.mxu0
      %349 = vdwg.mxu0
      %350 = vrot.lane.b32.xlu0 %v239, 19
      %v351 = vpop.permute.xlu0 %350
      %352 = vrot.lane.b32.xlu0 %v240, 19
      %v353 = vpop.permute.xlu0 %352
      %354 = vrot.lane.b32.xlu0 %v241, 19
      %v355 = vpop.permute.xlu0 %354
      %356 = vrot.lane.b32.xlu0 %v242, 19
      %v357 = vpop.permute.xlu0 %356
      %vm358 = vcmask 154624
      %v359 = vsel %vm358, %v351, %v353
      %v360 = vsel %vm358, %v353, %v355
      %v361 = vsel %vm358, %v355, %v357
      %v363 = vsel %vm255, %v230, 0
      %v366 = vsel %vm259, %v359, 0
      %v369 = vsel %vm259, %v360, 0
      %v372 = vsel %vm259, %v361, 0
      %374 = vmatprep.subr.bf16.mxu0 0
      %375 = vmatpush1.bf16.msra.mxu0 0
      %376 = vmatprep.subr.bf16.mxu0 0
      %377 = vmatpush1.bf16.msra.mxu0 0
      %378 = vmatprep.subr.bf16.mxu0 0
      %379 = vmatpush1.bf16.msra.mxu0 0
      %380 = vmatprep.subr.bf16.mxu0 0
      %381 = vmatpush1.bf16.msra.mxu0 0
      %382 = vmatprep.subr.bf16.mxu0 0
      %383 = vmatpush1.bf16.msra.mxu0 0
      %384 = vmatprep.subr.bf16.mxu0 0
      %385 = vmatpush1.bf16.msra.mxu0 0
      %386 = vmatprep.subr.bf16.mxu0 0
      %387 = vmatpush1.bf16.msra.mxu0 0
      %388 = vmatprep.subr.bf16.mxu0 %v369
      %389 = vmatpush1.bf16.msra.mxu0 %v366
      %390 = vmatprep.subr.bf16.mxu0 0
      %391 = vmatpush2.bf16.msra.mxu0 0
      %392 = vmatprep.subr.bf16.mxu0 0
      %393 = vmatpush2.bf16.msra.mxu0 0
      %394 = vmatprep.subr.bf16.mxu0 0
      %395 = vmatpush2.bf16.msra.mxu0 0
      %396 = vmatprep.subr.bf16.mxu0 0
      %397 = vmatpush2.bf16.msra.mxu0 0
      %398 = vmatprep.subr.bf16.mxu0 0
      %399 = vmatpush2.bf16.msra.mxu0 0
      %400 = vmatprep.subr.bf16.mxu0 0
      %401 = vmatpush2.bf16.msra.mxu0 0
      %402 = vmatprep.subr.bf16.mxu0 0
      %403 = vmatpush2.bf16.msra.mxu0 0
      %404 = vmatprep.subr.bf16.mxu0 0
      %405 = vmatpush2.bf16.msra.mxu0 0
      %406 = vmatprep.mubr.bf16.mxu0 0
      %407 = vmatmul.mubr.bf16.gmra.mxu0 %v363
      %v408 = vpop.f32.mrf.mxu0
      %v409 = vadd.f32 %v304, %v408
      %v410 = vpop.f32.mrf.mxu0
      %v411 = vadd.f32 %v306, %v410
      %v412 = vpop.f32.mrf.mxu0
      %v413 = vpop.f32.mrf.mxu0
      %414 = vdwg.mxu0
      %415 = vmatprep.subr.bf16.mxu0 0
      %416 = vmatpush1.bf16.msra.mxu0 0
      %417 = vmatprep.subr.bf16.mxu0 0
      %418 = vmatpush1.bf16.msra.mxu0 0
      %419 = vmatprep.subr.bf16.mxu0 0
      %420 = vmatpush1.bf16.msra.mxu0 0
      %421 = vmatprep.subr.bf16.mxu0 0
      %422 = vmatpush1.bf16.msra.mxu0 0
      %423 = vmatprep.subr.bf16.mxu0 0
      %424 = vmatpush1.bf16.msra.mxu0 0
      %425 = vmatprep.subr.bf16.mxu0 0
      %426 = vmatpush1.bf16.msra.mxu0 0
      %427 = vmatprep.subr.bf16.mxu0 0
      %428 = vmatpush1.bf16.msra.mxu0 0
      %429 = vmatprep.subr.bf16.mxu0 0
      %430 = vmatpush1.bf16.msra.mxu0 %v372
      %431 = vmatprep.subr.bf16.mxu0 0
      %432 = vmatpush2.bf16.msra.mxu0 0
      %433 = vmatprep.subr.bf16.mxu0 0
      %434 = vmatpush2.bf16.msra.mxu0 0
      %435 = vmatprep.subr.bf16.mxu0 0
      %436 = vmatpush2.bf16.msra.mxu0 0
      %437 = vmatprep.subr.bf16.mxu0 0
      %438 = vmatpush2.bf16.msra.mxu0 0
      %439 = vmatprep.subr.bf16.mxu0 0
      %440 = vmatpush2.bf16.msra.mxu0 0
      %441 = vmatprep.subr.bf16.mxu0 0
      %442 = vmatpush2.bf16.msra.mxu0 0
      %443 = vmatprep.subr.bf16.mxu0 0
      %444 = vmatpush2.bf16.msra.mxu0 0
      %445 = vmatprep.subr.bf16.mxu0 0
      %446 = vmatpush2.bf16.msra.mxu0 0
      %447 = vmatprep.mubr.bf16.mxu0 0
      %448 = vmatmul.mubr.bf16.gmra.mxu0 %v363
      %v449 = vpop.f32.mrf.mxu0
      %v450 = vadd.f32 %v345, %v449
      %v451 = vpop.f32.mrf.mxu0
      %v452 = vpop.f32.mrf.mxu0
      %v453 = vpop.f32.mrf.mxu0
      %454 = vdwg.mxu0
      %s455 = scalar_lea.vmem %s1, 8
      %v456 = vld [vmem:[%s455] sm:$0xf]
      %457 = vrot.lane.b32.xlu0 %v239, 17
      %v458 = vpop.permute.xlu0 %457
      %459 = vrot.lane.b32.xlu0 %v240, 17
      %v460 = vpop.permute.xlu0 %459
      %461 = vrot.lane.b32.xlu0 %v241, 17
      %v462 = vpop.permute.xlu0 %461
      %463 = vrot.lane.b32.xlu0 %v242, 17
      %v464 = vpop.permute.xlu0 %463
      %vm465 = vcmask 138240
      %v466 = vsel %vm465, %v458, %v460
      %v467 = vsel %vm465, %v460, %v462
      %v468 = vsel %vm465, %v462, %v464
      %v470 = vsel %vm255, %v456, 0
      %v473 = vsel %vm259, %v466, 0
      %v476 = vsel %vm259, %v467, 0
      %v479 = vsel %vm259, %v468, 0
      %481 = vmatprep.subr.bf16.mxu0 0
      %482 = vmatpush1.bf16.msra.mxu0 0
      %483 = vmatprep.subr.bf16.mxu0 0
      %484 = vmatpush1.bf16.msra.mxu0 0
      %485 = vmatprep.subr.bf16.mxu0 0
      %486 = vmatpush1.bf16.msra.mxu0 0
      %487 = vmatprep.subr.bf16.mxu0 0
      %488 = vmatpush1.bf16.msra.mxu0 0
      %489 = vmatprep.subr.bf16.mxu0 0
      %490 = vmatpush1.bf16.msra.mxu0 0
      %491 = vmatprep.subr.bf16.mxu0 0
      %492 = vmatpush1.bf16.msra.mxu0 0
      %493 = vmatprep.subr.bf16.mxu0 0
      %494 = vmatpush1.bf16.msra.mxu0 0
      %495 = vmatprep.subr.bf16.mxu0 %v476
      %496 = vmatpush1.bf16.msra.mxu0 %v473
      %497 = vmatprep.subr.bf16.mxu0 0
      %498 = vmatpush2.bf16.msra.mxu0 0
      %499 = vmatprep.subr.bf16.mxu0 0
      %500 = vmatpush2.bf16.msra.mxu0 0
      %501 = vmatprep.subr.bf16.mxu0 0
      %502 = vmatpush2.bf16.msra.mxu0 0
      %503 = vmatprep.subr.bf16.mxu0 0
      %504 = vmatpush2.bf16.msra.mxu0 0
      %505 = vmatprep.subr.bf16.mxu0 0
      %506 = vmatpush2.bf16.msra.mxu0 0
      %507 = vmatprep.subr.bf16.mxu0 0
      %508 = vmatpush2.bf16.msra.mxu0 0
      %509 = vmatprep.subr.bf16.mxu0 0
      %510 = vmatpush2.bf16.msra.mxu0 0
      %511 = vmatprep.subr.bf16.mxu0 0
      %512 = vmatpush2.bf16.msra.mxu0 0
      %513 = vmatprep.mubr.bf16.mxu0 0
      %514 = vmatmul.mubr.bf16.gmra.mxu0 %v470
      %v515 = vpop.f32.mrf.mxu0
      %v516 = vadd.f32 0.0, %v515
      %v517 = vpop.f32.mrf.mxu0
      %v518 = vadd.f32 0.0, %v517
      %v519 = vpop.f32.mrf.mxu0
      %v520 = vpop.f32.mrf.mxu0
      %521 = vdwg.mxu0
      %522 = vmatprep.subr.bf16.mxu0 0
      %523 = vmatpush1.bf16.msra.mxu0 0
      %524 = vmatprep.subr.bf16.mxu0 0
      %525 = vmatpush1.bf16.msra.mxu0 0
      %526 = vmatprep.subr.bf16.mxu0 0
      %527 = vmatpush1.bf16.msra.mxu0 0
      %528 = vmatprep.subr.bf16.mxu0 0
      %529 = vmatpush1.bf16.msra.mxu0 0
      %530 = vmatprep.subr.bf16.mxu0 0
      %531 = vmatpush1.bf16.msra.mxu0 0
      %532 = vmatprep.subr.bf16.mxu0 0
      %533 = vmatpush1.bf16.msra.mxu0 0
      %534 = vmatprep.subr.bf16.mxu0 0
      %535 = vmatpush1.bf16.msra.mxu0 0
      %536 = vmatprep.subr.bf16.mxu0 0
      %537 = vmatpush1.bf16.msra.mxu0 %v479
      %538 = vmatprep.subr.bf16.mxu0 0
      %539 = vmatpush2.bf16.msra.mxu0 0
      %540 = vmatprep.subr.bf16.mxu0 0
      %541 = vmatpush2.bf16.msra.mxu0 0
      %542 = vmatprep.subr.bf16.mxu0 0
      %543 = vmatpush2.bf16.msra.mxu0 0
      %544 = vmatprep.subr.bf16.mxu0 0
      %545 = vmatpush2.bf16.msra.mxu0 0
      %546 = vmatprep.subr.bf16.mxu0 0
      %547 = vmatpush2.bf16.msra.mxu0 0
      %548 = vmatprep.subr.bf16.mxu0 0
      %549 = vmatpush2.bf16.msra.mxu0 0
      %550 = vmatprep.subr.bf16.mxu0 0
      %551 = vmatpush2.bf16.msra.mxu0 0
      %552 = vmatprep.subr.bf16.mxu0 0
      %553 = vmatpush2.bf16.msra.mxu0 0
      %554 = vmatprep.mubr.bf16.mxu0 0
      %555 = vmatmul.mubr.bf16.gmra.mxu0 %v470
      %v556 = vpop.f32.mrf.mxu0
      %v557 = vadd.f32 0.0, %v556
      %v558 = vpop.f32.mrf.mxu0
      %v559 = vpop.f32.mrf.mxu0
      %v560 = vpop.f32.mrf.mxu0
      %561 = vdwg.mxu0
      %v562 = vadd.f32 %v409, %v516
      %v563 = vadd.f32 %v411, %v518
      %v564 = vadd.f32 %v450, %v557
      %s565 = scalar_lea.vmem %s1, 12
      %v566 = vld [vmem:[%s565] sm:$0xf]
      %567 = vrot.lane.b32.xlu0 %v239, 1
      %v568 = vpop.permute.xlu0 %567
      %569 = vrot.lane.b32.xlu0 %v240, 1
      %v570 = vpop.permute.xlu0 %569
      %571 = vrot.lane.b32.xlu0 %v241, 1
      %v572 = vpop.permute.xlu0 %571
      %573 = vrot.lane.b32.xlu0 %v242, 1
      %v574 = vpop.permute.xlu0 %573
      %vm575 = vcmask 7168
      %v576 = vsel %vm575, %v568, %v570
      %v577 = vsel %vm575, %v570, %v572
      %v578 = vsel %vm575, %v572, %v574
      %v580 = vsel %vm255, %v566, 0
      %v583 = vsel %vm259, %v576, 0
      %v586 = vsel %vm259, %v577, 0
      %v589 = vsel %vm259, %v578, 0
      %591 = vmatprep.subr.bf16.mxu0 0
      %592 = vmatpush1.bf16.msra.mxu0 0
      %593 = vmatprep.subr.bf16.mxu0 0
      %594 = vmatpush1.bf16.msra.mxu0 0
      %595 = vmatprep.subr.bf16.mxu0 0
      %596 = vmatpush1.bf16.msra.mxu0 0
      %597 = vmatprep.subr.bf16.mxu0 0
      %598 = vmatpush1.bf16.msra.mxu0 0
      %599 = vmatprep.subr.bf16.mxu0 0
      %600 = vmatpush1.bf16.msra.mxu0 0
      %601 = vmatprep.subr.bf16.mxu0 0
      %602 = vmatpush1.bf16.msra.mxu0 0
      %603 = vmatprep.subr.bf16.mxu0 0
      %604 = vmatpush1.bf16.msra.mxu0 0
      %605 = vmatprep.subr.bf16.mxu0 %v586
      %606 = vmatpush1.bf16.msra.mxu0 %v583
      %607 = vmatprep.subr.bf16.mxu0 0
      %608 = vmatpush2.bf16.msra.mxu0 0
      %609 = vmatprep.subr.bf16.mxu0 0
      %610 = vmatpush2.bf16.msra.mxu0 0
      %611 = vmatprep.subr.bf16.mxu0 0
      %612 = vmatpush2.bf16.msra.mxu0 0
      %613 = vmatprep.subr.bf16.mxu0 0
      %614 = vmatpush2.bf16.msra.mxu0 0
      %615 = vmatprep.subr.bf16.mxu0 0
      %616 = vmatpush2.bf16.msra.mxu0 0
      %617 = vmatprep.subr.bf16.mxu0 0
      %618 = vmatpush2.bf16.msra.mxu0 0
      %619 = vmatprep.subr.bf16.mxu0 0
      %620 = vmatpush2.bf16.msra.mxu0 0
      %621 = vmatprep.subr.bf16.mxu0 0
      %622 = vmatpush2.bf16.msra.mxu0 0
      %623 = vmatprep.mubr.bf16.mxu0 0
      %624 = vmatmul.mubr.bf16.gmra.mxu0 %v580
      %v625 = vpop.f32.mrf.mxu0
      %v626 = vadd.f32 0.0, %v625
      %v627 = vpop.f32.mrf.mxu0
      %v628 = vadd.f32 0.0, %v627
      %v629 = vpop.f32.mrf.mxu0
      %v630 = vpop.f32.mrf.mxu0
      %631 = vdwg.mxu0
      %632 = vmatprep.subr.bf16.mxu0 0
      %633 = vmatpush1.bf16.msra.mxu0 0
      %634 = vmatprep.subr.bf16.mxu0 0
      %635 = vmatpush1.bf16.msra.mxu0 0
      %636 = vmatprep.subr.bf16.mxu0 0
      %637 = vmatpush1.bf16.msra.mxu0 0
      %638 = vmatprep.subr.bf16.mxu0 0
      %639 = vmatpush1.bf16.msra.mxu0 0
      %640 = vmatprep.subr.bf16.mxu0 0
      %641 = vmatpush1.bf16.msra.mxu0 0
      %642 = vmatprep.subr.bf16.mxu0 0
      %643 = vmatpush1.bf16.msra.mxu0 0
      %644 = vmatprep.subr.bf16.mxu0 0
      %645 = vmatpush1.bf16.msra.mxu0 0
      %646 = vmatprep.subr.bf16.mxu0 0
      %647 = vmatpush1.bf16.msra.mxu0 %v589
      %648 = vmatprep.subr.bf16.mxu0 0
      %649 = vmatpush2.bf16.msra.mxu0 0
      %650 = vmatprep.subr.bf16.mxu0 0
      %651 = vmatpush2.bf16.msra.mxu0 0
      %652 = vmatprep.subr.bf16.mxu0 0
      %653 = vmatpush2.bf16.msra.mxu0 0
      %654 = vmatprep.subr.bf16.mxu0 0
      %655 = vmatpush2.bf16.msra.mxu0 0
      %656 = vmatprep.subr.bf16.mxu0 0
      %657 = vmatpush2.bf16.msra.mxu0 0
      %658 = vmatprep.subr.bf16.mxu0 0
      %659 = vmatpush2.bf16.msra.mxu0 0
      %660 = vmatprep.subr.bf16.mxu0 0
      %661 = vmatpush2.bf16.msra.mxu0 0
      %662 = vmatprep.subr.bf16.mxu0 0
      %663 = vmatpush2.bf16.msra.mxu0 0
      %664 = vmatprep.mubr.bf16.mxu0 0
      %665 = vmatmul.mubr.bf16.gmra.mxu0 %v580
      %v666 = vpop.f32.mrf.mxu0
      %v667 = vadd.f32 0.0, %v666
      %v668 = vpop.f32.mrf.mxu0
      %v669 = vpop.f32.mrf.mxu0
      %v670 = vpop.f32.mrf.mxu0
      %671 = vdwg.mxu0
      %v672 = vadd.f32 %v562, %v626
      %v673 = vadd.f32 %v563, %v628
      %v674 = vadd.f32 %v564, %v667
      %s675 = scalar_lea.vmem %s1, 16
      %v676 = vld [vmem:[%s675] sm:$0xf]
      %v678 = vsel %vm255, %v676, 0
      %v681 = vsel %vm259, %v240, 0
      %v684 = vsel %vm259, %v241, 0
      %v687 = vsel %vm259, %v242, 0
      %689 = vmatprep.subr.bf16.mxu0 0
      %690 = vmatpush1.bf16.msra.mxu0 0
      %691 = vmatprep.subr.bf16.mxu0 0
      %692 = vmatpush1.bf16.msra.mxu0 0
      %693 = vmatprep.subr.bf16.mxu0 0
      %694 = vmatpush1.bf16.msra.mxu0 0
      %695 = vmatprep.subr.bf16.mxu0 0
      %696 = vmatpush1.bf16.msra.mxu0 0
      %697 = vmatprep.subr.bf16.mxu0 0
      %698 = vmatpush1.bf16.msra.mxu0 0
      %699 = vmatprep.subr.bf16.mxu0 0
      %700 = vmatpush1.bf16.msra.mxu0 0
      %701 = vmatprep.subr.bf16.mxu0 0
      %702 = vmatpush1.bf16.msra.mxu0 0
      %703 = vmatprep.subr.bf16.mxu0 %v684
      %704 = vmatpush1.bf16.msra.mxu0 %v681
      %705 = vmatprep.subr.bf16.mxu0 0
      %706 = vmatpush2.bf16.msra.mxu0 0
      %707 = vmatprep.subr.bf16.mxu0 0
      %708 = vmatpush2.bf16.msra.mxu0 0
      %709 = vmatprep.subr.bf16.mxu0 0
      %710 = vmatpush2.bf16.msra.mxu0 0
      %711 = vmatprep.subr.bf16.mxu0 0
      %712 = vmatpush2.bf16.msra.mxu0 0
      %713 = vmatprep.subr.bf16.mxu0 0
      %714 = vmatpush2.bf16.msra.mxu0 0
      %715 = vmatprep.subr.bf16.mxu0 0
      %716 = vmatpush2.bf16.msra.mxu0 0
      %717 = vmatprep.subr.bf16.mxu0 0
      %718 = vmatpush2.bf16.msra.mxu0 0
      %719 = vmatprep.subr.bf16.mxu0 0
      %720 = vmatpush2.bf16.msra.mxu0 0
      %721 = vmatprep.mubr.bf16.mxu0 0
      %722 = vmatmul.mubr.bf16.gmra.mxu0 %v678
      %v723 = vpop.f32.mrf.mxu0
      %v724 = vadd.f32 0.0, %v723
      %v725 = vpop.f32.mrf.mxu0
      %v726 = vadd.f32 0.0, %v725
      %v727 = vpop.f32.mrf.mxu0
      %v728 = vpop.f32.mrf.mxu0
      %729 = vdwg.mxu0
      %730 = vmatprep.subr.bf16.mxu0 0
      %731 = vmatpush1.bf16.msra.mxu0 0
      %732 = vmatprep.subr.bf16.mxu0 0
      %733 = vmatpush1.bf16.msra.mxu0 0
      %734 = vmatprep.subr.bf16.mxu0 0
      %735 = vmatpush1.bf16.msra.mxu0 0
      %736 = vmatprep.subr.bf16.mxu0 0
      %737 = vmatpush1.bf16.msra.mxu0 0
      %738 = vmatprep.subr.bf16.mxu0 0
      %739 = vmatpush1.bf16.msra.mxu0 0
      %740 = vmatprep.subr.bf16.mxu0 0
      %741 = vmatpush1.bf16.msra.mxu0 0
      %742 = vmatprep.subr.bf16.mxu0 0
      %743 = vmatpush1.bf16.msra.mxu0 0
      %744 = vmatprep.subr.bf16.mxu0 0
      %745 = vmatpush1.bf16.msra.mxu0 %v687
      %746 = vmatprep.subr.bf16.mxu0 0
      %747 = vmatpush2.bf16.msra.mxu0 0
      %748 = vmatprep.subr.bf16.mxu0 0
      %749 = vmatpush2.bf16.msra.mxu0 0
      %750 = vmatprep.subr.bf16.mxu0 0
      %751 = vmatpush2.bf16.msra.mxu0 0
      %752 = vmatprep.subr.bf16.mxu0 0
      %753 = vmatpush2.bf16.msra.mxu0 0
      %754 = vmatprep.subr.bf16.mxu0 0
      %755 = vmatpush2.bf16.msra.mxu0 0
      %756 = vmatprep.subr.bf16.mxu0 0
      %757 = vmatpush2.bf16.msra.mxu0 0
      %758 = vmatprep.subr.bf16.mxu0 0
      %759 = vmatpush2.bf16.msra.mxu0 0
      %760 = vmatprep.subr.bf16.mxu0 0
      %761 = vmatpush2.bf16.msra.mxu0 0
      %762 = vmatprep.mubr.bf16.mxu0 0
      %763 = vmatmul.mubr.bf16.gmra.mxu0 %v678
      %v764 = vpop.f32.mrf.mxu0
      %v765 = vadd.f32 0.0, %v764
      %v766 = vpop.f32.mrf.mxu0
      %v767 = vpop.f32.mrf.mxu0
      %v768 = vpop.f32.mrf.mxu0
      %769 = vdwg.mxu0
      %v770 = vadd.f32 %v672, %v724
      %v771 = vadd.f32 %v673, %v726
      %v772 = vadd.f32 %v674, %v765
      %s773 = scalar_lea.vmem %s1, 20
      %v774 = vld [vmem:[%s773] sm:$0xf]
      %775 = vrot.lane.b32.xlu0 %v240, 127
      %v776 = vpop.permute.xlu0 %775
      %777 = vrot.lane.b32.xlu0 %v241, 127
      %v778 = vpop.permute.xlu0 %777
      %779 = vrot.lane.b32.xlu0 %v242, 127
      %v780 = vpop.permute.xlu0 %779
      %vm781 = vcmask 1039360
      %v782 = vsel %vm781, %v776, %v778
      %v783 = vsel %vm781, %v778, %v780
      %v785 = vsel %vm255, %v774, 0
      %v788 = vsel %vm259, %v782, 0
      %v791 = vsel %vm259, %v783, 0
      %v794 = vsel %vm259, %v780, 0
      %796 = vmatprep.subr.bf16.mxu0 0
      %797 = vmatpush1.bf16.msra.mxu0 0
      %798 = vmatprep.subr.bf16.mxu0 0
      %799 = vmatpush1.bf16.msra.mxu0 0
      %800 = vmatprep.subr.bf16.mxu0 0
      %801 = vmatpush1.bf16.msra.mxu0 0
      %802 = vmatprep.subr.bf16.mxu0 0
      %803 = vmatpush1.bf16.msra.mxu0 0
      %804 = vmatprep.subr.bf16.mxu0 0
      %805 = vmatpush1.bf16.msra.mxu0 0
      %806 = vmatprep.subr.bf16.mxu0 0
      %807 = vmatpush1.bf16.msra.mxu0 0
      %808 = vmatprep.subr.bf16.mxu0 0
      %809 = vmatpush1.bf16.msra.mxu0 0
      %810 = vmatprep.subr.bf16.mxu0 %v791
      %811 = vmatpush1.bf16.msra.mxu0 %v788
      %812 = vmatprep.subr.bf16.mxu0 0
      %813 = vmatpush2.bf16.msra.mxu0 0
      %814 = vmatprep.subr.bf16.mxu0 0
      %815 = vmatpush2.bf16.msra.mxu0 0
      %816 = vmatprep.subr.bf16.mxu0 0
      %817 = vmatpush2.bf16.msra.mxu0 0
      %818 = vmatprep.subr.bf16.mxu0 0
      %819 = vmatpush2.bf16.msra.mxu0 0
      %820 = vmatprep.subr.bf16.mxu0 0
      %821 = vmatpush2.bf16.msra.mxu0 0
      %822 = vmatprep.subr.bf16.mxu0 0
      %823 = vmatpush2.bf16.msra.mxu0 0
      %824 = vmatprep.subr.bf16.mxu0 0
      %825 = vmatpush2.bf16.msra.mxu0 0
      %826 = vmatprep.subr.bf16.mxu0 0
      %827 = vmatpush2.bf16.msra.mxu0 0
      %828 = vmatprep.mubr.bf16.mxu0 0
      %829 = vmatmul.mubr.bf16.gmra.mxu0 %v785
      %v830 = vpop.f32.mrf.mxu0
      %v831 = vadd.f32 0.0, %v830
      %v832 = vpop.f32.mrf.mxu0
      %v833 = vadd.f32 0.0, %v832
      %v834 = vpop.f32.mrf.mxu0
      %v835 = vpop.f32.mrf.mxu0
      %836 = vdwg.mxu0
      %837 = vmatprep.subr.bf16.mxu0 0
      %838 = vmatpush1.bf16.msra.mxu0 0
      %839 = vmatprep.subr.bf16.mxu0 0
      %840 = vmatpush1.bf16.msra.mxu0 0
      %841 = vmatprep.subr.bf16.mxu0 0
      %842 = vmatpush1.bf16.msra.mxu0 0
      %843 = vmatprep.subr.bf16.mxu0 0
      %844 = vmatpush1.bf16.msra.mxu0 0
      %845 = vmatprep.subr.bf16.mxu0 0
      %846 = vmatpush1.bf16.msra.mxu0 0
      %847 = vmatprep.subr.bf16.mxu0 0
      %848 = vmatpush1.bf16.msra.mxu0 0
      %849 = vmatprep.subr.bf16.mxu0 0
      %850 = vmatpush1.bf16.msra.mxu0 0
      %851 = vmatprep.subr.bf16.mxu0 0
      %852 = vmatpush1.bf16.msra.mxu0 %v794
      %853 = vmatprep.subr.bf16.mxu0 0
      %854 = vmatpush2.bf16.msra.mxu0 0
      %855 = vmatprep.subr.bf16.mxu0 0
      %856 = vmatpush2.bf16.msra.mxu0 0
      %857 = vmatprep.subr.bf16.mxu0 0
      %858 = vmatpush2.bf16.msra.mxu0 0
      %859 = vmatprep.subr.bf16.mxu0 0
      %860 = vmatpush2.bf16.msra.mxu0 0
      %861 = vmatprep.subr.bf16.mxu0 0
      %862 = vmatpush2.bf16.msra.mxu0 0
      %863 = vmatprep.subr.bf16.mxu0 0
      %864 = vmatpush2.bf16.msra.mxu0 0
      %865 = vmatprep.subr.bf16.mxu0 0
      %866 = vmatpush2.bf16.msra.mxu0 0
      %867 = vmatprep.subr.bf16.mxu0 0
      %868 = vmatpush2.bf16.msra.mxu0 0
      %869 = vmatprep.mubr.bf16.mxu0 0
      %870 = vmatmul.mubr.bf16.gmra.mxu0 %v785
      %v871 = vpop.f32.mrf.mxu0
      %v872 = vadd.f32 0.0, %v871
      %v873 = vpop.f32.mrf.mxu0
      %v874 = vpop.f32.mrf.mxu0
      %v875 = vpop.f32.mrf.mxu0
      %876 = vdwg.mxu0
      %v877 = vadd.f32 %v770, %v831
      %v878 = vadd.f32 %v771, %v833
      %v879 = vadd.f32 %v772, %v872
      %s880 = scalar_lea.vmem %s1, 24
      %v881 = vld [vmem:[%s880] sm:$0xf]
      %882 = vrot.lane.b32.xlu0 %v240, 111
      %v883 = vpop.permute.xlu0 %882
      %884 = vrot.lane.b32.xlu0 %v241, 111
      %v885 = vpop.permute.xlu0 %884
      %886 = vrot.lane.b32.xlu0 %v242, 111
      %v887 = vpop.permute.xlu0 %886
      %vm888 = vcmask 908288
      %v889 = vsel %vm888, %v883, %v885
      %v890 = vsel %vm888, %v885, %v887
      %v892 = vsel %vm255, %v881, 0
      %v895 = vsel %vm259, %v889, 0
      %v898 = vsel %vm259, %v890, 0
      %v901 = vsel %vm259, %v887, 0
      %903 = vmatprep.subr.bf16.mxu0 0
      %904 = vmatpush1.bf16.msra.mxu0 0
      %905 = vmatprep.subr.bf16.mxu0 0
      %906 = vmatpush1.bf16.msra.mxu0 0
      %907 = vmatprep.subr.bf16.mxu0 0
      %908 = vmatpush1.bf16.msra.mxu0 0
      %909 = vmatprep.subr.bf16.mxu0 0
      %910 = vmatpush1.bf16.msra.mxu0 0
      %911 = vmatprep.subr.bf16.mxu0 0
      %912 = vmatpush1.bf16.msra.mxu0 0
      %913 = vmatprep.subr.bf16.mxu0 0
      %914 = vmatpush1.bf16.msra.mxu0 0
      %915 = vmatprep.subr.bf16.mxu0 0
      %916 = vmatpush1.bf16.msra.mxu0 0
      %917 = vmatprep.subr.bf16.mxu0 %v898
      %918 = vmatpush1.bf16.msra.mxu0 %v895
      %919 = vmatprep.subr.bf16.mxu0 0
      %920 = vmatpush2.bf16.msra.mxu0 0
      %921 = vmatprep.subr.bf16.mxu0 0
      %922 = vmatpush2.bf16.msra.mxu0 0
      %923 = vmatprep.subr.bf16.mxu0 0
      %924 = vmatpush2.bf16.msra.mxu0 0
      %925 = vmatprep.subr.bf16.mxu0 0
      %926 = vmatpush2.bf16.msra.mxu0 0
      %927 = vmatprep.subr.bf16.mxu0 0
      %928 = vmatpush2.bf16.msra.mxu0 0
      %929 = vmatprep.subr.bf16.mxu0 0
      %930 = vmatpush2.bf16.msra.mxu0 0
      %931 = vmatprep.subr.bf16.mxu0 0
      %932 = vmatpush2.bf16.msra.mxu0 0
      %933 = vmatprep.subr.bf16.mxu0 0
      %934 = vmatpush2.bf16.msra.mxu0 0
      %935 = vmatprep.mubr.bf16.mxu0 0
      %936 = vmatmul.mubr.bf16.gmra.mxu0 %v892
      %v937 = vpop.f32.mrf.mxu0
      %v938 = vadd.f32 0.0, %v937
      %v939 = vpop.f32.mrf.mxu0
      %v940 = vadd.f32 0.0, %v939
      %v941 = vpop.f32.mrf.mxu0
      %v942 = vpop.f32.mrf.mxu0
      %943 = vdwg.mxu0
      %944 = vmatprep.subr.bf16.mxu0 0
      %945 = vmatpush1.bf16.msra.mxu0 0
      %946 = vmatprep.subr.bf16.mxu0 0
      %947 = vmatpush1.bf16.msra.mxu0 0
      %948 = vmatprep.subr.bf16.mxu0 0
      %949 = vmatpush1.bf16.msra.mxu0 0
      %950 = vmatprep.subr.bf16.mxu0 0
      %951 = vmatpush1.bf16.msra.mxu0 0
      %952 = vmatprep.subr.bf16.mxu0 0
      %953 = vmatpush1.bf16.msra.mxu0 0
      %954 = vmatprep.subr.bf16.mxu0 0
      %955 = vmatpush1.bf16.msra.mxu0 0
      %956 = vmatprep.subr.bf16.mxu0 0
      %957 = vmatpush1.bf16.msra.mxu0 0
      %958 = vmatprep.subr.bf16.mxu0 0
      %959 = vmatpush1.bf16.msra.mxu0 %v901
      %960 = vmatprep.subr.bf16.mxu0 0
      %961 = vmatpush2.bf16.msra.mxu0 0
      %962 = vmatprep.subr.bf16.mxu0 0
      %963 = vmatpush2.bf16.msra.mxu0 0
      %964 = vmatprep.subr.bf16.mxu0 0
      %965 = vmatpush2.bf16.msra.mxu0 0
      %966 = vmatprep.subr.bf16.mxu0 0
      %967 = vmatpush2.bf16.msra.mxu0 0
      %968 = vmatprep.subr.bf16.mxu0 0
      %969 = vmatpush2.bf16.msra.mxu0 0
      %970 = vmatprep.subr.bf16.mxu0 0
      %971 = vmatpush2.bf16.msra.mxu0 0
      %972 = vmatprep.subr.bf16.mxu0 0
      %973 = vmatpush2.bf16.msra.mxu0 0
      %974 = vmatprep.subr.bf16.mxu0 0
      %975 = vmatpush2.bf16.msra.mxu0 0
      %976 = vmatprep.mubr.bf16.mxu0 0
      %977 = vmatmul.mubr.bf16.gmra.mxu0 %v892
      %v978 = vpop.f32.mrf.mxu0
      %v979 = vadd.f32 0.0, %v978
      %v980 = vpop.f32.mrf.mxu0
      %v981 = vpop.f32.mrf.mxu0
      %v982 = vpop.f32.mrf.mxu0
      %983 = vdwg.mxu0
      %v984 = vadd.f32 %v877, %v938
      %v985 = vadd.f32 %v878, %v940
      %v986 = vadd.f32 %v879, %v979
      %s987 = scalar_lea.vmem %s1, 28
      %v988 = vld [vmem:[%s987] sm:$0xf]
      %989 = vrot.lane.b32.xlu0 %v240, 110
      %v990 = vpop.permute.xlu0 %989
      %991 = vrot.lane.b32.xlu0 %v241, 110
      %v992 = vpop.permute.xlu0 %991
      %993 = vrot.lane.b32.xlu0 %v242, 110
      %v994 = vpop.permute.xlu0 %993
      %vm995 = vcmask 900096
      %v996 = vsel %vm995, %v990, %v992
      %v997 = vsel %vm995, %v992, %v994
      %v999 = vsel %vm255, %v988, 0
      %v1002 = vsel %vm259, %v996, 0
      %v1005 = vsel %vm259, %v997, 0
      %v1008 = vsel %vm259, %v994, 0
      %1010 = vmatprep.subr.bf16.mxu0 0
      %1011 = vmatpush1.bf16.msra.mxu0 0
      %1012 = vmatprep.subr.bf16.mxu0 0
      %1013 = vmatpush1.bf16.msra.mxu0 0
      %1014 = vmatprep.subr.bf16.mxu0 0
      %1015 = vmatpush1.bf16.msra.mxu0 0
      %1016 = vmatprep.subr.bf16.mxu0 0
      %1017 = vmatpush1.bf16.msra.mxu0 0
      %1018 = vmatprep.subr.bf16.mxu0 0
      %1019 = vmatpush1.bf16.msra.mxu0 0
      %1020 = vmatprep.subr.bf16.mxu0 0
      %1021 = vmatpush1.bf16.msra.mxu0 0
      %1022 = vmatprep.subr.bf16.mxu0 0
      %1023 = vmatpush1.bf16.msra.mxu0 0
      %1024 = vmatprep.subr.bf16.mxu0 %v1005
      %1025 = vmatpush1.bf16.msra.mxu0 %v1002
      %1026 = vmatprep.subr.bf16.mxu0 0
      %1027 = vmatpush2.bf16.msra.mxu0 0
      %1028 = vmatprep.subr.bf16.mxu0 0
      %1029 = vmatpush2.bf16.msra.mxu0 0
      %1030 = vmatprep.subr.bf16.mxu0 0
      %1031 = vmatpush2.bf16.msra.mxu0 0
      %1032 = vmatprep.subr.bf16.mxu0 0
      %1033 = vmatpush2.bf16.msra.mxu0 0
      %1034 = vmatprep.subr.bf16.mxu0 0
      %1035 = vmatpush2.bf16.msra.mxu0 0
      %1036 = vmatprep.subr.bf16.mxu0 0
      %1037 = vmatpush2.bf16.msra.mxu0 0
      %1038 = vmatprep.subr.bf16.mxu0 0
      %1039 = vmatpush2.bf16.msra.mxu0 0
      %1040 = vmatprep.subr.bf16.mxu0 0
      %1041 = vmatpush2.bf16.msra.mxu0 0
      %1042 = vmatprep.mubr.bf16.mxu0 0
      %1043 = vmatmul.mubr.bf16.gmra.mxu0 %v999
      %v1044 = vpop.f32.mrf.mxu0
      %v1045 = vadd.f32 0.0, %v1044
      %v1046 = vpop.f32.mrf.mxu0
      %v1047 = vadd.f32 0.0, %v1046
      %v1048 = vpop.f32.mrf.mxu0
      %v1049 = vpop.f32.mrf.mxu0
      %1050 = vdwg.mxu0
      %1051 = vmatprep.subr.bf16.mxu0 0
      %1052 = vmatpush1.bf16.msra.mxu0 0
      %1053 = vmatprep.subr.bf16.mxu0 0
      %1054 = vmatpush1.bf16.msra.mxu0 0
      %1055 = vmatprep.subr.bf16.mxu0 0
      %1056 = vmatpush1.bf16.msra.mxu0 0
      %1057 = vmatprep.subr.bf16.mxu0 0
      %1058 = vmatpush1.bf16.msra.mxu0 0
      %1059 = vmatprep.subr.bf16.mxu0 0
      %1060 = vmatpush1.bf16.msra.mxu0 0
      %1061 = vmatprep.subr.bf16.mxu0 0
      %1062 = vmatpush1.bf16.msra.mxu0 0
      %1063 = vmatprep.subr.bf16.mxu0 0
      %1064 = vmatpush1.bf16.msra.mxu0 0
      %1065 = vmatprep.subr.bf16.mxu0 0
      %1066 = vmatpush1.bf16.msra.mxu0 %v1008
      %1067 = vmatprep.subr.bf16.mxu0 0
      %1068 = vmatpush2.bf16.msra.mxu0 0
      %1069 = vmatprep.subr.bf16.mxu0 0
      %1070 = vmatpush2.bf16.msra.mxu0 0
      %1071 = vmatprep.subr.bf16.mxu0 0
      %1072 = vmatpush2.bf16.msra.mxu0 0
      %1073 = vmatprep.subr.bf16.mxu0 0
      %1074 = vmatpush2.bf16.msra.mxu0 0
      %1075 = vmatprep.subr.bf16.mxu0 0
      %1076 = vmatpush2.bf16.msra.mxu0 0
      %1077 = vmatprep.subr.bf16.mxu0 0
      %1078 = vmatpush2.bf16.msra.mxu0 0
      %1079 = vmatprep.subr.bf16.mxu0 0
      %1080 = vmatpush2.bf16.msra.mxu0 0
      %1081 = vmatprep.subr.bf16.mxu0 0
      %1082 = vmatpush2.bf16.msra.mxu0 0
      %1083 = vmatprep.mubr.bf16.mxu0 0
      %1084 = vmatmul.mubr.bf16.gmra.mxu0 %v999
      %v1085 = vpop.f32.mrf.mxu0
      %v1086 = vadd.f32 0.0, %v1085
      %v1087 = vpop.f32.mrf.mxu0
      %v1088 = vpop.f32.mrf.mxu0
      %v1089 = vpop.f32.mrf.mxu0
      %1090 = vdwg.mxu0
      %v1091 = vadd.f32 %v984, %v1045
      %v1092 = vadd.f32 %v985, %v1047
      %v1093 = vadd.f32 %v986, %v1086
      %s1094 = scalar_lea.vmem %s1, 32
      %v1095 = vld [vmem:[%s1094] sm:$0xf]
      %1096 = vrot.lane.b32.xlu0 %v240, 109
      %v1097 = vpop.permute.xlu0 %1096
      %1098 = vrot.lane.b32.xlu0 %v241, 109
      %v1099 = vpop.permute.xlu0 %1098
      %1100 = vrot.lane.b32.xlu0 %v242, 109
      %v1101 = vpop.permute.xlu0 %1100
      %vm1102 = vcmask 891904
      %v1103 = vsel %vm1102, %v1097, %v1099
      %v1104 = vsel %vm1102, %v1099, %v1101
      %v1106 = vsel %vm255, %v1095, 0
      %v1109 = vsel %vm259, %v1103, 0
      %v1112 = vsel %vm259, %v1104, 0
      %v1115 = vsel %vm259, %v1101, 0
      %1117 = vmatprep.subr.bf16.mxu0 0
      %1118 = vmatpush1.bf16.msra.mxu0 0
      %1119 = vmatprep.subr.bf16.mxu0 0
      %1120 = vmatpush1.bf16.msra.mxu0 0
      %1121 = vmatprep.subr.bf16.mxu0 0
      %1122 = vmatpush1.bf16.msra.mxu0 0
      %1123 = vmatprep.subr.bf16.mxu0 0
      %1124 = vmatpush1.bf16.msra.mxu0 0
      %1125 = vmatprep.subr.bf16.mxu0 0
      %1126 = vmatpush1.bf16.msra.mxu0 0
      %1127 = vmatprep.subr.bf16.mxu0 0
      %1128 = vmatpush1.bf16.msra.mxu0 0
      %1129 = vmatprep.subr.bf16.mxu0 0
      %1130 = vmatpush1.bf16.msra.mxu0 0
      %1131 = vmatprep.subr.bf16.mxu0 %v1112
      %1132 = vmatpush1.bf16.msra.mxu0 %v1109
      %1133 = vmatprep.subr.bf16.mxu0 0
      %1134 = vmatpush2.bf16.msra.mxu0 0
      %1135 = vmatprep.subr.bf16.mxu0 0
      %1136 = vmatpush2.bf16.msra.mxu0 0
      %1137 = vmatprep.subr.bf16.mxu0 0
      %1138 = vmatpush2.bf16.msra.mxu0 0
      %1139 = vmatprep.subr.bf16.mxu0 0
      %1140 = vmatpush2.bf16.msra.mxu0 0
      %1141 = vmatprep.subr.bf16.mxu0 0
      %1142 = vmatpush2.bf16.msra.mxu0 0
      %1143 = vmatprep.subr.bf16.mxu0 0
      %1144 = vmatpush2.bf16.msra.mxu0 0
      %1145 = vmatprep.subr.bf16.mxu0 0
      %1146 = vmatpush2.bf16.msra.mxu0 0
      %1147 = vmatprep.subr.bf16.mxu0 0
      %1148 = vmatpush2.bf16.msra.mxu0 0
      %1149 = vmatprep.mubr.bf16.mxu0 0
      %1150 = vmatmul.mubr.bf16.gmra.mxu0 %v1106
      %v1151 = vpop.f32.mrf.mxu0
      %v1152 = vadd.f32 0.0, %v1151
      %v1153 = vpop.f32.mrf.mxu0
      %v1154 = vadd.f32 0.0, %v1153
      %v1155 = vpop.f32.mrf.mxu0
      %v1156 = vpop.f32.mrf.mxu0
      %1157 = vdwg.mxu0
      %1158 = vmatprep.subr.bf16.mxu0 0
      %1159 = vmatpush1.bf16.msra.mxu0 0
      %1160 = vmatprep.subr.bf16.mxu0 0
      %1161 = vmatpush1.bf16.msra.mxu0 0
      %1162 = vmatprep.subr.bf16.mxu0 0
      %1163 = vmatpush1.bf16.msra.mxu0 0
      %1164 = vmatprep.subr.bf16.mxu0 0
      %1165 = vmatpush1.bf16.msra.mxu0 0
      %1166 = vmatprep.subr.bf16.mxu0 0
      %1167 = vmatpush1.bf16.msra.mxu0 0
      %1168 = vmatprep.subr.bf16.mxu0 0
      %1169 = vmatpush1.bf16.msra.mxu0 0
      %1170 = vmatprep.subr.bf16.mxu0 0
      %1171 = vmatpush1.bf16.msra.mxu0 0
      %1172 = vmatprep.subr.bf16.mxu0 0
      %1173 = vmatpush1.bf16.msra.mxu0 %v1115
      %1174 = vmatprep.subr.bf16.mxu0 0
      %1175 = vmatpush2.bf16.msra.mxu0 0
      %1176 = vmatprep.subr.bf16.mxu0 0
      %1177 = vmatpush2.bf16.msra.mxu0 0
      %1178 = vmatprep.subr.bf16.mxu0 0
      %1179 = vmatpush2.bf16.msra.mxu0 0
      %1180 = vmatprep.subr.bf16.mxu0 0
      %1181 = vmatpush2.bf16.msra.mxu0 0
      %1182 = vmatprep.subr.bf16.mxu0 0
      %1183 = vmatpush2.bf16.msra.mxu0 0
      %1184 = vmatprep.subr.bf16.mxu0 0
      %1185 = vmatpush2.bf16.msra.mxu0 0
      %1186 = vmatprep.subr.bf16.mxu0 0
      %1187 = vmatpush2.bf16.msra.mxu0 0
      %1188 = vmatprep.subr.bf16.mxu0 0
      %1189 = vmatpush2.bf16.msra.mxu0 0
      %1190 = vmatprep.mubr.bf16.mxu0 0
      %1191 = vmatmul.mubr.bf16.gmra.mxu0 %v1106
      %v1192 = vpop.f32.mrf.mxu0
      %v1193 = vadd.f32 0.0, %v1192
      %v1194 = vpop.f32.mrf.mxu0
      %v1195 = vpop.f32.mrf.mxu0
      %v1196 = vpop.f32.mrf.mxu0
      %1197 = vdwg.mxu0
      %v1198 = vadd.f32 %v1091, %v1152
      %v1199 = vadd.f32 %v1092, %v1154
      %v1200 = vadd.f32 %v1093, %v1193
      %v1201 = vld [vmem:[%s2] sm:$0xff]
      %1203 = vset.pattern.permute.xlu0 0
      %1204 = vperm.xlu0 %1203, %v1201
      %v1205 = vpop.permute.xlu0 %1204
      %v1207 = vadd.f32 %v1198, %v1205
      %v1208 = vadd.f32 %v1199, %v1205
      %v1209 = vadd.f32 %v1200, %v1205
      %v1210 = vmax.f32 %v1207, 0.0
      %v1211 = vmax.f32 %v1208, 0.0
      %v1212 = vmax.f32 %v1209, 0.0
      %v1214 = vlaneseq
      %v1215 = vshrl.u32 %v1214, 7
      %v1216 = vsub.s32 0, %v1215
      %v1217 = vrot.slane %v227, %v1216
      %v1218 = vlaneseq
      %v1219 = vshrl.u32 %v1218, 7
      %v1220 = vsub.s32 1, %v1219
      %v1221 = vrot.slane %v227, %v1220
      %v1222 = vlaneseq
      %v1223 = vshrl.u32 %v1222, 7
      %v1224 = vsub.s32 2, %v1223
      %v1225 = vrot.slane %v227, %v1224
      %v1229 = vmul.f32 %v1210, %v1217
      %v1230 = vmul.f32 %v1211, %v1221
      %v1231 = vmul.f32 %v1212, %v1225
      %v1232 = vpack.c.bf16 %v1229, %v1229
      %v1233 = vpack.c.bf16 %v1230, %v1230
      %v1234 = vpack.c.bf16 %v1231, %v1231
      %v1238 = vunpack.c.l.b16 %v1232
      %v1239 = vunpack.c.l.b16 %v1233
      %v1240 = vunpack.c.l.b16 %v1234
      %v1241 = vpack.c.b16 %v1239, %v1238
      %v1242 = vpack.c.b16 %v1240, %v1240
      %1245 = vst [vmem:[#allocation2 + $0x4] sm:$0xff] %v1241
      %vm1246 = vcmask 707584
      %1247 = vst.msk [vmem:[#allocation2 + $0xc] sm:$0xf] %vm1246, %v1242
      %v1248 = vld [vmem:[#allocation2] sm:$0xff]
      %v1249 = vld [vmem:[#allocation2 + $0x8] sm:$0xff]
      %s1250 = scalar_lea.vmem %s1, 36
      %v1251 = vld [vmem:[%s1250] sm:$0xf]
      %s1252 = scalar_lea.vmem %s1, 40
      %v1253 = vld [vmem:[%s1252] sm:$0xf]
      %v1256 = vunpack.c.l.b16 %v1248
      %v1257 = vunpack.c.h.b16 %v1248
      %v1258 = vunpack.c.l.b16 %v1249
      %v1259 = vunpack.c.h.b16 %v1249
      %v1260 = vpack.c.b16 %v1256, %v1256
      %v1261 = vpack.c.b16 %v1257, %v1257
      %v1262 = vpack.c.b16 %v1258, %v1258
      %v1263 = vpack.c.b16 %v1259, %v1259
      %1264 = vrot.lane.b32.xlu0 %v1260, 18
      %v1265 = vpop.permute.xlu0 %1264
      %1266 = vrot.lane.b32.xlu0 %v1261, 18
      %v1267 = vpop.permute.xlu0 %1266
      %1268 = vrot.lane.b32.xlu0 %v1262, 18
      %v1269 = vpop.permute.xlu0 %1268
      %1270 = vrot.lane.b32.xlu0 %v1263, 18
      %v1271 = vpop.permute.xlu0 %1270
      %v1272 = vsel %vm251, %v1265, %v1267
      %v1273 = vsel %vm251, %v1267, %v1269
      %v1274 = vsel %vm251, %v1269, %v1271
      %v1276 = vsel %vm255, %v1253, 0
      %v1279 = vsel %vm259, %v1272, 0
      %v1282 = vsel %vm259, %v1273, 0
      %v1285 = vsel %vm259, %v1274, 0
      %1287 = vmatprep.subr.bf16.mxu0 0
      %1288 = vmatpush1.bf16.msra.mxu0 0
      %1289 = vmatprep.subr.bf16.mxu0 0
      %1290 = vmatpush1.bf16.msra.mxu0 0
      %1291 = vmatprep.subr.bf16.mxu0 0
      %1292 = vmatpush1.bf16.msra.mxu0 0
      %1293 = vmatprep.subr.bf16.mxu0 0
      %1294 = vmatpush1.bf16.msra.mxu0 0
      %1295 = vmatprep.subr.bf16.mxu0 0
      %1296 = vmatpush1.bf16.msra.mxu0 0
      %1297 = vmatprep.subr.bf16.mxu0 0
      %1298 = vmatpush1.bf16.msra.mxu0 0
      %1299 = vmatprep.subr.bf16.mxu0 0
      %1300 = vmatpush1.bf16.msra.mxu0 0
      %1301 = vmatprep.subr.bf16.mxu0 %v1282
      %1302 = vmatpush1.bf16.msra.mxu0 %v1279
      %1303 = vmatprep.subr.bf16.mxu0 0
      %1304 = vmatpush2.bf16.msra.mxu0 0
      %1305 = vmatprep.subr.bf16.mxu0 0
      %1306 = vmatpush2.bf16.msra.mxu0 0
      %1307 = vmatprep.subr.bf16.mxu0 0
      %1308 = vmatpush2.bf16.msra.mxu0 0
      %1309 = vmatprep.subr.bf16.mxu0 0
      %1310 = vmatpush2.bf16.msra.mxu0 0
      %1311 = vmatprep.subr.bf16.mxu0 0
      %1312 = vmatpush2.bf16.msra.mxu0 0
      %1313 = vmatprep.subr.bf16.mxu0 0
      %1314 = vmatpush2.bf16.msra.mxu0 0
      %1315 = vmatprep.subr.bf16.mxu0 0
      %1316 = vmatpush2.bf16.msra.mxu0 0
      %1317 = vmatprep.subr.bf16.mxu0 0
      %1318 = vmatpush2.bf16.msra.mxu0 0
      %1319 = vmatprep.mubr.bf16.mxu0 0
      %1320 = vmatmul.mubr.bf16.gmra.mxu0 %v1276
      %v1321 = vpop.f32.mrf.mxu0
      %v1322 = vadd.f32 0.0, %v1321
      %v1323 = vpop.f32.mrf.mxu0
      %v1324 = vadd.f32 0.0, %v1323
      %v1325 = vpop.f32.mrf.mxu0
      %v1326 = vpop.f32.mrf.mxu0
      %1327 = vdwg.mxu0
      %1328 = vmatprep.subr.bf16.mxu0 0
      %1329 = vmatpush1.bf16.msra.mxu0 0
      %1330 = vmatprep.subr.bf16.mxu0 0
      %1331 = vmatpush1.bf16.msra.mxu0 0
      %1332 = vmatprep.subr.bf16.mxu0 0
      %1333 = vmatpush1.bf16.msra.mxu0 0
      %1334 = vmatprep.subr.bf16.mxu0 0
      %1335 = vmatpush1.bf16.msra.mxu0 0
      %1336 = vmatprep.subr.bf16.mxu0 0
      %1337 = vmatpush1.bf16.msra.mxu0 0
      %1338 = vmatprep.subr.bf16.mxu0 0
      %1339 = vmatpush1.bf16.msra.mxu0 0
      %1340 = vmatprep.subr.bf16.mxu0 0
      %1341 = vmatpush1.bf16.msra.mxu0 0
      %1342 = vmatprep.subr.bf16.mxu0 0
      %1343 = vmatpush1.bf16.msra.mxu0 %v1285
      %1344 = vmatprep.subr.bf16.mxu0 0
      %1345 = vmatpush2.bf16.msra.mxu0 0
      %1346 = vmatprep.subr.bf16.mxu0 0
      %1347 = vmatpush2.bf16.msra.mxu0 0
      %1348 = vmatprep.subr.bf16.mxu0 0
      %1349 = vmatpush2.bf16.msra.mxu0 0
      %1350 = vmatprep.subr.bf16.mxu0 0
      %1351 = vmatpush2.bf16.msra.mxu0 0
      %1352 = vmatprep.subr.bf16.mxu0 0
      %1353 = vmatpush2.bf16.msra.mxu0 0
      %1354 = vmatprep.subr.bf16.mxu0 0
      %1355 = vmatpush2.bf16.msra.mxu0 0
      %1356 = vmatprep.subr.bf16.mxu0 0
      %1357 = vmatpush2.bf16.msra.mxu0 0
      %1358 = vmatprep.subr.bf16.mxu0 0
      %1359 = vmatpush2.bf16.msra.mxu0 0
      %1360 = vmatprep.mubr.bf16.mxu0 0
      %1361 = vmatmul.mubr.bf16.gmra.mxu0 %v1276
      %v1362 = vpop.f32.mrf.mxu0
      %v1363 = vadd.f32 0.0, %v1362
      %v1364 = vpop.f32.mrf.mxu0
      %v1365 = vpop.f32.mrf.mxu0
      %v1366 = vpop.f32.mrf.mxu0
      %1367 = vdwg.mxu0
      %1368 = vrot.lane.b32.xlu0 %v1260, 19
      %v1369 = vpop.permute.xlu0 %1368
      %1370 = vrot.lane.b32.xlu0 %v1261, 19
      %v1371 = vpop.permute.xlu0 %1370
      %1372 = vrot.lane.b32.xlu0 %v1262, 19
      %v1373 = vpop.permute.xlu0 %1372
      %1374 = vrot.lane.b32.xlu0 %v1263, 19
      %v1375 = vpop.permute.xlu0 %1374
      %v1376 = vsel %vm358, %v1369, %v1371
      %v1377 = vsel %vm358, %v1371, %v1373
      %v1378 = vsel %vm358, %v1373, %v1375
      %v1380 = vsel %vm255, %v1251, 0
      %v1383 = vsel %vm259, %v1376, 0
      %v1386 = vsel %vm259, %v1377, 0
      %v1389 = vsel %vm259, %v1378, 0
      %1391 = vmatprep.subr.bf16.mxu0 0
      %1392 = vmatpush1.bf16.msra.mxu0 0
      %1393 = vmatprep.subr.bf16.mxu0 0
      %1394 = vmatpush1.bf16.msra.mxu0 0
      %1395 = vmatprep.subr.bf16.mxu0 0
      %1396 = vmatpush1.bf16.msra.mxu0 0
      %1397 = vmatprep.subr.bf16.mxu0 0
      %1398 = vmatpush1.bf16.msra.mxu0 0
      %1399 = vmatprep.subr.bf16.mxu0 0
      %1400 = vmatpush1.bf16.msra.mxu0 0
      %1401 = vmatprep.subr.bf16.mxu0 0
      %1402 = vmatpush1.bf16.msra.mxu0 0
      %1403 = vmatprep.subr.bf16.mxu0 0
      %1404 = vmatpush1.bf16.msra.mxu0 0
      %1405 = vmatprep.subr.bf16.mxu0 %v1386
      %1406 = vmatpush1.bf16.msra.mxu0 %v1383
      %1407 = vmatprep.subr.bf16.mxu0 0
      %1408 = vmatpush2.bf16.msra.mxu0 0
      %1409 = vmatprep.subr.bf16.mxu0 0
      %1410 = vmatpush2.bf16.msra.mxu0 0
      %1411 = vmatprep.subr.bf16.mxu0 0
      %1412 = vmatpush2.bf16.msra.mxu0 0
      %1413 = vmatprep.subr.bf16.mxu0 0
      %1414 = vmatpush2.bf16.msra.mxu0 0
      %1415 = vmatprep.subr.bf16.mxu0 0
      %1416 = vmatpush2.bf16.msra.mxu0 0
      %1417 = vmatprep.subr.bf16.mxu0 0
      %1418 = vmatpush2.bf16.msra.mxu0 0
      %1419 = vmatprep.subr.bf16.mxu0 0
      %1420 = vmatpush2.bf16.msra.mxu0 0
      %1421 = vmatprep.subr.bf16.mxu0 0
      %1422 = vmatpush2.bf16.msra.mxu0 0
      %1423 = vmatprep.mubr.bf16.mxu0 0
      %1424 = vmatmul.mubr.bf16.gmra.mxu0 %v1380
      %v1425 = vpop.f32.mrf.mxu0
      %v1426 = vadd.f32 %v1322, %v1425
      %v1427 = vpop.f32.mrf.mxu0
      %v1428 = vadd.f32 %v1324, %v1427
      %v1429 = vpop.f32.mrf.mxu0
      %v1430 = vpop.f32.mrf.mxu0
      %1431 = vdwg.mxu0
      %1432 = vmatprep.subr.bf16.mxu0 0
      %1433 = vmatpush1.bf16.msra.mxu0 0
      %1434 = vmatprep.subr.bf16.mxu0 0
      %1435 = vmatpush1.bf16.msra.mxu0 0
      %1436 = vmatprep.subr.bf16.mxu0 0
      %1437 = vmatpush1.bf16.msra.mxu0 0
      %1438 = vmatprep.subr.bf16.mxu0 0
      %1439 = vmatpush1.bf16.msra.mxu0 0
      %1440 = vmatprep.subr.bf16.mxu0 0
      %1441 = vmatpush1.bf16.msra.mxu0 0
      %1442 = vmatprep.subr.bf16.mxu0 0
      %1443 = vmatpush1.bf16.msra.mxu0 0
      %1444 = vmatprep.subr.bf16.mxu0 0
      %1445 = vmatpush1.bf16.msra.mxu0 0
      %1446 = vmatprep.subr.bf16.mxu0 0
      %1447 = vmatpush1.bf16.msra.mxu0 %v1389
      %1448 = vmatprep.subr.bf16.mxu0 0
      %1449 = vmatpush2.bf16.msra.mxu0 0
      %1450 = vmatprep.subr.bf16.mxu0 0
      %1451 = vmatpush2.bf16.msra.mxu0 0
      %1452 = vmatprep.subr.bf16.mxu0 0
      %1453 = vmatpush2.bf16.msra.mxu0 0
      %1454 = vmatprep.subr.bf16.mxu0 0
      %1455 = vmatpush2.bf16.msra.mxu0 0
      %1456 = vmatprep.subr.bf16.mxu0 0
      %1457 = vmatpush2.bf16.msra.mxu0 0
      %1458 = vmatprep.subr.bf16.mxu0 0
      %1459 = vmatpush2.bf16.msra.mxu0 0
      %1460 = vmatprep.subr.bf16.mxu0 0
      %1461 = vmatpush2.bf16.msra.mxu0 0
      %1462 = vmatprep.subr.bf16.mxu0 0
      %1463 = vmatpush2.bf16.msra.mxu0 0
      %1464 = vmatprep.mubr.bf16.mxu0 0
      %1465 = vmatmul.mubr.bf16.gmra.mxu0 %v1380
      %v1466 = vpop.f32.mrf.mxu0
      %v1467 = vadd.f32 %v1363, %v1466
      %v1468 = vpop.f32.mrf.mxu0
      %v1469 = vpop.f32.mrf.mxu0
      %v1470 = vpop.f32.mrf.mxu0
      %1471 = vdwg.mxu0
      %s1472 = scalar_lea.vmem %s1, 44
      %v1473 = vld [vmem:[%s1472] sm:$0xf]
      %1474 = vrot.lane.b32.xlu0 %v1260, 17
      %v1475 = vpop.permute.xlu0 %1474
      %1476 = vrot.lane.b32.xlu0 %v1261, 17
      %v1477 = vpop.permute.xlu0 %1476
      %1478 = vrot.lane.b32.xlu0 %v1262, 17
      %v1479 = vpop.permute.xlu0 %1478
      %1480 = vrot.lane.b32.xlu0 %v1263, 17
      %v1481 = vpop.permute.xlu0 %1480
      %v1482 = vsel %vm465, %v1475, %v1477
      %v1483 = vsel %vm465, %v1477, %v1479
      %v1484 = vsel %vm465, %v1479, %v1481
      %v1486 = vsel %vm255, %v1473, 0
      %v1489 = vsel %vm259, %v1482, 0
      %v1492 = vsel %vm259, %v1483, 0
      %v1495 = vsel %vm259, %v1484, 0
      %1497 = vmatprep.subr.bf16.mxu0 0
      %1498 = vmatpush1.bf16.msra.mxu0 0
      %1499 = vmatprep.subr.bf16.mxu0 0
      %1500 = vmatpush1.bf16.msra.mxu0 0
      %1501 = vmatprep.subr.bf16.mxu0 0
      %1502 = vmatpush1.bf16.msra.mxu0 0
      %1503 = vmatprep.subr.bf16.mxu0 0
      %1504 = vmatpush1.bf16.msra.mxu0 0
      %1505 = vmatprep.subr.bf16.mxu0 0
      %1506 = vmatpush1.bf16.msra.mxu0 0
      %1507 = vmatprep.subr.bf16.mxu0 0
      %1508 = vmatpush1.bf16.msra.mxu0 0
      %1509 = vmatprep.subr.bf16.mxu0 0
      %1510 = vmatpush1.bf16.msra.mxu0 0
      %1511 = vmatprep.subr.bf16.mxu0 %v1492
      %1512 = vmatpush1.bf16.msra.mxu0 %v1489
      %1513 = vmatprep.subr.bf16.mxu0 0
      %1514 = vmatpush2.bf16.msra.mxu0 0
      %1515 = vmatprep.subr.bf16.mxu0 0
      %1516 = vmatpush2.bf16.msra.mxu0 0
      %1517 = vmatprep.subr.bf16.mxu0 0
      %1518 = vmatpush2.bf16.msra.mxu0 0
      %1519 = vmatprep.subr.bf16.mxu0 0
      %1520 = vmatpush2.bf16.msra.mxu0 0
      %1521 = vmatprep.subr.bf16.mxu0 0
      %1522 = vmatpush2.bf16.msra.mxu0 0
      %1523 = vmatprep.subr.bf16.mxu0 0
      %1524 = vmatpush2.bf16.msra.mxu0 0
      %1525 = vmatprep.subr.bf16.mxu0 0
      %1526 = vmatpush2.bf16.msra.mxu0 0
      %1527 = vmatprep.subr.bf16.mxu0 0
      %1528 = vmatpush2.bf16.msra.mxu0 0
      %1529 = vmatprep.mubr.bf16.mxu0 0
      %1530 = vmatmul.mubr.bf16.gmra.mxu0 %v1486
      %v1531 = vpop.f32.mrf.mxu0
      %v1532 = vadd.f32 0.0, %v1531
      %v1533 = vpop.f32.mrf.mxu0
      %v1534 = vadd.f32 0.0, %v1533
      %v1535 = vpop.f32.mrf.mxu0
      %v1536 = vpop.f32.mrf.mxu0
      %1537 = vdwg.mxu0
      %1538 = vmatprep.subr.bf16.mxu0 0
      %1539 = vmatpush1.bf16.msra.mxu0 0
      %1540 = vmatprep.subr.bf16.mxu0 0
      %1541 = vmatpush1.bf16.msra.mxu0 0
      %1542 = vmatprep.subr.bf16.mxu0 0
      %1543 = vmatpush1.bf16.msra.mxu0 0
      %1544 = vmatprep.subr.bf16.mxu0 0
      %1545 = vmatpush1.bf16.msra.mxu0 0
      %1546 = vmatprep.subr.bf16.mxu0 0
      %1547 = vmatpush1.bf16.msra.mxu0 0
      %1548 = vmatprep.subr.bf16.mxu0 0
      %1549 = vmatpush1.bf16.msra.mxu0 0
      %1550 = vmatprep.subr.bf16.mxu0 0
      %1551 = vmatpush1.bf16.msra.mxu0 0
      %1552 = vmatprep.subr.bf16.mxu0 0
      %1553 = vmatpush1.bf16.msra.mxu0 %v1495
      %1554 = vmatprep.subr.bf16.mxu0 0
      %1555 = vmatpush2.bf16.msra.mxu0 0
      %1556 = vmatprep.subr.bf16.mxu0 0
      %1557 = vmatpush2.bf16.msra.mxu0 0
      %1558 = vmatprep.subr.bf16.mxu0 0
      %1559 = vmatpush2.bf16.msra.mxu0 0
      %1560 = vmatprep.subr.bf16.mxu0 0
      %1561 = vmatpush2.bf16.msra.mxu0 0
      %1562 = vmatprep.subr.bf16.mxu0 0
      %1563 = vmatpush2.bf16.msra.mxu0 0
      %1564 = vmatprep.subr.bf16.mxu0 0
      %1565 = vmatpush2.bf16.msra.mxu0 0
      %1566 = vmatprep.subr.bf16.mxu0 0
      %1567 = vmatpush2.bf16.msra.mxu0 0
      %1568 = vmatprep.subr.bf16.mxu0 0
      %1569 = vmatpush2.bf16.msra.mxu0 0
      %1570 = vmatprep.mubr.bf16.mxu0 0
      %1571 = vmatmul.mubr.bf16.gmra.mxu0 %v1486
      %v1572 = vpop.f32.mrf.mxu0
      %v1573 = vadd.f32 0.0, %v1572
      %v1574 = vpop.f32.mrf.mxu0
      %v1575 = vpop.f32.mrf.mxu0
      %v1576 = vpop.f32.mrf.mxu0
      %1577 = vdwg.mxu0
      %v1578 = vadd.f32 %v1426, %v1532
      %v1579 = vadd.f32 %v1428, %v1534
      %v1580 = vadd.f32 %v1467, %v1573
      %s1581 = scalar_lea.vmem %s1, 48
      %v1582 = vld [vmem:[%s1581] sm:$0xf]
      %1583 = vrot.lane.b32.xlu0 %v1260, 1
      %v1584 = vpop.permute.xlu0 %1583
      %1585 = vrot.lane.b32.xlu0 %v1261, 1
      %v1586 = vpop.permute.xlu0 %1585
      %1587 = vrot.lane.b32.xlu0 %v1262, 1
      %v1588 = vpop.permute.xlu0 %1587
      %1589 = vrot.lane.b32.xlu0 %v1263, 1
      %v1590 = vpop.permute.xlu0 %1589
      %v1591 = vsel %vm575, %v1584, %v1586
      %v1592 = vsel %vm575, %v1586, %v1588
      %v1593 = vsel %vm575, %v1588, %v1590
      %v1595 = vsel %vm255, %v1582, 0
      %v1598 = vsel %vm259, %v1591, 0
      %v1601 = vsel %vm259, %v1592, 0
      %v1604 = vsel %vm259, %v1593, 0
      %1606 = vmatprep.subr.bf16.mxu0 0
      %1607 = vmatpush1.bf16.msra.mxu0 0
      %1608 = vmatprep.subr.bf16.mxu0 0
      %1609 = vmatpush1.bf16.msra.mxu0 0
      %1610 = vmatprep.subr.bf16.mxu0 0
      %1611 = vmatpush1.bf16.msra.mxu0 0
      %1612 = vmatprep.subr.bf16.mxu0 0
      %1613 = vmatpush1.bf16.msra.mxu0 0
      %1614 = vmatprep.subr.bf16.mxu0 0
      %1615 = vmatpush1.bf16.msra.mxu0 0
      %1616 = vmatprep.subr.bf16.mxu0 0
      %1617 = vmatpush1.bf16.msra.mxu0 0
      %1618 = vmatprep.subr.bf16.mxu0 0
      %1619 = vmatpush1.bf16.msra.mxu0 0
      %1620 = vmatprep.subr.bf16.mxu0 %v1601
      %1621 = vmatpush1.bf16.msra.mxu0 %v1598
      %1622 = vmatprep.subr.bf16.mxu0 0
      %1623 = vmatpush2.bf16.msra.mxu0 0
      %1624 = vmatprep.subr.bf16.mxu0 0
      %1625 = vmatpush2.bf16.msra.mxu0 0
      %1626 = vmatprep.subr.bf16.mxu0 0
      %1627 = vmatpush2.bf16.msra.mxu0 0
      %1628 = vmatprep.subr.bf16.mxu0 0
      %1629 = vmatpush2.bf16.msra.mxu0 0
      %1630 = vmatprep.subr.bf16.mxu0 0
      %1631 = vmatpush2.bf16.msra.mxu0 0
      %1632 = vmatprep.subr.bf16.mxu0 0
      %1633 = vmatpush2.bf16.msra.mxu0 0
      %1634 = vmatprep.subr.bf16.mxu0 0
      %1635 = vmatpush2.bf16.msra.mxu0 0
      %1636 = vmatprep.subr.bf16.mxu0 0
      %1637 = vmatpush2.bf16.msra.mxu0 0
      %1638 = vmatprep.mubr.bf16.mxu0 0
      %1639 = vmatmul.mubr.bf16.gmra.mxu0 %v1595
      %v1640 = vpop.f32.mrf.mxu0
      %v1641 = vadd.f32 0.0, %v1640
      %v1642 = vpop.f32.mrf.mxu0
      %v1643 = vadd.f32 0.0, %v1642
      %v1644 = vpop.f32.mrf.mxu0
      %v1645 = vpop.f32.mrf.mxu0
      %1646 = vdwg.mxu0
      %1647 = vmatprep.subr.bf16.mxu0 0
      %1648 = vmatpush1.bf16.msra.mxu0 0
      %1649 = vmatprep.subr.bf16.mxu0 0
      %1650 = vmatpush1.bf16.msra.mxu0 0
      %1651 = vmatprep.subr.bf16.mxu0 0
      %1652 = vmatpush1.bf16.msra.mxu0 0
      %1653 = vmatprep.subr.bf16.mxu0 0
      %1654 = vmatpush1.bf16.msra.mxu0 0
      %1655 = vmatprep.subr.bf16.mxu0 0
      %1656 = vmatpush1.bf16.msra.mxu0 0
      %1657 = vmatprep.subr.bf16.mxu0 0
      %1658 = vmatpush1.bf16.msra.mxu0 0
      %1659 = vmatprep.subr.bf16.mxu0 0
      %1660 = vmatpush1.bf16.msra.mxu0 0
      %1661 = vmatprep.subr.bf16.mxu0 0
      %1662 = vmatpush1.bf16.msra.mxu0 %v1604
      %1663 = vmatprep.subr.bf16.mxu0 0
      %1664 = vmatpush2.bf16.msra.mxu0 0
      %1665 = vmatprep.subr.bf16.mxu0 0
      %1666 = vmatpush2.bf16.msra.mxu0 0
      %1667 = vmatprep.subr.bf16.mxu0 0
      %1668 = vmatpush2.bf16.msra.mxu0 0
      %1669 = vmatprep.subr.bf16.mxu0 0
      %1670 = vmatpush2.bf16.msra.mxu0 0
      %1671 = vmatprep.subr.bf16.mxu0 0
      %1672 = vmatpush2.bf16.msra.mxu0 0
      %1673 = vmatprep.subr.bf16.mxu0 0
      %1674 = vmatpush2.bf16.msra.mxu0 0
      %1675 = vmatprep.subr.bf16.mxu0 0
      %1676 = vmatpush2.bf16.msra.mxu0 0
      %1677 = vmatprep.subr.bf16.mxu0 0
      %1678 = vmatpush2.bf16.msra.mxu0 0
      %1679 = vmatprep.mubr.bf16.mxu0 0
      %1680 = vmatmul.mubr.bf16.gmra.mxu0 %v1595
      %v1681 = vpop.f32.mrf.mxu0
      %v1682 = vadd.f32 0.0, %v1681
      %v1683 = vpop.f32.mrf.mxu0
      %v1684 = vpop.f32.mrf.mxu0
      %v1685 = vpop.f32.mrf.mxu0
      %1686 = vdwg.mxu0
      %v1687 = vadd.f32 %v1578, %v1641
      %v1688 = vadd.f32 %v1579, %v1643
      %v1689 = vadd.f32 %v1580, %v1682
      %s1690 = scalar_lea.vmem %s1, 52
      %v1691 = vld [vmem:[%s1690] sm:$0xf]
      %v1693 = vsel %vm255, %v1691, 0
      %v1696 = vsel %vm259, %v1261, 0
      %v1699 = vsel %vm259, %v1262, 0
      %v1702 = vsel %vm259, %v1263, 0
      %1704 = vmatprep.subr.bf16.mxu0 0
      %1705 = vmatpush1.bf16.msra.mxu0 0
      %1706 = vmatprep.subr.bf16.mxu0 0
      %1707 = vmatpush1.bf16.msra.mxu0 0
      %1708 = vmatprep.subr.bf16.mxu0 0
      %1709 = vmatpush1.bf16.msra.mxu0 0
      %1710 = vmatprep.subr.bf16.mxu0 0
      %1711 = vmatpush1.bf16.msra.mxu0 0
      %1712 = vmatprep.subr.bf16.mxu0 0
      %1713 = vmatpush1.bf16.msra.mxu0 0
      %1714 = vmatprep.subr.bf16.mxu0 0
      %1715 = vmatpush1.bf16.msra.mxu0 0
      %1716 = vmatprep.subr.bf16.mxu0 0
      %1717 = vmatpush1.bf16.msra.mxu0 0
      %1718 = vmatprep.subr.bf16.mxu0 %v1699
      %1719 = vmatpush1.bf16.msra.mxu0 %v1696
      %1720 = vmatprep.subr.bf16.mxu0 0
      %1721 = vmatpush2.bf16.msra.mxu0 0
      %1722 = vmatprep.subr.bf16.mxu0 0
      %1723 = vmatpush2.bf16.msra.mxu0 0
      %1724 = vmatprep.subr.bf16.mxu0 0
      %1725 = vmatpush2.bf16.msra.mxu0 0
      %1726 = vmatprep.subr.bf16.mxu0 0
      %1727 = vmatpush2.bf16.msra.mxu0 0
      %1728 = vmatprep.subr.bf16.mxu0 0
      %1729 = vmatpush2.bf16.msra.mxu0 0
      %1730 = vmatprep.subr.bf16.mxu0 0
      %1731 = vmatpush2.bf16.msra.mxu0 0
      %1732 = vmatprep.subr.bf16.mxu0 0
      %1733 = vmatpush2.bf16.msra.mxu0 0
      %1734 = vmatprep.subr.bf16.mxu0 0
      %1735 = vmatpush2.bf16.msra.mxu0 0
      %1736 = vmatprep.mubr.bf16.mxu0 0
      %1737 = vmatmul.mubr.bf16.gmra.mxu0 %v1693
      %v1738 = vpop.f32.mrf.mxu0
      %v1739 = vadd.f32 0.0, %v1738
      %v1740 = vpop.f32.mrf.mxu0
      %v1741 = vadd.f32 0.0, %v1740
      %v1742 = vpop.f32.mrf.mxu0
      %v1743 = vpop.f32.mrf.mxu0
      %1744 = vdwg.mxu0
      %1745 = vmatprep.subr.bf16.mxu0 0
      %1746 = vmatpush1.bf16.msra.mxu0 0
      %1747 = vmatprep.subr.bf16.mxu0 0
      %1748 = vmatpush1.bf16.msra.mxu0 0
      %1749 = vmatprep.subr.bf16.mxu0 0
      %1750 = vmatpush1.bf16.msra.mxu0 0
      %1751 = vmatprep.subr.bf16.mxu0 0
      %1752 = vmatpush1.bf16.msra.mxu0 0
      %1753 = vmatprep.subr.bf16.mxu0 0
      %1754 = vmatpush1.bf16.msra.mxu0 0
      %1755 = vmatprep.subr.bf16.mxu0 0
      %1756 = vmatpush1.bf16.msra.mxu0 0
      %1757 = vmatprep.subr.bf16.mxu0 0
      %1758 = vmatpush1.bf16.msra.mxu0 0
      %1759 = vmatprep.subr.bf16.mxu0 0
      %1760 = vmatpush1.bf16.msra.mxu0 %v1702
      %1761 = vmatprep.subr.bf16.mxu0 0
      %1762 = vmatpush2.bf16.msra.mxu0 0
      %1763 = vmatprep.subr.bf16.mxu0 0
      %1764 = vmatpush2.bf16.msra.mxu0 0
      %1765 = vmatprep.subr.bf16.mxu0 0
      %1766 = vmatpush2.bf16.msra.mxu0 0
      %1767 = vmatprep.subr.bf16.mxu0 0
      %1768 = vmatpush2.bf16.msra.mxu0 0
      %1769 = vmatprep.subr.bf16.mxu0 0
      %1770 = vmatpush2.bf16.msra.mxu0 0
      %1771 = vmatprep.subr.bf16.mxu0 0
      %1772 = vmatpush2.bf16.msra.mxu0 0
      %1773 = vmatprep.subr.bf16.mxu0 0
      %1774 = vmatpush2.bf16.msra.mxu0 0
      %1775 = vmatprep.subr.bf16.mxu0 0
      %1776 = vmatpush2.bf16.msra.mxu0 0
      %1777 = vmatprep.mubr.bf16.mxu0 0
      %1778 = vmatmul.mubr.bf16.gmra.mxu0 %v1693
      %v1779 = vpop.f32.mrf.mxu0
      %v1780 = vadd.f32 0.0, %v1779
      %v1781 = vpop.f32.mrf.mxu0
      %v1782 = vpop.f32.mrf.mxu0
      %v1783 = vpop.f32.mrf.mxu0
      %1784 = vdwg.mxu0
      %v1785 = vadd.f32 %v1687, %v1739
      %v1786 = vadd.f32 %v1688, %v1741
      %v1787 = vadd.f32 %v1689, %v1780
      %s1788 = scalar_lea.vmem %s1, 56
      %v1789 = vld [vmem:[%s1788] sm:$0xf]
      %1790 = vrot.lane.b32.xlu0 %v1261, 127
      %v1791 = vpop.permute.xlu0 %1790
      %1792 = vrot.lane.b32.xlu0 %v1262, 127
      %v1793 = vpop.permute.xlu0 %1792
      %1794 = vrot.lane.b32.xlu0 %v1263, 127
      %v1795 = vpop.permute.xlu0 %1794
      %v1796 = vsel %vm781, %v1791, %v1793
      %v1797 = vsel %vm781, %v1793, %v1795
      %v1799 = vsel %vm255, %v1789, 0
      %v1802 = vsel %vm259, %v1796, 0
      %v1805 = vsel %vm259, %v1797, 0
      %v1808 = vsel %vm259, %v1795, 0
      %1810 = vmatprep.subr.bf16.mxu0 0
      %1811 = vmatpush1.bf16.msra.mxu0 0
      %1812 = vmatprep.subr.bf16.mxu0 0
      %1813 = vmatpush1.bf16.msra.mxu0 0
      %1814 = vmatprep.subr.bf16.mxu0 0
      %1815 = vmatpush1.bf16.msra.mxu0 0
      %1816 = vmatprep.subr.bf16.mxu0 0
      %1817 = vmatpush1.bf16.msra.mxu0 0
      %1818 = vmatprep.subr.bf16.mxu0 0
      %1819 = vmatpush1.bf16.msra.mxu0 0
      %1820 = vmatprep.subr.bf16.mxu0 0
      %1821 = vmatpush1.bf16.msra.mxu0 0
      %1822 = vmatprep.subr.bf16.mxu0 0
      %1823 = vmatpush1.bf16.msra.mxu0 0
      %1824 = vmatprep.subr.bf16.mxu0 %v1805
      %1825 = vmatpush1.bf16.msra.mxu0 %v1802
      %1826 = vmatprep.subr.bf16.mxu0 0
      %1827 = vmatpush2.bf16.msra.mxu0 0
      %1828 = vmatprep.subr.bf16.mxu0 0
      %1829 = vmatpush2.bf16.msra.mxu0 0
      %1830 = vmatprep.subr.bf16.mxu0 0
      %1831 = vmatpush2.bf16.msra.mxu0 0
      %1832 = vmatprep.subr.bf16.mxu0 0
      %1833 = vmatpush2.bf16.msra.mxu0 0
      %1834 = vmatprep.subr.bf16.mxu0 0
      %1835 = vmatpush2.bf16.msra.mxu0 0
      %1836 = vmatprep.subr.bf16.mxu0 0
      %1837 = vmatpush2.bf16.msra.mxu0 0
      %1838 = vmatprep.subr.bf16.mxu0 0
      %1839 = vmatpush2.bf16.msra.mxu0 0
      %1840 = vmatprep.subr.bf16.mxu0 0
      %1841 = vmatpush2.bf16.msra.mxu0 0
      %1842 = vmatprep.mubr.bf16.mxu0 0
      %1843 = vmatmul.mubr.bf16.gmra.mxu0 %v1799
      %v1844 = vpop.f32.mrf.mxu0
      %v1845 = vadd.f32 0.0, %v1844
      %v1846 = vpop.f32.mrf.mxu0
      %v1847 = vadd.f32 0.0, %v1846
      %v1848 = vpop.f32.mrf.mxu0
      %v1849 = vpop.f32.mrf.mxu0
      %1850 = vdwg.mxu0
      %1851 = vmatprep.subr.bf16.mxu0 0
      %1852 = vmatpush1.bf16.msra.mxu0 0
      %1853 = vmatprep.subr.bf16.mxu0 0
      %1854 = vmatpush1.bf16.msra.mxu0 0
      %1855 = vmatprep.subr.bf16.mxu0 0
      %1856 = vmatpush1.bf16.msra.mxu0 0
      %1857 = vmatprep.subr.bf16.mxu0 0
      %1858 = vmatpush1.bf16.msra.mxu0 0
      %1859 = vmatprep.subr.bf16.mxu0 0
      %1860 = vmatpush1.bf16.msra.mxu0 0
      %1861 = vmatprep.subr.bf16.mxu0 0
      %1862 = vmatpush1.bf16.msra.mxu0 0
      %1863 = vmatprep.subr.bf16.mxu0 0
      %1864 = vmatpush1.bf16.msra.mxu0 0
      %1865 = vmatprep.subr.bf16.mxu0 0
      %1866 = vmatpush1.bf16.msra.mxu0 %v1808
      %1867 = vmatprep.subr.bf16.mxu0 0
      %1868 = vmatpush2.bf16.msra.mxu0 0
      %1869 = vmatprep.subr.bf16.mxu0 0
      %1870 = vmatpush2.bf16.msra.mxu0 0
      %1871 = vmatprep.subr.bf16.mxu0 0
      %1872 = vmatpush2.bf16.msra.mxu0 0
      %1873 = vmatprep.subr.bf16.mxu0 0
      %1874 = vmatpush2.bf16.msra.mxu0 0
      %1875 = vmatprep.subr.bf16.mxu0 0
      %1876 = vmatpush2.bf16.msra.mxu0 0
      %1877 = vmatprep.subr.bf16.mxu0 0
      %1878 = vmatpush2.bf16.msra.mxu0 0
      %1879 = vmatprep.subr.bf16.mxu0 0
      %1880 = vmatpush2.bf16.msra.mxu0 0
      %1881 = vmatprep.subr.bf16.mxu0 0
      %1882 = vmatpush2.bf16.msra.mxu0 0
      %1883 = vmatprep.mubr.bf16.mxu0 0
      %1884 = vmatmul.mubr.bf16.gmra.mxu0 %v1799
      %v1885 = vpop.f32.mrf.mxu0
      %v1886 = vadd.f32 0.0, %v1885
      %v1887 = vpop.f32.mrf.mxu0
      %v1888 = vpop.f32.mrf.mxu0
      %v1889 = vpop.f32.mrf.mxu0
      %1890 = vdwg.mxu0
      %v1891 = vadd.f32 %v1785, %v1845
      %v1892 = vadd.f32 %v1786, %v1847
      %v1893 = vadd.f32 %v1787, %v1886
      %s1894 = scalar_lea.vmem %s1, 60
      %v1895 = vld [vmem:[%s1894] sm:$0xf]
      %1896 = vrot.lane.b32.xlu0 %v1261, 111
      %v1897 = vpop.permute.xlu0 %1896
      %1898 = vrot.lane.b32.xlu0 %v1262, 111
      %v1899 = vpop.permute.xlu0 %1898
      %1900 = vrot.lane.b32.xlu0 %v1263, 111
      %v1901 = vpop.permute.xlu0 %1900
      %v1902 = vsel %vm888, %v1897, %v1899
      %v1903 = vsel %vm888, %v1899, %v1901
      %v1905 = vsel %vm255, %v1895, 0
      %v1908 = vsel %vm259, %v1902, 0
      %v1911 = vsel %vm259, %v1903, 0
      %v1914 = vsel %vm259, %v1901, 0
      %1916 = vmatprep.subr.bf16.mxu0 0
      %1917 = vmatpush1.bf16.msra.mxu0 0
      %1918 = vmatprep.subr.bf16.mxu0 0
      %1919 = vmatpush1.bf16.msra.mxu0 0
      %1920 = vmatprep.subr.bf16.mxu0 0
      %1921 = vmatpush1.bf16.msra.mxu0 0
      %1922 = vmatprep.subr.bf16.mxu0 0
      %1923 = vmatpush1.bf16.msra.mxu0 0
      %1924 = vmatprep.subr.bf16.mxu0 0
      %1925 = vmatpush1.bf16.msra.mxu0 0
      %1926 = vmatprep.subr.bf16.mxu0 0
      %1927 = vmatpush1.bf16.msra.mxu0 0
      %1928 = vmatprep.subr.bf16.mxu0 0
      %1929 = vmatpush1.bf16.msra.mxu0 0
      %1930 = vmatprep.subr.bf16.mxu0 %v1911
      %1931 = vmatpush1.bf16.msra.mxu0 %v1908
      %1932 = vmatprep.subr.bf16.mxu0 0
      %1933 = vmatpush2.bf16.msra.mxu0 0
      %1934 = vmatprep.subr.bf16.mxu0 0
      %1935 = vmatpush2.bf16.msra.mxu0 0
      %1936 = vmatprep.subr.bf16.mxu0 0
      %1937 = vmatpush2.bf16.msra.mxu0 0
      %1938 = vmatprep.subr.bf16.mxu0 0
      %1939 = vmatpush2.bf16.msra.mxu0 0
      %1940 = vmatprep.subr.bf16.mxu0 0
      %1941 = vmatpush2.bf16.msra.mxu0 0
      %1942 = vmatprep.subr.bf16.mxu0 0
      %1943 = vmatpush2.bf16.msra.mxu0 0
      %1944 = vmatprep.subr.bf16.mxu0 0
      %1945 = vmatpush2.bf16.msra.mxu0 0
      %1946 = vmatprep.subr.bf16.mxu0 0
      %1947 = vmatpush2.bf16.msra.mxu0 0
      %1948 = vmatprep.mubr.bf16.mxu0 0
      %1949 = vmatmul.mubr.bf16.gmra.mxu0 %v1905
      %v1950 = vpop.f32.mrf.mxu0
      %v1951 = vadd.f32 0.0, %v1950
      %v1952 = vpop.f32.mrf.mxu0
      %v1953 = vadd.f32 0.0, %v1952
      %v1954 = vpop.f32.mrf.mxu0
      %v1955 = vpop.f32.mrf.mxu0
      %1956 = vdwg.mxu0
      %1957 = vmatprep.subr.bf16.mxu0 0
      %1958 = vmatpush1.bf16.msra.mxu0 0
      %1959 = vmatprep.subr.bf16.mxu0 0
      %1960 = vmatpush1.bf16.msra.mxu0 0
      %1961 = vmatprep.subr.bf16.mxu0 0
      %1962 = vmatpush1.bf16.msra.mxu0 0
      %1963 = vmatprep.subr.bf16.mxu0 0
      %1964 = vmatpush1.bf16.msra.mxu0 0
      %1965 = vmatprep.subr.bf16.mxu0 0
      %1966 = vmatpush1.bf16.msra.mxu0 0
      %1967 = vmatprep.subr.bf16.mxu0 0
      %1968 = vmatpush1.bf16.msra.mxu0 0
      %1969 = vmatprep.subr.bf16.mxu0 0
      %1970 = vmatpush1.bf16.msra.mxu0 0
      %1971 = vmatprep.subr.bf16.mxu0 0
      %1972 = vmatpush1.bf16.msra.mxu0 %v1914
      %1973 = vmatprep.subr.bf16.mxu0 0
      %1974 = vmatpush2.bf16.msra.mxu0 0
      %1975 = vmatprep.subr.bf16.mxu0 0
      %1976 = vmatpush2.bf16.msra.mxu0 0
      %1977 = vmatprep.subr.bf16.mxu0 0
      %1978 = vmatpush2.bf16.msra.mxu0 0
      %1979 = vmatprep.subr.bf16.mxu0 0
      %1980 = vmatpush2.bf16.msra.mxu0 0
      %1981 = vmatprep.subr.bf16.mxu0 0
      %1982 = vmatpush2.bf16.msra.mxu0 0
      %1983 = vmatprep.subr.bf16.mxu0 0
      %1984 = vmatpush2.bf16.msra.mxu0 0
      %1985 = vmatprep.subr.bf16.mxu0 0
      %1986 = vmatpush2.bf16.msra.mxu0 0
      %1987 = vmatprep.subr.bf16.mxu0 0
      %1988 = vmatpush2.bf16.msra.mxu0 0
      %1989 = vmatprep.mubr.bf16.mxu0 0
      %1990 = vmatmul.mubr.bf16.gmra.mxu0 %v1905
      %v1991 = vpop.f32.mrf.mxu0
      %v1992 = vadd.f32 0.0, %v1991
      %v1993 = vpop.f32.mrf.mxu0
      %v1994 = vpop.f32.mrf.mxu0
      %v1995 = vpop.f32.mrf.mxu0
      %1996 = vdwg.mxu0
      %v1997 = vadd.f32 %v1891, %v1951
      %v1998 = vadd.f32 %v1892, %v1953
      %v1999 = vadd.f32 %v1893, %v1992
      %s2000 = scalar_lea.vmem %s1, 64
      %v2001 = vld [vmem:[%s2000] sm:$0xf]
      %2002 = vrot.lane.b32.xlu0 %v1261, 110
      %v2003 = vpop.permute.xlu0 %2002
      %2004 = vrot.lane.b32.xlu0 %v1262, 110
      %v2005 = vpop.permute.xlu0 %2004
      %2006 = vrot.lane.b32.xlu0 %v1263, 110
      %v2007 = vpop.permute.xlu0 %2006
      %v2008 = vsel %vm995, %v2003, %v2005
      %v2009 = vsel %vm995, %v2005, %v2007
      %v2011 = vsel %vm255, %v2001, 0
      %v2014 = vsel %vm259, %v2008, 0
      %v2017 = vsel %vm259, %v2009, 0
      %v2020 = vsel %vm259, %v2007, 0
      %2022 = vmatprep.subr.bf16.mxu0 0
      %2023 = vmatpush1.bf16.msra.mxu0 0
      %2024 = vmatprep.subr.bf16.mxu0 0
      %2025 = vmatpush1.bf16.msra.mxu0 0
      %2026 = vmatprep.subr.bf16.mxu0 0
      %2027 = vmatpush1.bf16.msra.mxu0 0
      %2028 = vmatprep.subr.bf16.mxu0 0
      %2029 = vmatpush1.bf16.msra.mxu0 0
      %2030 = vmatprep.subr.bf16.mxu0 0
      %2031 = vmatpush1.bf16.msra.mxu0 0
      %2032 = vmatprep.subr.bf16.mxu0 0
      %2033 = vmatpush1.bf16.msra.mxu0 0
      %2034 = vmatprep.subr.bf16.mxu0 0
      %2035 = vmatpush1.bf16.msra.mxu0 0
      %2036 = vmatprep.subr.bf16.mxu0 %v2017
      %2037 = vmatpush1.bf16.msra.mxu0 %v2014
      %2038 = vmatprep.subr.bf16.mxu0 0
      %2039 = vmatpush2.bf16.msra.mxu0 0
      %2040 = vmatprep.subr.bf16.mxu0 0
      %2041 = vmatpush2.bf16.msra.mxu0 0
      %2042 = vmatprep.subr.bf16.mxu0 0
      %2043 = vmatpush2.bf16.msra.mxu0 0
      %2044 = vmatprep.subr.bf16.mxu0 0
      %2045 = vmatpush2.bf16.msra.mxu0 0
      %2046 = vmatprep.subr.bf16.mxu0 0
      %2047 = vmatpush2.bf16.msra.mxu0 0
      %2048 = vmatprep.subr.bf16.mxu0 0
      %2049 = vmatpush2.bf16.msra.mxu0 0
      %2050 = vmatprep.subr.bf16.mxu0 0
      %2051 = vmatpush2.bf16.msra.mxu0 0
      %2052 = vmatprep.subr.bf16.mxu0 0
      %2053 = vmatpush2.bf16.msra.mxu0 0
      %2054 = vmatprep.mubr.bf16.mxu0 0
      %2055 = vmatmul.mubr.bf16.gmra.mxu0 %v2011
      %v2056 = vpop.f32.mrf.mxu0
      %v2057 = vadd.f32 0.0, %v2056
      %v2058 = vpop.f32.mrf.mxu0
      %v2059 = vadd.f32 0.0, %v2058
      %v2060 = vpop.f32.mrf.mxu0
      %v2061 = vpop.f32.mrf.mxu0
      %2062 = vdwg.mxu0
      %2063 = vmatprep.subr.bf16.mxu0 0
      %2064 = vmatpush1.bf16.msra.mxu0 0
      %2065 = vmatprep.subr.bf16.mxu0 0
      %2066 = vmatpush1.bf16.msra.mxu0 0
      %2067 = vmatprep.subr.bf16.mxu0 0
      %2068 = vmatpush1.bf16.msra.mxu0 0
      %2069 = vmatprep.subr.bf16.mxu0 0
      %2070 = vmatpush1.bf16.msra.mxu0 0
      %2071 = vmatprep.subr.bf16.mxu0 0
      %2072 = vmatpush1.bf16.msra.mxu0 0
      %2073 = vmatprep.subr.bf16.mxu0 0
      %2074 = vmatpush1.bf16.msra.mxu0 0
      %2075 = vmatprep.subr.bf16.mxu0 0
      %2076 = vmatpush1.bf16.msra.mxu0 0
      %2077 = vmatprep.subr.bf16.mxu0 0
      %2078 = vmatpush1.bf16.msra.mxu0 %v2020
      %2079 = vmatprep.subr.bf16.mxu0 0
      %2080 = vmatpush2.bf16.msra.mxu0 0
      %2081 = vmatprep.subr.bf16.mxu0 0
      %2082 = vmatpush2.bf16.msra.mxu0 0
      %2083 = vmatprep.subr.bf16.mxu0 0
      %2084 = vmatpush2.bf16.msra.mxu0 0
      %2085 = vmatprep.subr.bf16.mxu0 0
      %2086 = vmatpush2.bf16.msra.mxu0 0
      %2087 = vmatprep.subr.bf16.mxu0 0
      %2088 = vmatpush2.bf16.msra.mxu0 0
      %2089 = vmatprep.subr.bf16.mxu0 0
      %2090 = vmatpush2.bf16.msra.mxu0 0
      %2091 = vmatprep.subr.bf16.mxu0 0
      %2092 = vmatpush2.bf16.msra.mxu0 0
      %2093 = vmatprep.subr.bf16.mxu0 0
      %2094 = vmatpush2.bf16.msra.mxu0 0
      %2095 = vmatprep.mubr.bf16.mxu0 0
      %2096 = vmatmul.mubr.bf16.gmra.mxu0 %v2011
      %v2097 = vpop.f32.mrf.mxu0
      %v2098 = vadd.f32 0.0, %v2097
      %v2099 = vpop.f32.mrf.mxu0
      %v2100 = vpop.f32.mrf.mxu0
      %v2101 = vpop.f32.mrf.mxu0
      %2102 = vdwg.mxu0
      %v2103 = vadd.f32 %v1997, %v2057
      %v2104 = vadd.f32 %v1998, %v2059
      %v2105 = vadd.f32 %v1999, %v2098
      %s2106 = scalar_lea.vmem %s1, 68
      %v2107 = vld [vmem:[%s2106] sm:$0xf]
      %2108 = vrot.lane.b32.xlu0 %v1261, 109
      %v2109 = vpop.permute.xlu0 %2108
      %2110 = vrot.lane.b32.xlu0 %v1262, 109
      %v2111 = vpop.permute.xlu0 %2110
      %2112 = vrot.lane.b32.xlu0 %v1263, 109
      %v2113 = vpop.permute.xlu0 %2112
      %v2114 = vsel %vm1102, %v2109, %v2111
      %v2115 = vsel %vm1102, %v2111, %v2113
      %v2117 = vsel %vm255, %v2107, 0
      %v2120 = vsel %vm259, %v2114, 0
      %v2123 = vsel %vm259, %v2115, 0
      %v2126 = vsel %vm259, %v2113, 0
      %2128 = vmatprep.subr.bf16.mxu0 0
      %2129 = vmatpush1.bf16.msra.mxu0 0
      %2130 = vmatprep.subr.bf16.mxu0 0
      %2131 = vmatpush1.bf16.msra.mxu0 0
      %2132 = vmatprep.subr.bf16.mxu0 0
      %2133 = vmatpush1.bf16.msra.mxu0 0
      %2134 = vmatprep.subr.bf16.mxu0 0
      %2135 = vmatpush1.bf16.msra.mxu0 0
      %2136 = vmatprep.subr.bf16.mxu0 0
      %2137 = vmatpush1.bf16.msra.mxu0 0
      %2138 = vmatprep.subr.bf16.mxu0 0
      %2139 = vmatpush1.bf16.msra.mxu0 0
      %2140 = vmatprep.subr.bf16.mxu0 0
      %2141 = vmatpush1.bf16.msra.mxu0 0
      %2142 = vmatprep.subr.bf16.mxu0 %v2123
      %2143 = vmatpush1.bf16.msra.mxu0 %v2120
      %2144 = vmatprep.subr.bf16.mxu0 0
      %2145 = vmatpush2.bf16.msra.mxu0 0
      %2146 = vmatprep.subr.bf16.mxu0 0
      %2147 = vmatpush2.bf16.msra.mxu0 0
      %2148 = vmatprep.subr.bf16.mxu0 0
      %2149 = vmatpush2.bf16.msra.mxu0 0
      %2150 = vmatprep.subr.bf16.mxu0 0
      %2151 = vmatpush2.bf16.msra.mxu0 0
      %2152 = vmatprep.subr.bf16.mxu0 0
      %2153 = vmatpush2.bf16.msra.mxu0 0
      %2154 = vmatprep.subr.bf16.mxu0 0
      %2155 = vmatpush2.bf16.msra.mxu0 0
      %2156 = vmatprep.subr.bf16.mxu0 0
      %2157 = vmatpush2.bf16.msra.mxu0 0
      %2158 = vmatprep.subr.bf16.mxu0 0
      %2159 = vmatpush2.bf16.msra.mxu0 0
      %2160 = vmatprep.mubr.bf16.mxu0 0
      %2161 = vmatmul.mubr.bf16.gmra.mxu0 %v2117
      %v2162 = vpop.f32.mrf.mxu0
      %v2163 = vadd.f32 0.0, %v2162
      %v2164 = vpop.f32.mrf.mxu0
      %v2165 = vadd.f32 0.0, %v2164
      %v2166 = vpop.f32.mrf.mxu0
      %v2167 = vpop.f32.mrf.mxu0
      %2168 = vdwg.mxu0
      %2169 = vmatprep.subr.bf16.mxu0 0
      %2170 = vmatpush1.bf16.msra.mxu0 0
      %2171 = vmatprep.subr.bf16.mxu0 0
      %2172 = vmatpush1.bf16.msra.mxu0 0
      %2173 = vmatprep.subr.bf16.mxu0 0
      %2174 = vmatpush1.bf16.msra.mxu0 0
      %2175 = vmatprep.subr.bf16.mxu0 0
      %2176 = vmatpush1.bf16.msra.mxu0 0
      %2177 = vmatprep.subr.bf16.mxu0 0
      %2178 = vmatpush1.bf16.msra.mxu0 0
      %2179 = vmatprep.subr.bf16.mxu0 0
      %2180 = vmatpush1.bf16.msra.mxu0 0
      %2181 = vmatprep.subr.bf16.mxu0 0
      %2182 = vmatpush1.bf16.msra.mxu0 0
      %2183 = vmatprep.subr.bf16.mxu0 0
      %2184 = vmatpush1.bf16.msra.mxu0 %v2126
      %2185 = vmatprep.subr.bf16.mxu0 0
      %2186 = vmatpush2.bf16.msra.mxu0 0
      %2187 = vmatprep.subr.bf16.mxu0 0
      %2188 = vmatpush2.bf16.msra.mxu0 0
      %2189 = vmatprep.subr.bf16.mxu0 0
      %2190 = vmatpush2.bf16.msra.mxu0 0
      %2191 = vmatprep.subr.bf16.mxu0 0
      %2192 = vmatpush2.bf16.msra.mxu0 0
      %2193 = vmatprep.subr.bf16.mxu0 0
      %2194 = vmatpush2.bf16.msra.mxu0 0
      %2195 = vmatprep.subr.bf16.mxu0 0
      %2196 = vmatpush2.bf16.msra.mxu0 0
      %2197 = vmatprep.subr.bf16.mxu0 0
      %2198 = vmatpush2.bf16.msra.mxu0 0
      %2199 = vmatprep.subr.bf16.mxu0 0
      %2200 = vmatpush2.bf16.msra.mxu0 0
      %2201 = vmatprep.mubr.bf16.mxu0 0
      %2202 = vmatmul.mubr.bf16.gmra.mxu0 %v2117
      %v2203 = vpop.f32.mrf.mxu0
      %v2204 = vadd.f32 0.0, %v2203
      %v2205 = vpop.f32.mrf.mxu0
      %v2206 = vpop.f32.mrf.mxu0
      %v2207 = vpop.f32.mrf.mxu0
      %2208 = vdwg.mxu0
      %v2209 = vadd.f32 %v2103, %v2163
      %v2210 = vadd.f32 %v2104, %v2165
      %v2211 = vadd.f32 %v2105, %v2204
      %s2212 = scalar_lea.vmem %s2, 8
      %v2213 = vld [vmem:[%s2212] sm:$0xff]
      %2215 = vset.pattern.permute.xlu0 0
      %2216 = vperm.xlu0 %2215, %v2213
      %v2217 = vpop.permute.xlu0 %2216
      %v2219 = vadd.f32 %v2209, %v2217
      %v2220 = vadd.f32 %v2210, %v2217
      %v2221 = vadd.f32 %v2211, %v2217
      %v2222 = vmax.f32 %v2219, 0.0
      %v2223 = vmax.f32 %v2220, 0.0
      %v2224 = vmax.f32 %v2221, 0.0
      %v2225 = vmul.f32 %v2222, %v1217
      %v2226 = vmul.f32 %v2223, %v1221
      %v2227 = vmul.f32 %v2224, %v1225
      %v2228 = vpack.c.bf16 %v2225, %v2225
      %v2229 = vpack.c.bf16 %v2226, %v2226
      %v2230 = vpack.c.bf16 %v2227, %v2227
      %v2234 = vunpack.c.l.b16 %v2228
      %v2235 = vunpack.c.l.b16 %v2229
      %v2236 = vunpack.c.l.b16 %v2230
      %v2237 = vpack.c.b16 %v2235, %v2234
      %v2238 = vpack.c.b16 %v2236, %v2236
      %2241 = vst [vmem:[#allocation2 + $0x4] sm:$0xff] %v2237
      %2242 = vst.msk [vmem:[#allocation2 + $0xc] sm:$0xf] %vm1246, %v2238
      %v2243 = vld [vmem:[#allocation2] sm:$0xff]
      %v2244 = vld [vmem:[#allocation2 + $0x8] sm:$0xff]
      %s2245 = scalar_lea.vmem %s1, 72
      %v2246 = vld [vmem:[%s2245] sm:$0xf]
      %s2247 = scalar_lea.vmem %s1, 76
      %v2248 = vld [vmem:[%s2247] sm:$0xf]
      %v2251 = vunpack.c.l.b16 %v2243
      %v2252 = vunpack.c.h.b16 %v2243
      %v2253 = vunpack.c.l.b16 %v2244
      %v2254 = vunpack.c.h.b16 %v2244
      %v2255 = vpack.c.b16 %v2251, %v2251
      %v2256 = vpack.c.b16 %v2252, %v2252
      %v2257 = vpack.c.b16 %v2253, %v2253
      %v2258 = vpack.c.b16 %v2254, %v2254
      %2259 = vrot.lane.b32.xlu0 %v2255, 18
      %v2260 = vpop.permute.xlu0 %2259
      %2261 = vrot.lane.b32.xlu0 %v2256, 18
      %v2262 = vpop.permute.xlu0 %2261
      %2263 = vrot.lane.b32.xlu0 %v2257, 18
      %v2264 = vpop.permute.xlu0 %2263
      %2265 = vrot.lane.b32.xlu0 %v2258, 18
      %v2266 = vpop.permute.xlu0 %2265
      %v2267 = vsel %vm251, %v2260, %v2262
      %v2268 = vsel %vm251, %v2262, %v2264
      %v2269 = vsel %vm251, %v2264, %v2266
      %v2271 = vsel %vm255, %v2248, 0
      %v2274 = vsel %vm259, %v2267, 0
      %v2277 = vsel %vm259, %v2268, 0
      %v2280 = vsel %vm259, %v2269, 0
      %2282 = vmatprep.subr.bf16.mxu0 0
      %2283 = vmatpush1.bf16.msra.mxu0 0
      %2284 = vmatprep.subr.bf16.mxu0 0
      %2285 = vmatpush1.bf16.msra.mxu0 0
      %2286 = vmatprep.subr.bf16.mxu0 0
      %2287 = vmatpush1.bf16.msra.mxu0 0
      %2288 = vmatprep.subr.bf16.mxu0 0
      %2289 = vmatpush1.bf16.msra.mxu0 0
      %2290 = vmatprep.subr.bf16.mxu0 0
      %2291 = vmatpush1.bf16.msra.mxu0 0
      %2292 = vmatprep.subr.bf16.mxu0 0
      %2293 = vmatpush1.bf16.msra.mxu0 0
      %2294 = vmatprep.subr.bf16.mxu0 0
      %2295 = vmatpush1.bf16.msra.mxu0 0
      %2296 = vmatprep.subr.bf16.mxu0 %v2277
      %2297 = vmatpush1.bf16.msra.mxu0 %v2274
      %2298 = vmatprep.subr.bf16.mxu0 0
      %2299 = vmatpush2.bf16.msra.mxu0 0
      %2300 = vmatprep.subr.bf16.mxu0 0
      %2301 = vmatpush2.bf16.msra.mxu0 0
      %2302 = vmatprep.subr.bf16.mxu0 0
      %2303 = vmatpush2.bf16.msra.mxu0 0
      %2304 = vmatprep.subr.bf16.mxu0 0
      %2305 = vmatpush2.bf16.msra.mxu0 0
      %2306 = vmatprep.subr.bf16.mxu0 0
      %2307 = vmatpush2.bf16.msra.mxu0 0
      %2308 = vmatprep.subr.bf16.mxu0 0
      %2309 = vmatpush2.bf16.msra.mxu0 0
      %2310 = vmatprep.subr.bf16.mxu0 0
      %2311 = vmatpush2.bf16.msra.mxu0 0
      %2312 = vmatprep.subr.bf16.mxu0 0
      %2313 = vmatpush2.bf16.msra.mxu0 0
      %2314 = vmatprep.mubr.bf16.mxu0 0
      %2315 = vmatmul.mubr.bf16.gmra.mxu0 %v2271
      %v2316 = vpop.f32.mrf.mxu0
      %v2317 = vadd.f32 0.0, %v2316
      %v2318 = vpop.f32.mrf.mxu0
      %v2319 = vadd.f32 0.0, %v2318
      %v2320 = vpop.f32.mrf.mxu0
      %v2321 = vpop.f32.mrf.mxu0
      %2322 = vdwg.mxu0
      %2323 = vmatprep.subr.bf16.mxu0 0
      %2324 = vmatpush1.bf16.msra.mxu0 0
      %2325 = vmatprep.subr.bf16.mxu0 0
      %2326 = vmatpush1.bf16.msra.mxu0 0
      %2327 = vmatprep.subr.bf16.mxu0 0
      %2328 = vmatpush1.bf16.msra.mxu0 0
      %2329 = vmatprep.subr.bf16.mxu0 0
      %2330 = vmatpush1.bf16.msra.mxu0 0
      %2331 = vmatprep.subr.bf16.mxu0 0
      %2332 = vmatpush1.bf16.msra.mxu0 0
      %2333 = vmatprep.subr.bf16.mxu0 0
      %2334 = vmatpush1.bf16.msra.mxu0 0
      %2335 = vmatprep.subr.bf16.mxu0 0
      %2336 = vmatpush1.bf16.msra.mxu0 0
      %2337 = vmatprep.subr.bf16.mxu0 0
      %2338 = vmatpush1.bf16.msra.mxu0 %v2280
      %2339 = vmatprep.subr.bf16.mxu0 0
      %2340 = vmatpush2.bf16.msra.mxu0 0
      %2341 = vmatprep.subr.bf16.mxu0 0
      %2342 = vmatpush2.bf16.msra.mxu0 0
      %2343 = vmatprep.subr.bf16.mxu0 0
      %2344 = vmatpush2.bf16.msra.mxu0 0
      %2345 = vmatprep.subr.bf16.mxu0 0
      %2346 = vmatpush2.bf16.msra.mxu0 0
      %2347 = vmatprep.subr.bf16.mxu0 0
      %2348 = vmatpush2.bf16.msra.mxu0 0
      %2349 = vmatprep.subr.bf16.mxu0 0
      %2350 = vmatpush2.bf16.msra.mxu0 0
      %2351 = vmatprep.subr.bf16.mxu0 0
      %2352 = vmatpush2.bf16.msra.mxu0 0
      %2353 = vmatprep.subr.bf16.mxu0 0
      %2354 = vmatpush2.bf16.msra.mxu0 0
      %2355 = vmatprep.mubr.bf16.mxu0 0
      %2356 = vmatmul.mubr.bf16.gmra.mxu0 %v2271
      %v2357 = vpop.f32.mrf.mxu0
      %v2358 = vadd.f32 0.0, %v2357
      %v2359 = vpop.f32.mrf.mxu0
      %v2360 = vpop.f32.mrf.mxu0
      %v2361 = vpop.f32.mrf.mxu0
      %2362 = vdwg.mxu0
      %2363 = vrot.lane.b32.xlu0 %v2255, 19
      %v2364 = vpop.permute.xlu0 %2363
      %2365 = vrot.lane.b32.xlu0 %v2256, 19
      %v2366 = vpop.permute.xlu0 %2365
      %2367 = vrot.lane.b32.xlu0 %v2257, 19
      %v2368 = vpop.permute.xlu0 %2367
      %2369 = vrot.lane.b32.xlu0 %v2258, 19
      %v2370 = vpop.permute.xlu0 %2369
      %v2371 = vsel %vm358, %v2364, %v2366
      %v2372 = vsel %vm358, %v2366, %v2368
      %v2373 = vsel %vm358, %v2368, %v2370
      %v2375 = vsel %vm255, %v2246, 0
      %v2378 = vsel %vm259, %v2371, 0
      %v2381 = vsel %vm259, %v2372, 0
      %v2384 = vsel %vm259, %v2373, 0
      %2386 = vmatprep.subr.bf16.mxu0 0
      %2387 = vmatpush1.bf16.msra.mxu0 0
      %2388 = vmatprep.subr.bf16.mxu0 0
      %2389 = vmatpush1.bf16.msra.mxu0 0
      %2390 = vmatprep.subr.bf16.mxu0 0
      %2391 = vmatpush1.bf16.msra.mxu0 0
      %2392 = vmatprep.subr.bf16.mxu0 0
      %2393 = vmatpush1.bf16.msra.mxu0 0
      %2394 = vmatprep.subr.bf16.mxu0 0
      %2395 = vmatpush1.bf16.msra.mxu0 0
      %2396 = vmatprep.subr.bf16.mxu0 0
      %2397 = vmatpush1.bf16.msra.mxu0 0
      %2398 = vmatprep.subr.bf16.mxu0 0
      %2399 = vmatpush1.bf16.msra.mxu0 0
      %2400 = vmatprep.subr.bf16.mxu0 %v2381
      %2401 = vmatpush1.bf16.msra.mxu0 %v2378
      %2402 = vmatprep.subr.bf16.mxu0 0
      %2403 = vmatpush2.bf16.msra.mxu0 0
      %2404 = vmatprep.subr.bf16.mxu0 0
      %2405 = vmatpush2.bf16.msra.mxu0 0
      %2406 = vmatprep.subr.bf16.mxu0 0
      %2407 = vmatpush2.bf16.msra.mxu0 0
      %2408 = vmatprep.subr.bf16.mxu0 0
      %2409 = vmatpush2.bf16.msra.mxu0 0
      %2410 = vmatprep.subr.bf16.mxu0 0
      %2411 = vmatpush2.bf16.msra.mxu0 0
      %2412 = vmatprep.subr.bf16.mxu0 0
      %2413 = vmatpush2.bf16.msra.mxu0 0
      %2414 = vmatprep.subr.bf16.mxu0 0
      %2415 = vmatpush2.bf16.msra.mxu0 0
      %2416 = vmatprep.subr.bf16.mxu0 0
      %2417 = vmatpush2.bf16.msra.mxu0 0
      %2418 = vmatprep.mubr.bf16.mxu0 0
      %2419 = vmatmul.mubr.bf16.gmra.mxu0 %v2375
      %v2420 = vpop.f32.mrf.mxu0
      %v2421 = vadd.f32 %v2317, %v2420
      %v2422 = vpop.f32.mrf.mxu0
      %v2423 = vadd.f32 %v2319, %v2422
      %v2424 = vpop.f32.mrf.mxu0
      %v2425 = vpop.f32.mrf.mxu0
      %2426 = vdwg.mxu0
      %2427 = vmatprep.subr.bf16.mxu0 0
      %2428 = vmatpush1.bf16.msra.mxu0 0
      %2429 = vmatprep.subr.bf16.mxu0 0
      %2430 = vmatpush1.bf16.msra.mxu0 0
      %2431 = vmatprep.subr.bf16.mxu0 0
      %2432 = vmatpush1.bf16.msra.mxu0 0
      %2433 = vmatprep.subr.bf16.mxu0 0
      %2434 = vmatpush1.bf16.msra.mxu0 0
      %2435 = vmatprep.subr.bf16.mxu0 0
      %2436 = vmatpush1.bf16.msra.mxu0 0
      %2437 = vmatprep.subr.bf16.mxu0 0
      %2438 = vmatpush1.bf16.msra.mxu0 0
      %2439 = vmatprep.subr.bf16.mxu0 0
      %2440 = vmatpush1.bf16.msra.mxu0 0
      %2441 = vmatprep.subr.bf16.mxu0 0
      %2442 = vmatpush1.bf16.msra.mxu0 %v2384
      %2443 = vmatprep.subr.bf16.mxu0 0
      %2444 = vmatpush2.bf16.msra.mxu0 0
      %2445 = vmatprep.subr.bf16.mxu0 0
      %2446 = vmatpush2.bf16.msra.mxu0 0
      %2447 = vmatprep.subr.bf16.mxu0 0
      %2448 = vmatpush2.bf16.msra.mxu0 0
      %2449 = vmatprep.subr.bf16.mxu0 0
      %2450 = vmatpush2.bf16.msra.mxu0 0
      %2451 = vmatprep.subr.bf16.mxu0 0
      %2452 = vmatpush2.bf16.msra.mxu0 0
      %2453 = vmatprep.subr.bf16.mxu0 0
      %2454 = vmatpush2.bf16.msra.mxu0 0
      %2455 = vmatprep.subr.bf16.mxu0 0
      %2456 = vmatpush2.bf16.msra.mxu0 0
      %2457 = vmatprep.subr.bf16.mxu0 0
      %2458 = vmatpush2.bf16.msra.mxu0 0
      %2459 = vmatprep.mubr.bf16.mxu0 0
      %2460 = vmatmul.mubr.bf16.gmra.mxu0 %v2375
      %v2461 = vpop.f32.mrf.mxu0
      %v2462 = vadd.f32 %v2358, %v2461
      %v2463 = vpop.f32.mrf.mxu0
      %v2464 = vpop.f32.mrf.mxu0
      %v2465 = vpop.f32.mrf.mxu0
      %2466 = vdwg.mxu0
      %s2467 = scalar_lea.vmem %s1, 80
      %v2468 = vld [vmem:[%s2467] sm:$0xf]
      %2469 = vrot.lane.b32.xlu0 %v2255, 17
      %v2470 = vpop.permute.xlu0 %2469
      %2471 = vrot.lane.b32.xlu0 %v2256, 17
      %v2472 = vpop.permute.xlu0 %2471
      %2473 = vrot.lane.b32.xlu0 %v2257, 17
      %v2474 = vpop.permute.xlu0 %2473
      %2475 = vrot.lane.b32.xlu0 %v2258, 17
      %v2476 = vpop.permute.xlu0 %2475
      %v2477 = vsel %vm465, %v2470, %v2472
      %v2478 = vsel %vm465, %v2472, %v2474
      %v2479 = vsel %vm465, %v2474, %v2476
      %v2481 = vsel %vm255, %v2468, 0
      %v2484 = vsel %vm259, %v2477, 0
      %v2487 = vsel %vm259, %v2478, 0
      %v2490 = vsel %vm259, %v2479, 0
      %2492 = vmatprep.subr.bf16.mxu0 0
      %2493 = vmatpush1.bf16.msra.mxu0 0
      %2494 = vmatprep.subr.bf16.mxu0 0
      %2495 = vmatpush1.bf16.msra.mxu0 0
      %2496 = vmatprep.subr.bf16.mxu0 0
      %2497 = vmatpush1.bf16.msra.mxu0 0
      %2498 = vmatprep.subr.bf16.mxu0 0
      %2499 = vmatpush1.bf16.msra.mxu0 0
      %2500 = vmatprep.subr.bf16.mxu0 0
      %2501 = vmatpush1.bf16.msra.mxu0 0
      %2502 = vmatprep.subr.bf16.mxu0 0
      %2503 = vmatpush1.bf16.msra.mxu0 0
      %2504 = vmatprep.subr.bf16.mxu0 0
      %2505 = vmatpush1.bf16.msra.mxu0 0
      %2506 = vmatprep.subr.bf16.mxu0 %v2487
      %2507 = vmatpush1.bf16.msra.mxu0 %v2484
      %2508 = vmatprep.subr.bf16.mxu0 0
      %2509 = vmatpush2.bf16.msra.mxu0 0
      %2510 = vmatprep.subr.bf16.mxu0 0
      %2511 = vmatpush2.bf16.msra.mxu0 0
      %2512 = vmatprep.subr.bf16.mxu0 0
      %2513 = vmatpush2.bf16.msra.mxu0 0
      %2514 = vmatprep.subr.bf16.mxu0 0
      %2515 = vmatpush2.bf16.msra.mxu0 0
      %2516 = vmatprep.subr.bf16.mxu0 0
      %2517 = vmatpush2.bf16.msra.mxu0 0
      %2518 = vmatprep.subr.bf16.mxu0 0
      %2519 = vmatpush2.bf16.msra.mxu0 0
      %2520 = vmatprep.subr.bf16.mxu0 0
      %2521 = vmatpush2.bf16.msra.mxu0 0
      %2522 = vmatprep.subr.bf16.mxu0 0
      %2523 = vmatpush2.bf16.msra.mxu0 0
      %2524 = vmatprep.mubr.bf16.mxu0 0
      %2525 = vmatmul.mubr.bf16.gmra.mxu0 %v2481
      %v2526 = vpop.f32.mrf.mxu0
      %v2527 = vadd.f32 0.0, %v2526
      %v2528 = vpop.f32.mrf.mxu0
      %v2529 = vadd.f32 0.0, %v2528
      %v2530 = vpop.f32.mrf.mxu0
      %v2531 = vpop.f32.mrf.mxu0
      %2532 = vdwg.mxu0
      %2533 = vmatprep.subr.bf16.mxu0 0
      %2534 = vmatpush1.bf16.msra.mxu0 0
      %2535 = vmatprep.subr.bf16.mxu0 0
      %2536 = vmatpush1.bf16.msra.mxu0 0
      %2537 = vmatprep.subr.bf16.mxu0 0
      %2538 = vmatpush1.bf16.msra.mxu0 0
      %2539 = vmatprep.subr.bf16.mxu0 0
      %2540 = vmatpush1.bf16.msra.mxu0 0
      %2541 = vmatprep.subr.bf16.mxu0 0
      %2542 = vmatpush1.bf16.msra.mxu0 0
      %2543 = vmatprep.subr.bf16.mxu0 0
      %2544 = vmatpush1.bf16.msra.mxu0 0
      %2545 = vmatprep.subr.bf16.mxu0 0
      %2546 = vmatpush1.bf16.msra.mxu0 0
      %2547 = vmatprep.subr.bf16.mxu0 0
      %2548 = vmatpush1.bf16.msra.mxu0 %v2490
      %2549 = vmatprep.subr.bf16.mxu0 0
      %2550 = vmatpush2.bf16.msra.mxu0 0
      %2551 = vmatprep.subr.bf16.mxu0 0
      %2552 = vmatpush2.bf16.msra.mxu0 0
      %2553 = vmatprep.subr.bf16.mxu0 0
      %2554 = vmatpush2.bf16.msra.mxu0 0
      %2555 = vmatprep.subr.bf16.mxu0 0
      %2556 = vmatpush2.bf16.msra.mxu0 0
      %2557 = vmatprep.subr.bf16.mxu0 0
      %2558 = vmatpush2.bf16.msra.mxu0 0
      %2559 = vmatprep.subr.bf16.mxu0 0
      %2560 = vmatpush2.bf16.msra.mxu0 0
      %2561 = vmatprep.subr.bf16.mxu0 0
      %2562 = vmatpush2.bf16.msra.mxu0 0
      %2563 = vmatprep.subr.bf16.mxu0 0
      %2564 = vmatpush2.bf16.msra.mxu0 0
      %2565 = vmatprep.mubr.bf16.mxu0 0
      %2566 = vmatmul.mubr.bf16.gmra.mxu0 %v2481
      %v2567 = vpop.f32.mrf.mxu0
      %v2568 = vadd.f32 0.0, %v2567
      %v2569 = vpop.f32.mrf.mxu0
      %v2570 = vpop.f32.mrf.mxu0
      %v2571 = vpop.f32.mrf.mxu0
      %2572 = vdwg.mxu0
      %v2573 = vadd.f32 %v2421, %v2527
      %v2574 = vadd.f32 %v2423, %v2529
      %v2575 = vadd.f32 %v2462, %v2568
      %s2576 = scalar_lea.vmem %s1, 84
      %v2577 = vld [vmem:[%s2576] sm:$0xf]
      %2578 = vrot.lane.b32.xlu0 %v2255, 1
      %v2579 = vpop.permute.xlu0 %2578
      %2580 = vrot.lane.b32.xlu0 %v2256, 1
      %v2581 = vpop.permute.xlu0 %2580
      %2582 = vrot.lane.b32.xlu0 %v2257, 1
      %v2583 = vpop.permute.xlu0 %2582
      %2584 = vrot.lane.b32.xlu0 %v2258, 1
      %v2585 = vpop.permute.xlu0 %2584
      %v2586 = vsel %vm575, %v2579, %v2581
      %v2587 = vsel %vm575, %v2581, %v2583
      %v2588 = vsel %vm575, %v2583, %v2585
      %v2590 = vsel %vm255, %v2577, 0
      %v2593 = vsel %vm259, %v2586, 0
      %v2596 = vsel %vm259, %v2587, 0
      %v2599 = vsel %vm259, %v2588, 0
      %2601 = vmatprep.subr.bf16.mxu0 0
      %2602 = vmatpush1.bf16.msra.mxu0 0
      %2603 = vmatprep.subr.bf16.mxu0 0
      %2604 = vmatpush1.bf16.msra.mxu0 0
      %2605 = vmatprep.subr.bf16.mxu0 0
      %2606 = vmatpush1.bf16.msra.mxu0 0
      %2607 = vmatprep.subr.bf16.mxu0 0
      %2608 = vmatpush1.bf16.msra.mxu0 0
      %2609 = vmatprep.subr.bf16.mxu0 0
      %2610 = vmatpush1.bf16.msra.mxu0 0
      %2611 = vmatprep.subr.bf16.mxu0 0
      %2612 = vmatpush1.bf16.msra.mxu0 0
      %2613 = vmatprep.subr.bf16.mxu0 0
      %2614 = vmatpush1.bf16.msra.mxu0 0
      %2615 = vmatprep.subr.bf16.mxu0 %v2596
      %2616 = vmatpush1.bf16.msra.mxu0 %v2593
      %2617 = vmatprep.subr.bf16.mxu0 0
      %2618 = vmatpush2.bf16.msra.mxu0 0
      %2619 = vmatprep.subr.bf16.mxu0 0
      %2620 = vmatpush2.bf16.msra.mxu0 0
      %2621 = vmatprep.subr.bf16.mxu0 0
      %2622 = vmatpush2.bf16.msra.mxu0 0
      %2623 = vmatprep.subr.bf16.mxu0 0
      %2624 = vmatpush2.bf16.msra.mxu0 0
      %2625 = vmatprep.subr.bf16.mxu0 0
      %2626 = vmatpush2.bf16.msra.mxu0 0
      %2627 = vmatprep.subr.bf16.mxu0 0
      %2628 = vmatpush2.bf16.msra.mxu0 0
      %2629 = vmatprep.subr.bf16.mxu0 0
      %2630 = vmatpush2.bf16.msra.mxu0 0
      %2631 = vmatprep.subr.bf16.mxu0 0
      %2632 = vmatpush2.bf16.msra.mxu0 0
      %2633 = vmatprep.mubr.bf16.mxu0 0
      %2634 = vmatmul.mubr.bf16.gmra.mxu0 %v2590
      %v2635 = vpop.f32.mrf.mxu0
      %v2636 = vadd.f32 0.0, %v2635
      %v2637 = vpop.f32.mrf.mxu0
      %v2638 = vadd.f32 0.0, %v2637
      %v2639 = vpop.f32.mrf.mxu0
      %v2640 = vpop.f32.mrf.mxu0
      %2641 = vdwg.mxu0
      %2642 = vmatprep.subr.bf16.mxu0 0
      %2643 = vmatpush1.bf16.msra.mxu0 0
      %2644 = vmatprep.subr.bf16.mxu0 0
      %2645 = vmatpush1.bf16.msra.mxu0 0
      %2646 = vmatprep.subr.bf16.mxu0 0
      %2647 = vmatpush1.bf16.msra.mxu0 0
      %2648 = vmatprep.subr.bf16.mxu0 0
      %2649 = vmatpush1.bf16.msra.mxu0 0
      %2650 = vmatprep.subr.bf16.mxu0 0
      %2651 = vmatpush1.bf16.msra.mxu0 0
      %2652 = vmatprep.subr.bf16.mxu0 0
      %2653 = vmatpush1.bf16.msra.mxu0 0
      %2654 = vmatprep.subr.bf16.mxu0 0
      %2655 = vmatpush1.bf16.msra.mxu0 0
      %2656 = vmatprep.subr.bf16.mxu0 0
      %2657 = vmatpush1.bf16.msra.mxu0 %v2599
      %2658 = vmatprep.subr.bf16.mxu0 0
      %2659 = vmatpush2.bf16.msra.mxu0 0
      %2660 = vmatprep.subr.bf16.mxu0 0
      %2661 = vmatpush2.bf16.msra.mxu0 0
      %2662 = vmatprep.subr.bf16.mxu0 0
      %2663 = vmatpush2.bf16.msra.mxu0 0
      %2664 = vmatprep.subr.bf16.mxu0 0
      %2665 = vmatpush2.bf16.msra.mxu0 0
      %2666 = vmatprep.subr.bf16.mxu0 0
      %2667 = vmatpush2.bf16.msra.mxu0 0
      %2668 = vmatprep.subr.bf16.mxu0 0
      %2669 = vmatpush2.bf16.msra.mxu0 0
      %2670 = vmatprep.subr.bf16.mxu0 0
      %2671 = vmatpush2.bf16.msra.mxu0 0
      %2672 = vmatprep.subr.bf16.mxu0 0
      %2673 = vmatpush2.bf16.msra.mxu0 0
      %2674 = vmatprep.mubr.bf16.mxu0 0
      %2675 = vmatmul.mubr.bf16.gmra.mxu0 %v2590
      %v2676 = vpop.f32.mrf.mxu0
      %v2677 = vadd.f32 0.0, %v2676
      %v2678 = vpop.f32.mrf.mxu0
      %v2679 = vpop.f32.mrf.mxu0
      %v2680 = vpop.f32.mrf.mxu0
      %2681 = vdwg.mxu0
      %v2682 = vadd.f32 %v2573, %v2636
      %v2683 = vadd.f32 %v2574, %v2638
      %v2684 = vadd.f32 %v2575, %v2677
      %s2685 = scalar_lea.vmem %s1, 88
      %v2686 = vld [vmem:[%s2685] sm:$0xf]
      %v2688 = vsel %vm255, %v2686, 0
      %v2691 = vsel %vm259, %v2256, 0
      %v2694 = vsel %vm259, %v2257, 0
      %v2697 = vsel %vm259, %v2258, 0
      %2699 = vmatprep.subr.bf16.mxu0 0
      %2700 = vmatpush1.bf16.msra.mxu0 0
      %2701 = vmatprep.subr.bf16.mxu0 0
      %2702 = vmatpush1.bf16.msra.mxu0 0
      %2703 = vmatprep.subr.bf16.mxu0 0
      %2704 = vmatpush1.bf16.msra.mxu0 0
      %2705 = vmatprep.subr.bf16.mxu0 0
      %2706 = vmatpush1.bf16.msra.mxu0 0
      %2707 = vmatprep.subr.bf16.mxu0 0
      %2708 = vmatpush1.bf16.msra.mxu0 0
      %2709 = vmatprep.subr.bf16.mxu0 0
      %2710 = vmatpush1.bf16.msra.mxu0 0
      %2711 = vmatprep.subr.bf16.mxu0 0
      %2712 = vmatpush1.bf16.msra.mxu0 0
      %2713 = vmatprep.subr.bf16.mxu0 %v2694
      %2714 = vmatpush1.bf16.msra.mxu0 %v2691
      %2715 = vmatprep.subr.bf16.mxu0 0
      %2716 = vmatpush2.bf16.msra.mxu0 0
      %2717 = vmatprep.subr.bf16.mxu0 0
      %2718 = vmatpush2.bf16.msra.mxu0 0
      %2719 = vmatprep.subr.bf16.mxu0 0
      %2720 = vmatpush2.bf16.msra.mxu0 0
      %2721 = vmatprep.subr.bf16.mxu0 0
      %2722 = vmatpush2.bf16.msra.mxu0 0
      %2723 = vmatprep.subr.bf16.mxu0 0
      %2724 = vmatpush2.bf16.msra.mxu0 0
      %2725 = vmatprep.subr.bf16.mxu0 0
      %2726 = vmatpush2.bf16.msra.mxu0 0
      %2727 = vmatprep.subr.bf16.mxu0 0
      %2728 = vmatpush2.bf16.msra.mxu0 0
      %2729 = vmatprep.subr.bf16.mxu0 0
      %2730 = vmatpush2.bf16.msra.mxu0 0
      %2731 = vmatprep.mubr.bf16.mxu0 0
      %2732 = vmatmul.mubr.bf16.gmra.mxu0 %v2688
      %v2733 = vpop.f32.mrf.mxu0
      %v2734 = vadd.f32 0.0, %v2733
      %v2735 = vpop.f32.mrf.mxu0
      %v2736 = vadd.f32 0.0, %v2735
      %v2737 = vpop.f32.mrf.mxu0
      %v2738 = vpop.f32.mrf.mxu0
      %2739 = vdwg.mxu0
      %2740 = vmatprep.subr.bf16.mxu0 0
      %2741 = vmatpush1.bf16.msra.mxu0 0
      %2742 = vmatprep.subr.bf16.mxu0 0
      %2743 = vmatpush1.bf16.msra.mxu0 0
      %2744 = vmatprep.subr.bf16.mxu0 0
      %2745 = vmatpush1.bf16.msra.mxu0 0
      %2746 = vmatprep.subr.bf16.mxu0 0
      %2747 = vmatpush1.bf16.msra.mxu0 0
      %2748 = vmatprep.subr.bf16.mxu0 0
      %2749 = vmatpush1.bf16.msra.mxu0 0
      %2750 = vmatprep.subr.bf16.mxu0 0
      %2751 = vmatpush1.bf16.msra.mxu0 0
      %2752 = vmatprep.subr.bf16.mxu0 0
      %2753 = vmatpush1.bf16.msra.mxu0 0
      %2754 = vmatprep.subr.bf16.mxu0 0
      %2755 = vmatpush1.bf16.msra.mxu0 %v2697
      %2756 = vmatprep.subr.bf16.mxu0 0
      %2757 = vmatpush2.bf16.msra.mxu0 0
      %2758 = vmatprep.subr.bf16.mxu0 0
      %2759 = vmatpush2.bf16.msra.mxu0 0
      %2760 = vmatprep.subr.bf16.mxu0 0
      %2761 = vmatpush2.bf16.msra.mxu0 0
      %2762 = vmatprep.subr.bf16.mxu0 0
      %2763 = vmatpush2.bf16.msra.mxu0 0
      %2764 = vmatprep.subr.bf16.mxu0 0
      %2765 = vmatpush2.bf16.msra.mxu0 0
      %2766 = vmatprep.subr.bf16.mxu0 0
      %2767 = vmatpush2.bf16.msra.mxu0 0
      %2768 = vmatprep.subr.bf16.mxu0 0
      %2769 = vmatpush2.bf16.msra.mxu0 0
      %2770 = vmatprep.subr.bf16.mxu0 0
      %2771 = vmatpush2.bf16.msra.mxu0 0
      %2772 = vmatprep.mubr.bf16.mxu0 0
      %2773 = vmatmul.mubr.bf16.gmra.mxu0 %v2688
      %v2774 = vpop.f32.mrf.mxu0
      %v2775 = vadd.f32 0.0, %v2774
      %v2776 = vpop.f32.mrf.mxu0
      %v2777 = vpop.f32.mrf.mxu0
      %v2778 = vpop.f32.mrf.mxu0
      %2779 = vdwg.mxu0
      %v2780 = vadd.f32 %v2682, %v2734
      %v2781 = vadd.f32 %v2683, %v2736
      %v2782 = vadd.f32 %v2684, %v2775
      %s2783 = scalar_lea.vmem %s1, 92
      %v2784 = vld [vmem:[%s2783] sm:$0xf]
      %2785 = vrot.lane.b32.xlu0 %v2256, 127
      %v2786 = vpop.permute.xlu0 %2785
      %2787 = vrot.lane.b32.xlu0 %v2257, 127
      %v2788 = vpop.permute.xlu0 %2787
      %2789 = vrot.lane.b32.xlu0 %v2258, 127
      %v2790 = vpop.permute.xlu0 %2789
      %v2791 = vsel %vm781, %v2786, %v2788
      %v2792 = vsel %vm781, %v2788, %v2790
      %v2794 = vsel %vm255, %v2784, 0
      %v2797 = vsel %vm259, %v2791, 0
      %v2800 = vsel %vm259, %v2792, 0
      %v2803 = vsel %vm259, %v2790, 0
      %2805 = vmatprep.subr.bf16.mxu0 0
      %2806 = vmatpush1.bf16.msra.mxu0 0
      %2807 = vmatprep.subr.bf16.mxu0 0
      %2808 = vmatpush1.bf16.msra.mxu0 0
      %2809 = vmatprep.subr.bf16.mxu0 0
      %2810 = vmatpush1.bf16.msra.mxu0 0
      %2811 = vmatprep.subr.bf16.mxu0 0
      %2812 = vmatpush1.bf16.msra.mxu0 0
      %2813 = vmatprep.subr.bf16.mxu0 0
      %2814 = vmatpush1.bf16.msra.mxu0 0
      %2815 = vmatprep.subr.bf16.mxu0 0
      %2816 = vmatpush1.bf16.msra.mxu0 0
      %2817 = vmatprep.subr.bf16.mxu0 0
      %2818 = vmatpush1.bf16.msra.mxu0 0
      %2819 = vmatprep.subr.bf16.mxu0 %v2800
      %2820 = vmatpush1.bf16.msra.mxu0 %v2797
      %2821 = vmatprep.subr.bf16.mxu0 0
      %2822 = vmatpush2.bf16.msra.mxu0 0
      %2823 = vmatprep.subr.bf16.mxu0 0
      %2824 = vmatpush2.bf16.msra.mxu0 0
      %2825 = vmatprep.subr.bf16.mxu0 0
      %2826 = vmatpush2.bf16.msra.mxu0 0
      %2827 = vmatprep.subr.bf16.mxu0 0
      %2828 = vmatpush2.bf16.msra.mxu0 0
      %2829 = vmatprep.subr.bf16.mxu0 0
      %2830 = vmatpush2.bf16.msra.mxu0 0
      %2831 = vmatprep.subr.bf16.mxu0 0
      %2832 = vmatpush2.bf16.msra.mxu0 0
      %2833 = vmatprep.subr.bf16.mxu0 0
      %2834 = vmatpush2.bf16.msra.mxu0 0
      %2835 = vmatprep.subr.bf16.mxu0 0
      %2836 = vmatpush2.bf16.msra.mxu0 0
      %2837 = vmatprep.mubr.bf16.mxu0 0
      %2838 = vmatmul.mubr.bf16.gmra.mxu0 %v2794
      %v2839 = vpop.f32.mrf.mxu0
      %v2840 = vadd.f32 0.0, %v2839
      %v2841 = vpop.f32.mrf.mxu0
      %v2842 = vadd.f32 0.0, %v2841
      %v2843 = vpop.f32.mrf.mxu0
      %v2844 = vpop.f32.mrf.mxu0
      %2845 = vdwg.mxu0
      %2846 = vmatprep.subr.bf16.mxu0 0
      %2847 = vmatpush1.bf16.msra.mxu0 0
      %2848 = vmatprep.subr.bf16.mxu0 0
      %2849 = vmatpush1.bf16.msra.mxu0 0
      %2850 = vmatprep.subr.bf16.mxu0 0
      %2851 = vmatpush1.bf16.msra.mxu0 0
      %2852 = vmatprep.subr.bf16.mxu0 0
      %2853 = vmatpush1.bf16.msra.mxu0 0
      %2854 = vmatprep.subr.bf16.mxu0 0
      %2855 = vmatpush1.bf16.msra.mxu0 0
      %2856 = vmatprep.subr.bf16.mxu0 0
      %2857 = vmatpush1.bf16.msra.mxu0 0
      %2858 = vmatprep.subr.bf16.mxu0 0
      %2859 = vmatpush1.bf16.msra.mxu0 0
      %2860 = vmatprep.subr.bf16.mxu0 0
      %2861 = vmatpush1.bf16.msra.mxu0 %v2803
      %2862 = vmatprep.subr.bf16.mxu0 0
      %2863 = vmatpush2.bf16.msra.mxu0 0
      %2864 = vmatprep.subr.bf16.mxu0 0
      %2865 = vmatpush2.bf16.msra.mxu0 0
      %2866 = vmatprep.subr.bf16.mxu0 0
      %2867 = vmatpush2.bf16.msra.mxu0 0
      %2868 = vmatprep.subr.bf16.mxu0 0
      %2869 = vmatpush2.bf16.msra.mxu0 0
      %2870 = vmatprep.subr.bf16.mxu0 0
      %2871 = vmatpush2.bf16.msra.mxu0 0
      %2872 = vmatprep.subr.bf16.mxu0 0
      %2873 = vmatpush2.bf16.msra.mxu0 0
      %2874 = vmatprep.subr.bf16.mxu0 0
      %2875 = vmatpush2.bf16.msra.mxu0 0
      %2876 = vmatprep.subr.bf16.mxu0 0
      %2877 = vmatpush2.bf16.msra.mxu0 0
      %2878 = vmatprep.mubr.bf16.mxu0 0
      %2879 = vmatmul.mubr.bf16.gmra.mxu0 %v2794
      %v2880 = vpop.f32.mrf.mxu0
      %v2881 = vadd.f32 0.0, %v2880
      %v2882 = vpop.f32.mrf.mxu0
      %v2883 = vpop.f32.mrf.mxu0
      %v2884 = vpop.f32.mrf.mxu0
      %2885 = vdwg.mxu0
      %v2886 = vadd.f32 %v2780, %v2840
      %v2887 = vadd.f32 %v2781, %v2842
      %v2888 = vadd.f32 %v2782, %v2881
      %s2889 = scalar_lea.vmem %s1, 96
      %v2890 = vld [vmem:[%s2889] sm:$0xf]
      %2891 = vrot.lane.b32.xlu0 %v2256, 111
      %v2892 = vpop.permute.xlu0 %2891
      %2893 = vrot.lane.b32.xlu0 %v2257, 111
      %v2894 = vpop.permute.xlu0 %2893
      %2895 = vrot.lane.b32.xlu0 %v2258, 111
      %v2896 = vpop.permute.xlu0 %2895
      %v2897 = vsel %vm888, %v2892, %v2894
      %v2898 = vsel %vm888, %v2894, %v2896
      %v2900 = vsel %vm255, %v2890, 0
      %v2903 = vsel %vm259, %v2897, 0
      %v2906 = vsel %vm259, %v2898, 0
      %v2909 = vsel %vm259, %v2896, 0
      %2911 = vmatprep.subr.bf16.mxu0 0
      %2912 = vmatpush1.bf16.msra.mxu0 0
      %2913 = vmatprep.subr.bf16.mxu0 0
      %2914 = vmatpush1.bf16.msra.mxu0 0
      %2915 = vmatprep.subr.bf16.mxu0 0
      %2916 = vmatpush1.bf16.msra.mxu0 0
      %2917 = vmatprep.subr.bf16.mxu0 0
      %2918 = vmatpush1.bf16.msra.mxu0 0
      %2919 = vmatprep.subr.bf16.mxu0 0
      %2920 = vmatpush1.bf16.msra.mxu0 0
      %2921 = vmatprep.subr.bf16.mxu0 0
      %2922 = vmatpush1.bf16.msra.mxu0 0
      %2923 = vmatprep.subr.bf16.mxu0 0
      %2924 = vmatpush1.bf16.msra.mxu0 0
      %2925 = vmatprep.subr.bf16.mxu0 %v2906
      %2926 = vmatpush1.bf16.msra.mxu0 %v2903
      %2927 = vmatprep.subr.bf16.mxu0 0
      %2928 = vmatpush2.bf16.msra.mxu0 0
      %2929 = vmatprep.subr.bf16.mxu0 0
      %2930 = vmatpush2.bf16.msra.mxu0 0
      %2931 = vmatprep.subr.bf16.mxu0 0
      %2932 = vmatpush2.bf16.msra.mxu0 0
      %2933 = vmatprep.subr.bf16.mxu0 0
      %2934 = vmatpush2.bf16.msra.mxu0 0
      %2935 = vmatprep.subr.bf16.mxu0 0
      %2936 = vmatpush2.bf16.msra.mxu0 0
      %2937 = vmatprep.subr.bf16.mxu0 0
      %2938 = vmatpush2.bf16.msra.mxu0 0
      %2939 = vmatprep.subr.bf16.mxu0 0
      %2940 = vmatpush2.bf16.msra.mxu0 0
      %2941 = vmatprep.subr.bf16.mxu0 0
      %2942 = vmatpush2.bf16.msra.mxu0 0
      %2943 = vmatprep.mubr.bf16.mxu0 0
      %2944 = vmatmul.mubr.bf16.gmra.mxu0 %v2900
      %v2945 = vpop.f32.mrf.mxu0
      %v2946 = vadd.f32 0.0, %v2945
      %v2947 = vpop.f32.mrf.mxu0
      %v2948 = vadd.f32 0.0, %v2947
      %v2949 = vpop.f32.mrf.mxu0
      %v2950 = vpop.f32.mrf.mxu0
      %2951 = vdwg.mxu0
      %2952 = vmatprep.subr.bf16.mxu0 0
      %2953 = vmatpush1.bf16.msra.mxu0 0
      %2954 = vmatprep.subr.bf16.mxu0 0
      %2955 = vmatpush1.bf16.msra.mxu0 0
      %2956 = vmatprep.subr.bf16.mxu0 0
      %2957 = vmatpush1.bf16.msra.mxu0 0
      %2958 = vmatprep.subr.bf16.mxu0 0
      %2959 = vmatpush1.bf16.msra.mxu0 0
      %2960 = vmatprep.subr.bf16.mxu0 0
      %2961 = vmatpush1.bf16.msra.mxu0 0
      %2962 = vmatprep.subr.bf16.mxu0 0
      %2963 = vmatpush1.bf16.msra.mxu0 0
      %2964 = vmatprep.subr.bf16.mxu0 0
      %2965 = vmatpush1.bf16.msra.mxu0 0
      %2966 = vmatprep.subr.bf16.mxu0 0
      %2967 = vmatpush1.bf16.msra.mxu0 %v2909
      %2968 = vmatprep.subr.bf16.mxu0 0
      %2969 = vmatpush2.bf16.msra.mxu0 0
      %2970 = vmatprep.subr.bf16.mxu0 0
      %2971 = vmatpush2.bf16.msra.mxu0 0
      %2972 = vmatprep.subr.bf16.mxu0 0
      %2973 = vmatpush2.bf16.msra.mxu0 0
      %2974 = vmatprep.subr.bf16.mxu0 0
      %2975 = vmatpush2.bf16.msra.mxu0 0
      %2976 = vmatprep.subr.bf16.mxu0 0
      %2977 = vmatpush2.bf16.msra.mxu0 0
      %2978 = vmatprep.subr.bf16.mxu0 0
      %2979 = vmatpush2.bf16.msra.mxu0 0
      %2980 = vmatprep.subr.bf16.mxu0 0
      %2981 = vmatpush2.bf16.msra.mxu0 0
      %2982 = vmatprep.subr.bf16.mxu0 0
      %2983 = vmatpush2.bf16.msra.mxu0 0
      %2984 = vmatprep.mubr.bf16.mxu0 0
      %2985 = vmatmul.mubr.bf16.gmra.mxu0 %v2900
      %v2986 = vpop.f32.mrf.mxu0
      %v2987 = vadd.f32 0.0, %v2986
      %v2988 = vpop.f32.mrf.mxu0
      %v2989 = vpop.f32.mrf.mxu0
      %v2990 = vpop.f32.mrf.mxu0
      %2991 = vdwg.mxu0
      %v2992 = vadd.f32 %v2886, %v2946
      %v2993 = vadd.f32 %v2887, %v2948
      %v2994 = vadd.f32 %v2888, %v2987
      %s2995 = scalar_lea.vmem %s1, 100
      %v2996 = vld [vmem:[%s2995] sm:$0xf]
      %2997 = vrot.lane.b32.xlu0 %v2256, 110
      %v2998 = vpop.permute.xlu0 %2997
      %2999 = vrot.lane.b32.xlu0 %v2257, 110
      %v3000 = vpop.permute.xlu0 %2999
      %3001 = vrot.lane.b32.xlu0 %v2258, 110
      %v3002 = vpop.permute.xlu0 %3001
      %v3003 = vsel %vm995, %v2998, %v3000
      %v3004 = vsel %vm995, %v3000, %v3002
      %v3006 = vsel %vm255, %v2996, 0
      %v3009 = vsel %vm259, %v3003, 0
      %v3012 = vsel %vm259, %v3004, 0
      %v3015 = vsel %vm259, %v3002, 0
      %3017 = vmatprep.subr.bf16.mxu0 0
      %3018 = vmatpush1.bf16.msra.mxu0 0
      %3019 = vmatprep.subr.bf16.mxu0 0
      %3020 = vmatpush1.bf16.msra.mxu0 0
      %3021 = vmatprep.subr.bf16.mxu0 0
      %3022 = vmatpush1.bf16.msra.mxu0 0
      %3023 = vmatprep.subr.bf16.mxu0 0
      %3024 = vmatpush1.bf16.msra.mxu0 0
      %3025 = vmatprep.subr.bf16.mxu0 0
      %3026 = vmatpush1.bf16.msra.mxu0 0
      %3027 = vmatprep.subr.bf16.mxu0 0
      %3028 = vmatpush1.bf16.msra.mxu0 0
      %3029 = vmatprep.subr.bf16.mxu0 0
      %3030 = vmatpush1.bf16.msra.mxu0 0
      %3031 = vmatprep.subr.bf16.mxu0 %v3012
      %3032 = vmatpush1.bf16.msra.mxu0 %v3009
      %3033 = vmatprep.subr.bf16.mxu0 0
      %3034 = vmatpush2.bf16.msra.mxu0 0
      %3035 = vmatprep.subr.bf16.mxu0 0
      %3036 = vmatpush2.bf16.msra.mxu0 0
      %3037 = vmatprep.subr.bf16.mxu0 0
      %3038 = vmatpush2.bf16.msra.mxu0 0
      %3039 = vmatprep.subr.bf16.mxu0 0
      %3040 = vmatpush2.bf16.msra.mxu0 0
      %3041 = vmatprep.subr.bf16.mxu0 0
      %3042 = vmatpush2.bf16.msra.mxu0 0
      %3043 = vmatprep.subr.bf16.mxu0 0
      %3044 = vmatpush2.bf16.msra.mxu0 0
      %3045 = vmatprep.subr.bf16.mxu0 0
      %3046 = vmatpush2.bf16.msra.mxu0 0
      %3047 = vmatprep.subr.bf16.mxu0 0
      %3048 = vmatpush2.bf16.msra.mxu0 0
      %3049 = vmatprep.mubr.bf16.mxu0 0
      %3050 = vmatmul.mubr.bf16.gmra.mxu0 %v3006
      %v3051 = vpop.f32.mrf.mxu0
      %v3052 = vadd.f32 0.0, %v3051
      %v3053 = vpop.f32.mrf.mxu0
      %v3054 = vadd.f32 0.0, %v3053
      %v3055 = vpop.f32.mrf.mxu0
      %v3056 = vpop.f32.mrf.mxu0
      %3057 = vdwg.mxu0
      %3058 = vmatprep.subr.bf16.mxu0 0
      %3059 = vmatpush1.bf16.msra.mxu0 0
      %3060 = vmatprep.subr.bf16.mxu0 0
      %3061 = vmatpush1.bf16.msra.mxu0 0
      %3062 = vmatprep.subr.bf16.mxu0 0
      %3063 = vmatpush1.bf16.msra.mxu0 0
      %3064 = vmatprep.subr.bf16.mxu0 0
      %3065 = vmatpush1.bf16.msra.mxu0 0
      %3066 = vmatprep.subr.bf16.mxu0 0
      %3067 = vmatpush1.bf16.msra.mxu0 0
      %3068 = vmatprep.subr.bf16.mxu0 0
      %3069 = vmatpush1.bf16.msra.mxu0 0
      %3070 = vmatprep.subr.bf16.mxu0 0
      %3071 = vmatpush1.bf16.msra.mxu0 0
      %3072 = vmatprep.subr.bf16.mxu0 0
      %3073 = vmatpush1.bf16.msra.mxu0 %v3015
      %3074 = vmatprep.subr.bf16.mxu0 0
      %3075 = vmatpush2.bf16.msra.mxu0 0
      %3076 = vmatprep.subr.bf16.mxu0 0
      %3077 = vmatpush2.bf16.msra.mxu0 0
      %3078 = vmatprep.subr.bf16.mxu0 0
      %3079 = vmatpush2.bf16.msra.mxu0 0
      %3080 = vmatprep.subr.bf16.mxu0 0
      %3081 = vmatpush2.bf16.msra.mxu0 0
      %3082 = vmatprep.subr.bf16.mxu0 0
      %3083 = vmatpush2.bf16.msra.mxu0 0
      %3084 = vmatprep.subr.bf16.mxu0 0
      %3085 = vmatpush2.bf16.msra.mxu0 0
      %3086 = vmatprep.subr.bf16.mxu0 0
      %3087 = vmatpush2.bf16.msra.mxu0 0
      %3088 = vmatprep.subr.bf16.mxu0 0
      %3089 = vmatpush2.bf16.msra.mxu0 0
      %3090 = vmatprep.mubr.bf16.mxu0 0
      %3091 = vmatmul.mubr.bf16.gmra.mxu0 %v3006
      %v3092 = vpop.f32.mrf.mxu0
      %v3093 = vadd.f32 0.0, %v3092
      %v3094 = vpop.f32.mrf.mxu0
      %v3095 = vpop.f32.mrf.mxu0
      %v3096 = vpop.f32.mrf.mxu0
      %3097 = vdwg.mxu0
      %v3098 = vadd.f32 %v2992, %v3052
      %v3099 = vadd.f32 %v2993, %v3054
      %v3100 = vadd.f32 %v2994, %v3093
      %s3101 = scalar_lea.vmem %s1, 104
      %v3102 = vld [vmem:[%s3101] sm:$0xf]
      %3103 = vrot.lane.b32.xlu0 %v2256, 109
      %v3104 = vpop.permute.xlu0 %3103
      %3105 = vrot.lane.b32.xlu0 %v2257, 109
      %v3106 = vpop.permute.xlu0 %3105
      %3107 = vrot.lane.b32.xlu0 %v2258, 109
      %v3108 = vpop.permute.xlu0 %3107
      %v3109 = vsel %vm1102, %v3104, %v3106
      %v3110 = vsel %vm1102, %v3106, %v3108
      %v3112 = vsel %vm255, %v3102, 0
      %v3115 = vsel %vm259, %v3109, 0
      %v3118 = vsel %vm259, %v3110, 0
      %v3121 = vsel %vm259, %v3108, 0
      %3123 = vmatprep.subr.bf16.mxu0 0
      %3124 = vmatpush1.bf16.msra.mxu0 0
      %3125 = vmatprep.subr.bf16.mxu0 0
      %3126 = vmatpush1.bf16.msra.mxu0 0
      %3127 = vmatprep.subr.bf16.mxu0 0
      %3128 = vmatpush1.bf16.msra.mxu0 0
      %3129 = vmatprep.subr.bf16.mxu0 0
      %3130 = vmatpush1.bf16.msra.mxu0 0
      %3131 = vmatprep.subr.bf16.mxu0 0
      %3132 = vmatpush1.bf16.msra.mxu0 0
      %3133 = vmatprep.subr.bf16.mxu0 0
      %3134 = vmatpush1.bf16.msra.mxu0 0
      %3135 = vmatprep.subr.bf16.mxu0 0
      %3136 = vmatpush1.bf16.msra.mxu0 0
      %3137 = vmatprep.subr.bf16.mxu0 %v3118
      %3138 = vmatpush1.bf16.msra.mxu0 %v3115
      %3139 = vmatprep.subr.bf16.mxu0 0
      %3140 = vmatpush2.bf16.msra.mxu0 0
      %3141 = vmatprep.subr.bf16.mxu0 0
      %3142 = vmatpush2.bf16.msra.mxu0 0
      %3143 = vmatprep.subr.bf16.mxu0 0
      %3144 = vmatpush2.bf16.msra.mxu0 0
      %3145 = vmatprep.subr.bf16.mxu0 0
      %3146 = vmatpush2.bf16.msra.mxu0 0
      %3147 = vmatprep.subr.bf16.mxu0 0
      %3148 = vmatpush2.bf16.msra.mxu0 0
      %3149 = vmatprep.subr.bf16.mxu0 0
      %3150 = vmatpush2.bf16.msra.mxu0 0
      %3151 = vmatprep.subr.bf16.mxu0 0
      %3152 = vmatpush2.bf16.msra.mxu0 0
      %3153 = vmatprep.subr.bf16.mxu0 0
      %3154 = vmatpush2.bf16.msra.mxu0 0
      %3155 = vmatprep.mubr.bf16.mxu0 0
      %3156 = vmatmul.mubr.bf16.gmra.mxu0 %v3112
      %v3157 = vpop.f32.mrf.mxu0
      %v3158 = vadd.f32 0.0, %v3157
      %v3159 = vpop.f32.mrf.mxu0
      %v3160 = vadd.f32 0.0, %v3159
      %v3161 = vpop.f32.mrf.mxu0
      %v3162 = vpop.f32.mrf.mxu0
      %3163 = vdwg.mxu0
      %3164 = vmatprep.subr.bf16.mxu0 0
      %3165 = vmatpush1.bf16.msra.mxu0 0
      %3166 = vmatprep.subr.bf16.mxu0 0
      %3167 = vmatpush1.bf16.msra.mxu0 0
      %3168 = vmatprep.subr.bf16.mxu0 0
      %3169 = vmatpush1.bf16.msra.mxu0 0
      %3170 = vmatprep.subr.bf16.mxu0 0
      %3171 = vmatpush1.bf16.msra.mxu0 0
      %3172 = vmatprep.subr.bf16.mxu0 0
      %3173 = vmatpush1.bf16.msra.mxu0 0
      %3174 = vmatprep.subr.bf16.mxu0 0
      %3175 = vmatpush1.bf16.msra.mxu0 0
      %3176 = vmatprep.subr.bf16.mxu0 0
      %3177 = vmatpush1.bf16.msra.mxu0 0
      %3178 = vmatprep.subr.bf16.mxu0 0
      %3179 = vmatpush1.bf16.msra.mxu0 %v3121
      %3180 = vmatprep.subr.bf16.mxu0 0
      %3181 = vmatpush2.bf16.msra.mxu0 0
      %3182 = vmatprep.subr.bf16.mxu0 0
      %3183 = vmatpush2.bf16.msra.mxu0 0
      %3184 = vmatprep.subr.bf16.mxu0 0
      %3185 = vmatpush2.bf16.msra.mxu0 0
      %3186 = vmatprep.subr.bf16.mxu0 0
      %3187 = vmatpush2.bf16.msra.mxu0 0
      %3188 = vmatprep.subr.bf16.mxu0 0
      %3189 = vmatpush2.bf16.msra.mxu0 0
      %3190 = vmatprep.subr.bf16.mxu0 0
      %3191 = vmatpush2.bf16.msra.mxu0 0
      %3192 = vmatprep.subr.bf16.mxu0 0
      %3193 = vmatpush2.bf16.msra.mxu0 0
      %3194 = vmatprep.subr.bf16.mxu0 0
      %3195 = vmatpush2.bf16.msra.mxu0 0
      %3196 = vmatprep.mubr.bf16.mxu0 0
      %3197 = vmatmul.mubr.bf16.gmra.mxu0 %v3112
      %v3198 = vpop.f32.mrf.mxu0
      %v3199 = vadd.f32 0.0, %v3198
      %v3200 = vpop.f32.mrf.mxu0
      %v3201 = vpop.f32.mrf.mxu0
      %v3202 = vpop.f32.mrf.mxu0
      %3203 = vdwg.mxu0
      %v3204 = vadd.f32 %v3098, %v3158
      %v3205 = vadd.f32 %v3099, %v3160
      %v3206 = vadd.f32 %v3100, %v3199
      %s3207 = scalar_lea.vmem %s2, 16
      %v3208 = vld [vmem:[%s3207] sm:$0xff]
      %3210 = vset.pattern.permute.xlu0 0
      %3211 = vperm.xlu0 %3210, %v3208
      %v3212 = vpop.permute.xlu0 %3211
      %v3214 = vadd.f32 %v3204, %v3212
      %v3215 = vadd.f32 %v3205, %v3212
      %v3216 = vadd.f32 %v3206, %v3212
      %v3217 = vadd.f32 %v3214, %v1229
      %v3218 = vadd.f32 %v3215, %v1230
      %v3219 = vadd.f32 %v3216, %v1231
      %v3220 = vmax.f32 %v3217, 0.0
      %v3221 = vmax.f32 %v3218, 0.0
      %v3222 = vmax.f32 %v3219, 0.0
      %v3223 = vpack.c.bf16 %v3220, %v3220
      %v3224 = vpack.c.bf16 %v3221, %v3221
      %v3225 = vpack.c.bf16 %v3222, %v3222
      %v3226 = vld [vmem:[%s4] sm:$0xf]
      %v3227 = vld [vmem:[%s4 + $0x4] sm:$0xf]
      %v3228 = vld [vmem:[%s4 + $0x8] sm:$0xf]
      %v3229 = vld [vmem:[%s4 + $0xc] sm:$0xf]
      %v3230 = vld [vmem:[%s4 + $0x10] sm:$0xf]
      %v3231 = vld [vmem:[%s4 + $0x14] sm:$0xf]
      %v3232 = vld [vmem:[%s4 + $0x18] sm:$0xf]
      %v3233 = vld [vmem:[%s4 + $0x1c] sm:$0xf]
      %v3234 = vld [vmem:[%s4 + $0x20] sm:$0xf]
      %v3235 = vld [vmem:[%s4 + $0x24] sm:$0xf]
      %v3236 = vld [vmem:[%s4 + $0x28] sm:$0xf]
      %v3237 = vld [vmem:[%s4 + $0x2c] sm:$0xf]
      %v3238 = vld [vmem:[%s4 + $0x30] sm:$0xf]
      %v3239 = vld [vmem:[%s4 + $0x34] sm:$0xf]
      %v3240 = vld [vmem:[%s4 + $0x38] sm:$0xf]
      %v3241 = vld [vmem:[%s4 + $0x3c] sm:$0xf]
      %v3242 = vld [vmem:[%s4 + $0x40] sm:$0xf]
      %v3243 = vld [vmem:[%s4 + $0x44] sm:$0xf]
      %v3244 = vld [vmem:[%s4 + $0x48] sm:$0xf]
      %v3245 = vld [vmem:[%s4 + $0x4c] sm:$0xf]
      %v3246 = vld [vmem:[%s4 + $0x50] sm:$0xf]
      %v3247 = vld [vmem:[%s4 + $0x54] sm:$0xf]
      %v3248 = vld [vmem:[%s4 + $0x58] sm:$0xf]
      %v3249 = vld [vmem:[%s4 + $0x5c] sm:$0xf]
      %v3250 = vld [vmem:[%s4 + $0x60] sm:$0xf]
      %v3251 = vld [vmem:[%s4 + $0x64] sm:$0xf]
      %v3252 = vld [vmem:[%s4 + $0x68] sm:$0xf]
      %v3253 = vld [vmem:[%s4 + $0x6c] sm:$0xf]
      %v3254 = vld [vmem:[%s4 + $0x70] sm:$0xf]
      %v3255 = vld [vmem:[%s4 + $0x74] sm:$0xf]
      %v3256 = vld [vmem:[%s4 + $0x78] sm:$0xf]
      %v3257 = vld [vmem:[%s4 + $0x7c] sm:$0xf]
      %v3258 = vld [vmem:[%s4 + $0x80] sm:$0xf]
      %v3259 = vld [vmem:[%s4 + $0x84] sm:$0xf]
      %v3260 = vld [vmem:[%s4 + $0x88] sm:$0xf]
      %v3261 = vld [vmem:[%s4 + $0x8c] sm:$0xf]
      %v3262 = vld [vmem:[%s4 + $0x90] sm:$0xf]
      %v3263 = vld [vmem:[%s4 + $0x94] sm:$0xf]
      %v3264 = vld [vmem:[%s4 + $0x98] sm:$0xf]
      %v3265 = vld [vmem:[%s4 + $0x9c] sm:$0xf]
      %v3266 = vld [vmem:[%s4 + $0xa0] sm:$0xf]
      %v3267 = vld [vmem:[%s4 + $0xa4] sm:$0xf]
      %v3268 = vld [vmem:[%s4 + $0xa8] sm:$0xf]
      %v3312 = vunpack.c.l.b16 %v3226
      %v3313 = vunpack.c.l.b16 %v3227
      %v3314 = vunpack.c.l.b16 %v3228
      %v3315 = vunpack.c.l.b16 %v3229
      %v3316 = vunpack.c.l.b16 %v3230
      %v3317 = vunpack.c.l.b16 %v3231
      %v3318 = vunpack.c.l.b16 %v3232
      %v3319 = vunpack.c.l.b16 %v3233
      %v3320 = vunpack.c.l.b16 %v3234
      %v3321 = vunpack.c.l.b16 %v3235
      %v3322 = vunpack.c.l.b16 %v3236
      %v3323 = vunpack.c.l.b16 %v3237
      %v3324 = vunpack.c.l.b16 %v3238
      %v3325 = vunpack.c.l.b16 %v3239
      %v3326 = vunpack.c.l.b16 %v3240
      %v3327 = vunpack.c.l.b16 %v3241
      %v3328 = vunpack.c.l.b16 %v3242
      %v3329 = vunpack.c.l.b16 %v3243
      %v3330 = vunpack.c.l.b16 %v3244
      %v3331 = vunpack.c.l.b16 %v3245
      %v3332 = vunpack.c.l.b16 %v3246
      %v3333 = vunpack.c.l.b16 %v3247
      %v3334 = vunpack.c.l.b16 %v3248
      %v3335 = vunpack.c.l.b16 %v3249
      %v3336 = vunpack.c.l.b16 %v3250
      %v3337 = vunpack.c.l.b16 %v3251
      %v3338 = vunpack.c.l.b16 %v3252
      %v3339 = vunpack.c.l.b16 %v3253
      %v3340 = vunpack.c.l.b16 %v3254
      %v3341 = vunpack.c.l.b16 %v3255
      %v3342 = vunpack.c.l.b16 %v3256
      %v3343 = vunpack.c.l.b16 %v3257
      %v3344 = vunpack.c.l.b16 %v3258
      %v3345 = vunpack.c.l.b16 %v3259
      %v3346 = vunpack.c.l.b16 %v3260
      %v3347 = vunpack.c.l.b16 %v3261
      %v3348 = vunpack.c.l.b16 %v3262
      %v3349 = vunpack.c.l.b16 %v3263
      %v3350 = vunpack.c.l.b16 %v3264
      %v3351 = vunpack.c.l.b16 %v3265
      %v3352 = vunpack.c.l.b16 %v3266
      %v3353 = vunpack.c.l.b16 %v3267
      %v3354 = vunpack.c.l.b16 %v3268
      %v3355 = vpack.c.b16 %v3313, %v3312
      %v3356 = vpack.c.b16 %v3315, %v3314
      %v3357 = vpack.c.b16 %v3317, %v3316
      %v3358 = vpack.c.b16 %v3319, %v3318
      %v3359 = vpack.c.b16 %v3321, %v3320
      %v3360 = vpack.c.b16 %v3323, %v3322
      %v3361 = vpack.c.b16 %v3325, %v3324
      %v3362 = vpack.c.b16 %v3327, %v3326
      %v3363 = vpack.c.b16 %v3329, %v3328
      %v3364 = vpack.c.b16 %v3331, %v3330
      %v3365 = vpack.c.b16 %v3333, %v3332
      %v3366 = vpack.c.b16 %v3335, %v3334
      %v3367 = vpack.c.b16 %v3337, %v3336
      %v3368 = vpack.c.b16 %v3339, %v3338
      %v3369 = vpack.c.b16 %v3341, %v3340
      %v3370 = vpack.c.b16 %v3343, %v3342
      %v3371 = vpack.c.b16 %v3345, %v3344
      %v3372 = vpack.c.b16 %v3347, %v3346
      %v3373 = vpack.c.b16 %v3349, %v3348
      %v3374 = vpack.c.b16 %v3351, %v3350
      %v3375 = vpack.c.b16 %v3353, %v3352
      %v3376 = vpack.c.b16 %v3354, %v3354
      %vm3398 = vcmask 711680
      %v3400 = vsel %vm3398, %v3225, 0
      %vm3402 = vcmask 1042432
      %v3403 = vsel %vm3402, 4294967295, 65535
      %v3404 = vsel %vm259, %v3403, 0
      %v3406 = vand.u32 %v3376, %v3404
      %3408 = vmatprep.subr.bf16.mxu0 0
      %3409 = vmatpush1.bf16.msra.mxu0 %v3362
      %3410 = vmatprep.subr.bf16.mxu0 0
      %3411 = vmatpush1.bf16.msra.mxu0 %v3361
      %3412 = vmatprep.subr.bf16.mxu0 0
      %3413 = vmatpush1.bf16.msra.mxu0 %v3360
      %3414 = vmatprep.subr.bf16.mxu0 0
      %3415 = vmatpush1.bf16.msra.mxu0 %v3359
      %3416 = vmatprep.subr.bf16.mxu0 0
      %3417 = vmatpush1.bf16.msra.mxu0 %v3358
      %3418 = vmatprep.subr.bf16.mxu0 0
      %3419 = vmatpush1.bf16.msra.mxu0 %v3357
      %3420 = vmatprep.subr.bf16.mxu0 0
      %3421 = vmatpush1.bf16.msra.mxu0 %v3356
      %3422 = vmatprep.subr.bf16.mxu0 0
      %3423 = vmatpush1.bf16.msra.mxu0 %v3355
      %3424 = vmatprep.subr.bf16.mxu0 0
      %3425 = vmatpush2.bf16.msra.mxu0 %v3370
      %3426 = vmatprep.subr.bf16.mxu0 0
      %3427 = vmatpush2.bf16.msra.mxu0 %v3369
      %3428 = vmatprep.subr.bf16.mxu0 0
      %3429 = vmatpush2.bf16.msra.mxu0 %v3368
      %3430 = vmatprep.subr.bf16.mxu0 0
      %3431 = vmatpush2.bf16.msra.mxu0 %v3367
      %3432 = vmatprep.subr.bf16.mxu0 0
      %3433 = vmatpush2.bf16.msra.mxu0 %v3366
      %3434 = vmatprep.subr.bf16.mxu0 0
      %3435 = vmatpush2.bf16.msra.mxu0 %v3365
      %3436 = vmatprep.subr.bf16.mxu0 0
      %3437 = vmatpush2.bf16.msra.mxu0 %v3364
      %3438 = vmatprep.subr.bf16.mxu0 0
      %3439 = vmatpush2.bf16.msra.mxu0 %v3363
      %3440 = vmatprep.mubr.bf16.mxu0 %v3224
      %3441 = vmatmul.mubr.bf16.gmra.mxu0 %v3223
      %v3442 = vpop.f32.mrf.mxu0
      %v3443 = vadd.f32 0.0, %v3442
      %v3444 = vpop.f32.mrf.mxu0
      %v3445 = vpop.f32.mrf.mxu0
      %v3446 = vpop.f32.mrf.mxu0
      %3447 = vdwg.mxu0
      %3448 = vmatprep.subr.bf16.mxu0 0
      %3449 = vmatpush1.bf16.msra.mxu0 0
      %3450 = vmatprep.subr.bf16.mxu0 0
      %3451 = vmatpush1.bf16.msra.mxu0 0
      %3452 = vmatprep.subr.bf16.mxu0 0
      %3453 = vmatpush1.bf16.msra.mxu0 %v3406
      %3454 = vmatprep.subr.bf16.mxu0 0
      %3455 = vmatpush1.bf16.msra.mxu0 %v3375
      %3456 = vmatprep.subr.bf16.mxu0 0
      %3457 = vmatpush1.bf16.msra.mxu0 %v3374
      %3458 = vmatprep.subr.bf16.mxu0 0
      %3459 = vmatpush1.bf16.msra.mxu0 %v3373
      %3460 = vmatprep.subr.bf16.mxu0 0
      %3461 = vmatpush1.bf16.msra.mxu0 %v3372
      %3462 = vmatprep.subr.bf16.mxu0 0
      %3463 = vmatpush1.bf16.msra.mxu0 %v3371
      %3464 = vmatprep.subr.bf16.mxu0 0
      %3465 = vmatpush2.bf16.msra.mxu0 0
      %3466 = vmatprep.subr.bf16.mxu0 0
      %3467 = vmatpush2.bf16.msra.mxu0 0
      %3468 = vmatprep.subr.bf16.mxu0 0
      %3469 = vmatpush2.bf16.msra.mxu0 0
      %3470 = vmatprep.subr.bf16.mxu0 0
      %3471 = vmatpush2.bf16.msra.mxu0 0
      %3472 = vmatprep.subr.bf16.mxu0 0
      %3473 = vmatpush2.bf16.msra.mxu0 0
      %3474 = vmatprep.subr.bf16.mxu0 0
      %3475 = vmatpush2.bf16.msra.mxu0 0
      %3476 = vmatprep.subr.bf16.mxu0 0
      %3477 = vmatpush2.bf16.msra.mxu0 0
      %3478 = vmatprep.subr.bf16.mxu0 0
      %3479 = vmatpush2.bf16.msra.mxu0 0
      %3480 = vmatprep.mubr.bf16.mxu0 0
      %3481 = vmatmul.mubr.bf16.gmra.mxu0 %v3400
      %v3482 = vpop.f32.mrf.mxu0
      %v3483 = vadd.f32 %v3443, %v3482
      %v3484 = vpop.f32.mrf.mxu0
      %v3485 = vpop.f32.mrf.mxu0
      %v3486 = vpop.f32.mrf.mxu0
      %3487 = vdwg.mxu0
      %v3488 = vmul.f32 %v3483, 0.00390625
      %vm3489 = vcmask 7168
      %3490 = vst.msk [vmem:[%s222] sm:$0xff] %vm3489, %v3488
      %p3491 = scmp.lt.s32.totalorder %s16, 1
      %s3492 = scalar_select %p3491, %s16, 1
      %s3493 = smul.addr %s3492, 8
      %s3494 = scalar_lea.vmem %s5, %s3493
      // Predicated region
      $region41: #{net_forward.1} parent=39 // pred_check
        %p3495 = pneg %p144
      $region42: #{net_forward.1} parent=39 // pred_check_branch
        %3497 = sbr.rel (%p3495) target = $region44
      $region43: #{net_forward.1} parent=39 // pred_region
        _
      $region44: #{net_forward.1} parent=39 // pred_fallthru
        _
    $region40: #{net_forward.1} parent=5 // pred_fallthru
      _
    %p3498 = scmp.le.s32.totalorder 2, %s11
    // Predicated region
    $region45: #{net_forward.1} parent=5 // pred_check
      %p3499 = pneg %p3498
    $region46: #{net_forward.1} parent=5 // pred_check_branch
      %3501 = sbr.rel (%p3499) target = $region48
    $region47: #{net_forward.1} parent=5 // pred_region
      %s3502 = ssub.s32 %s11, 2
      // Predicated region
      $region49: #{net_forward.1} parent=47 // pred_check
        %p3503 = pneg %p150
      $region50: #{net_forward.1} parent=47 // pred_check_branch
        %3505 = sbr.rel (%p3503) target = $region52
      $region51: #{net_forward.1} parent=47 // pred_region
        %p3506 = scmp.lt.s32.totalorder %s17, 1
        %s3507 = scalar_select %p3506, %s17, 1
        %s3508 = smul.addr %s3507, 8
        %s3509 = scalar_lea.vmem %s5, %s3508
      $region52: #{net_forward.1} parent=47 // pred_fallthru
        _
    $region48: #{net_forward.1} parent=5 // pred_fallthru
      _
  $region6: #{net_forward.1} parent=0 // loop_footer
    %s15 = sadd.s32 1, %s11
  $region7: #{net_forward.1} parent=0 // loop_footer_branch
    %10 = sbr.rel target = $region3
  $region8: #{net_forward.1} parent=0 // loop_exit
    _

</llo_original>
